<compile_context>
chip_gen: v7x
topology: tpu7x:2x2x1
jax: 0.10.0
libtpu: 0.0.40
codegen_flags: <defaults>
</compile_context>

<pallas_src>
import math
import functools

import jax
import jax.numpy as jnp
from jax.experimental import pallas as pl
from jax.experimental.pallas import tpu as pltpu


# ----------------------------- in-kernel helpers -----------------------------

def _layer_norm(x, w, b, eps=1e-5):
    mu = jnp.mean(x, axis=-1, keepdims=True)
    var = jnp.mean((x - mu) ** 2, axis=-1, keepdims=True)
    return (x - mu) * jax.lax.rsqrt(var + eps) * w + b


def _gelu_exact(x):
    # PyTorch activation='gelu' (exact erf form).
    return 0.5 * x * (1.0 + jax.lax.erf(x * (1.0 / math.sqrt(2.0))))


# ----------------------------- fused Pallas kernel ----------------------------

def char_transformer_kernel(x_ref,
                            wqkv_ref, bqkv_ref, wo_ref, bo_ref,
                            w1_ref, b1_ref, w2_ref, b2_ref,
                            ln1w_ref, ln1b_ref, ln2w_ref, ln2b_ref,
                            lnw_ref, lnb_ref, wout_ref, bout_ref,
                            out_ref, *, nhead, num_layers):
    """All encoder layers + final LN + fc_out for ONE batch element (grid axis 0)."""
    bf16, f32 = jnp.bfloat16, jnp.float32

    x = x_ref[0].astype(f32)                          # (S, H) residual stream, f32
    S, H = x.shape
    hd = H // nhead
    scale = 1.0 / math.sqrt(hd)

    # Causal mask built once as (1, S, S) bool; broadcasts over the head axis at
    # the where.  Finite negative (not -inf) so a masked row can never produce NaN.
    row = jax.lax.broadcasted_iota(jnp.int32, (S, S), 0)
    col = jax.lax.broadcasted_iota(jnp.int32, (S, S), 1)
    causal = (col <= row)[None]
    neg_big = jnp.float32(-1e30)

    for l in range(num_layers):                       # static unrolled layer loop
        # ---- self-attention block: x = x + SA(LN1(x))  (pre-LN, norm_first=True) --
        xn = _layer_norm(x, ln1w_ref[l], ln1b_ref[l]).astype(bf16)        # (S, H)

        # Dense fused QKV projection: single lane-dense (S,H)@(H,3H) MXU pass.
        qkv = jnp.dot(xn, wqkv_ref[l], preferred_element_type=f32) + bqkv_ref[l]
        q = qkv[:, 0 * H:1 * H] * scale
        k = qkv[:, 1 * H:2 * H]
        v = qkv[:, 2 * H:3 * H]

        # Split heads: (S, H) -> (nhead, S, hd), head axis leading for batched dots.
        q = q.reshape(S, nhead, hd).transpose(1, 0, 2)
        k = k.reshape(S, nhead, hd).transpose(1, 0, 2)
        v = v.reshape(S, nhead, hd).transpose(1, 0, 2)

        s = jnp.einsum('nqd,nkd->nqk', q.astype(bf16), k.astype(bf16),
                       preferred_element_type=f32)                        # (nhead,S,S)
        s = jnp.where(causal, s, neg_big)
        s = s - jnp.max(s, axis=-1, keepdims=True)
        p = jnp.exp(s)
        p = p * pl.reciprocal(jnp.sum(p, axis=-1, keepdims=True), approx=True)

        ctx = jnp.einsum('nqk,nkd->nqd', p.astype(bf16), v.astype(bf16),
                         preferred_element_type=f32)                      # (nhead,S,hd)
        ctx = ctx.transpose(1, 0, 2).reshape(S, H)                        # concat heads

        attn = jnp.dot(ctx.astype(bf16), wo_ref[l],
                       preferred_element_type=f32) + bo_ref[l]            # (S, H)
        x = x + attn                                  # dropout = identity (eval)

        # ---- feed-forward block: x = x + W2(gelu(W1(LN2(x)))) ----
        xn2 = _layer_norm(x, ln2w_ref[l], ln2b_ref[l]).astype(bf16)
        h1 = jnp.dot(xn2, w1_ref[l], preferred_element_type=f32) + b1_ref[l]
        h1 = _gelu_exact(h1).astype(bf16)
        ff = jnp.dot(h1, w2_ref[l], preferred_element_type=f32) + b2_ref[l]
        x = x + ff

    # ---- final LayerNorm + (dropout = identity) + fc_out (lane-dense Vp) ----
    xf = _layer_norm(x, lnw_ref[...], lnb_ref[...]).astype(bf16)
    logits = jnp.dot(xf, wout_ref[...], preferred_element_type=f32) + bout_ref[...]
    out_ref[...] = logits[None].astype(out_ref.dtype)


# ----------------------------- wrapper ----------------------------------------

def char_transformer_forward(tokens, params, *, nhead, num_layers, vocab_size):
    """tokens: (B, S) int32 -> logits (B, S, vocab_size) float32."""
    B, S = tokens.shape
    H = params["embedding"].shape[1]
    FF = params["w1"].shape[-1]
    Vp = params["wout"].shape[1]                      # lane-padded vocab (mult. of 128)
    hd = H // nhead

    # Embedding gather * sqrt(H) + sinusoidal positional encoding (plain-JAX glue).
    # TODO(synk): token-id gather has no clean dense Pallas path at these sizes.
    x = (params["embedding"][tokens] * math.sqrt(H)
         + params["pe"][None, :S, :]).astype(jnp.float32)
    # pos_enc dropout + final dropout: identity in eval mode.

    operands = (x,
                params["wqkv"], params["bqkv"], params["wo"], params["bo"],
                params["w1"], params["b1"], params["w2"], params["b2"],
                params["ln1w"], params["ln1b"], params["ln2w"], params["ln2b"],
                params["lnw"], params["lnb"], params["wout"], params["bout"])

    def whole(p):
        # Full-array block with a constant index_map: the block index never changes
        # across the batch grid, so the weight is DMA'd once and stays VMEM-resident.
        nd = p.ndim
        return pl.BlockSpec(p.shape, lambda b: (0,) * nd)

    in_specs = ([pl.BlockSpec((1, S, H), lambda b: (b, 0, 0))]
                + [whole(p) for p in operands[1:]])
    out_spec = pl.BlockSpec((1, S, Vp), lambda b: (b, 0, 0))

    def nbytes(a):
        return a.size * jnp.dtype(a.dtype).itemsize

    weight_bytes = sum(nbytes(p) for p in operands[1:])
    # Per-grid-step f32 working set: residual copies, qkv, score/prob slabs,
    # FFN hidden, logits (rough upper bound).
    act_bytes = 4 * (8 * S * H + 3 * nhead * S * S + 2 * S * FF + S * Vp)
    vmem_limit = int(min(64 * 1024 * 1024,
                         max(16 * 1024 * 1024,
                             2 * weight_bytes + 2 * (nbytes(x) // B)
                             + act_bytes + (1 << 20))))

    flops_layer = (2 * S * H * 3 * H            # fused QKV projection
                   + 4 * nhead * S * S * hd     # scores + PV
                   + 2 * S * H * H              # output projection
                   + 4 * S * H * FF)            # FFN
    cost = pl.CostEstimate(
        flops=B * (num_layers * flops_layer + 2 * S * H * Vp),
        transcendentals=B * num_layers * (nhead * S * S + S * FF),
        bytes_accessed=sum(nbytes(p) for p in operands) + B * S * Vp * 4)

    kernel = functools.partial(char_transformer_kernel,
                               nhead=nhead, num_layers=num_layers)

    # TODO(synk): for long sequences add flash-style KV tiling (online softmax) so
    # the per-step (nhead, S, S) score slab never materializes, and K-tile the FFN.
    logits_padded = pl.pallas_call(
        kernel,
        grid=(B,),
        in_specs=in_specs,
        out_specs=out_spec,
        out_shape=jax.ShapeDtypeStruct((B, S, Vp), jnp.float32),
        compiler_params=pltpu.CompilerParams(
            dimension_semantics=("parallel",),      # shards batch across v7x's 2 TCs
            vmem_limit_bytes=vmem_limit),
        cost_estimate=cost,
    )(*operands)
    return logits_padded[..., :vocab_size]


# ----------------------------- parameter init ----------------------------------

def init_params(key, vocab_size, hidden_size, seq_length, num_layers, nhead):
    H = hidden_size
    FF = 4 * H
    L = num_layers
    Vp = ((vocab_size + 127) // 128) * 128            # lane-dense padded vocab
    f32 = jnp.float32

    k_emb, k_out, k_layers = jax.random.split(key, 3)

    def nrm(k, shape, scale=0.02, dtype=jnp.bfloat16):
        return (scale * jax.random.normal(k, shape, f32)).astype(dtype)

    # Sinusoidal positional encoding (max_len = seq_length).
    position = jnp.arange(seq_length, dtype=f32)[:, None]
    div_term = jnp.exp(jnp.arange(0, H, 2, dtype=f32) * (-math.log(10000.0) / H))
    pe = jnp.zeros((seq_length, H), f32)
    pe = pe.at[:, 0::2].set(jnp.sin(position * div_term))
    pe = pe.at[:, 1::2].set(jnp.cos(position * div_term))

    lk = jax.random.split(k_layers, 4)
    # Lane-dense attention layouts.  For a real PyTorch checkpoint this is a one-time
    # transpose at load:  wqkv[l] = in_proj_weight.T (H, 3H)  (q|k|v along lanes,
    # heads contiguous in hd blocks);  bqkv[l] = in_proj_bias[None] (1, 3H);
    # wo[l] = out_proj.weight.T (H, H);  w1/w2 = linear1/linear2 weight.T.
    layers = dict(
        wqkv=nrm(lk[0], (L, H, 3 * H)),
        bqkv=jnp.zeros((L, 1, 3 * H), f32),
        wo=nrm(lk[1], (L, H, H)),
        bo=jnp.zeros((L, 1, H), f32),
        w1=nrm(lk[2], (L, H, FF)), b1=jnp.zeros((L, 1, FF), f32),
        w2=nrm(lk[3], (L, FF, H)), b2=jnp.zeros((L, 1, H), f32),
        ln1w=jnp.ones((L, 1, H), f32), ln1b=jnp.zeros((L, 1, H), f32),
        ln2w=jnp.ones((L, 1, H), f32), ln2b=jnp.zeros((L, 1, H), f32),
    )

    wout = jnp.zeros((H, Vp), jnp.bfloat16).at[:, :vocab_size].set(
        nrm(k_out, (H, vocab_size)))

    return dict(
        embedding=nrm(k_emb, (vocab_size, H), scale=1.0, dtype=f32),
        pe=pe,
        lnw=jnp.ones((1, H), f32), lnb=jnp.zeros((1, H), f32),
        wout=wout, bout=jnp.zeros((1, Vp), f32),
        **layers,
    )


# ----------------------------- main --------------------------------------------

if __name__ == "__main__":
    VOCAB, HIDDEN, SEQ, LAYERS, NHEAD = 32, 32, 8, 2, 4
    BATCH = 2

    key = jax.random.PRNGKey(0)
    k_param, k_tok = jax.random.split(key)
    params = init_params(k_param, VOCAB, HIDDEN, SEQ, LAYERS, NHEAD)
    tokens = jax.random.randint(k_tok, (BATCH, SEQ), 0, VOCAB, dtype=jnp.int32)

    fwd = jax.jit(functools.partial(char_transformer_forward,
                                    nhead=NHEAD, num_layers=LAYERS,
                                    vocab_size=VOCAB))
    logits = fwd(tokens, params)
    jax.block_until_ready(logits)

    assert logits.shape == (BATCH, SEQ, VOCAB)
    assert bool(jnp.all(jnp.isfinite(logits)))
    print("KERNEL_OK")
</pallas_src>

<mosaic_0001>
module attributes {stable_mosaic.version = 11 : i64} {
  func.func @char_transformer_kernel(%arg0: i32, %arg1: memref<1x8x32xf32, #tpu.memory_space<vmem>>, %arg2: memref<2x32x96xbf16, #tpu.memory_space<vmem>>, %arg3: memref<2x1x96xf32, #tpu.memory_space<vmem>>, %arg4: memref<2x32x32xbf16, #tpu.memory_space<vmem>>, %arg5: memref<2x1x32xf32, #tpu.memory_space<vmem>>, %arg6: memref<2x32x128xbf16, #tpu.memory_space<vmem>>, %arg7: memref<2x1x128xf32, #tpu.memory_space<vmem>>, %arg8: memref<2x128x32xbf16, #tpu.memory_space<vmem>>, %arg9: memref<2x1x32xf32, #tpu.memory_space<vmem>>, %arg10: memref<2x1x32xf32, #tpu.memory_space<vmem>>, %arg11: memref<2x1x32xf32, #tpu.memory_space<vmem>>, %arg12: memref<2x1x32xf32, #tpu.memory_space<vmem>>, %arg13: memref<2x1x32xf32, #tpu.memory_space<vmem>>, %arg14: memref<1x32xf32, #tpu.memory_space<vmem>>, %arg15: memref<1x32xf32, #tpu.memory_space<vmem>>, %arg16: memref<32x128xbf16, #tpu.memory_space<vmem>>, %arg17: memref<1x128xf32, #tpu.memory_space<vmem>>, %arg18: memref<1x8x128xf32, #tpu.memory_space<vmem>>) attributes {dimension_semantics = [#tpu.dimension_semantics<parallel>], iteration_bounds = array<i64: 2>, scalar_prefetch = 0 : i64, scratch_operands = 0 : i64, tpu.core_type = #tpu.core_type<tc>, window_params = [{transform_indices = @transform_0, window_bounds = array<i64: 1, 8, 32>}, {pipeline_mode = #tpu.pipeline_mode<synchronous>, transform_indices = @transform_1, window_bounds = array<i64: 2, 32, 96>}, {pipeline_mode = #tpu.pipeline_mode<synchronous>, transform_indices = @transform_2, window_bounds = array<i64: 2, 1, 96>}, {pipeline_mode = #tpu.pipeline_mode<synchronous>, transform_indices = @transform_3, window_bounds = array<i64: 2, 32, 32>}, {pipeline_mode = #tpu.pipeline_mode<synchronous>, transform_indices = @transform_4, window_bounds = array<i64: 2, 1, 32>}, {pipeline_mode = #tpu.pipeline_mode<synchronous>, transform_indices = @transform_5, window_bounds = array<i64: 2, 32, 128>}, {pipeline_mode = #tpu.pipeline_mode<synchronous>, transform_indices = @transform_6, window_bounds = array<i64: 2, 1, 128>}, {pipeline_mode = #tpu.pipeline_mode<synchronous>, transform_indices = @transform_7, window_bounds = array<i64: 2, 128, 32>}, {pipeline_mode = #tpu.pipeline_mode<synchronous>, transform_indices = @transform_8, window_bounds = array<i64: 2, 1, 32>}, {pipeline_mode = #tpu.pipeline_mode<synchronous>, transform_indices = @transform_9, window_bounds = array<i64: 2, 1, 32>}, {pipeline_mode = #tpu.pipeline_mode<synchronous>, transform_indices = @transform_10, window_bounds = array<i64: 2, 1, 32>}, {pipeline_mode = #tpu.pipeline_mode<synchronous>, transform_indices = @transform_11, window_bounds = array<i64: 2, 1, 32>}, {pipeline_mode = #tpu.pipeline_mode<synchronous>, transform_indices = @transform_12, window_bounds = array<i64: 2, 1, 32>}, {pipeline_mode = #tpu.pipeline_mode<synchronous>, transform_indices = @transform_13, window_bounds = array<i64: 1, 32>}, {pipeline_mode = #tpu.pipeline_mode<synchronous>, transform_indices = @transform_14, window_bounds = array<i64: 1, 32>}, {pipeline_mode = #tpu.pipeline_mode<synchronous>, transform_indices = @transform_15, window_bounds = array<i64: 32, 128>}, {pipeline_mode = #tpu.pipeline_mode<synchronous>, transform_indices = @transform_16, window_bounds = array<i64: 1, 128>}, {transform_indices = @transform_17, window_bounds = array<i64: 1, 8, 128>}]} {
    %c0 = arith.constant 0 : index
    %c0_0 = arith.constant 0 : index
    %c0_1 = arith.constant 0 : index
    %0 = vector.load %arg1[%c0, %c0_0, %c0_1] : memref<1x8x32xf32, #tpu.memory_space<vmem>>, vector<1x8x32xf32>
    %1 = vector.shape_cast %0 : vector<1x8x32xf32> to vector<8x32xf32>
    %2 = tpu.iota {dimensions = array<i32: 0>} : vector<8x8xi32>
    %3 = tpu.iota {dimensions = array<i32: 1>} : vector<8x8xi32>
    %4 = arith.cmpi sle, %3, %2 : vector<8x8xi32>
    %5 = vector.shape_cast %4 : vector<8x8xi1> to vector<1x8x8xi1>
    %c0_2 = arith.constant 0 : index
    %c0_3 = arith.constant 0 : index
    %c0_4 = arith.constant 0 : index
    %6 = vector.load %arg10[%c0_2, %c0_3, %c0_4] : memref<2x1x32xf32, #tpu.memory_space<vmem>>, vector<1x1x32xf32>
    %7 = vector.shape_cast %6 : vector<1x1x32xf32> to vector<1x32xf32>
    %c0_5 = arith.constant 0 : index
    %c0_6 = arith.constant 0 : index
    %c0_7 = arith.constant 0 : index
    %8 = vector.load %arg11[%c0_5, %c0_6, %c0_7] : memref<2x1x32xf32, #tpu.memory_space<vmem>>, vector<1x1x32xf32>
    %9 = vector.shape_cast %8 : vector<1x1x32xf32> to vector<1x32xf32>
    %cst = arith.constant dense<0.000000e+00> : vector<8xf32>
    %10 = vector.multi_reduction <add>, %1, %cst [1] : vector<8x32xf32> to vector<8xf32>
    %11 = vector.shape_cast %10 : vector<8xf32> to vector<8x1xf32>
    %cst_8 = arith.constant 3.200000e+01 : f32
    %12 = vector.broadcast %cst_8 : f32 to vector<8x1xf32>
    %13 = arith.divf %11, %12 : vector<8x1xf32>
    %14 = vector.broadcast %13 : vector<8x1xf32> to vector<8x32xf32>
    %15 = arith.subf %1, %14 : vector<8x32xf32>
    %16 = arith.mulf %15, %15 : vector<8x32xf32>
    %cst_9 = arith.constant dense<0.000000e+00> : vector<8xf32>
    %17 = vector.multi_reduction <add>, %16, %cst_9 [1] : vector<8x32xf32> to vector<8xf32>
    %18 = vector.shape_cast %17 : vector<8xf32> to vector<8x1xf32>
    %cst_10 = arith.constant 3.200000e+01 : f32
    %19 = vector.broadcast %cst_10 : f32 to vector<8x1xf32>
    %20 = arith.divf %18, %19 : vector<8x1xf32>
    %21 = vector.broadcast %13 : vector<8x1xf32> to vector<8x32xf32>
    %22 = arith.subf %1, %21 : vector<8x32xf32>
    %cst_11 = arith.constant 9.99999974E-6 : f32
    %23 = vector.broadcast %cst_11 : f32 to vector<8x1xf32>
    %24 = arith.addf %20, %23 : vector<8x1xf32>
    %25 = math.rsqrt %24 : vector<8x1xf32>
    %26 = vector.broadcast %25 : vector<8x1xf32> to vector<8x32xf32>
    %27 = arith.mulf %22, %26 : vector<8x32xf32>
    %28 = vector.broadcast %7 : vector<1x32xf32> to vector<8x32xf32>
    %29 = arith.mulf %27, %28 : vector<8x32xf32>
    %30 = vector.broadcast %9 : vector<1x32xf32> to vector<8x32xf32>
    %31 = arith.addf %29, %30 : vector<8x32xf32>
    %32 = arith.truncf %31 : vector<8x32xf32> to vector<8x32xbf16>
    %c0_12 = arith.constant 0 : index
    %c0_13 = arith.constant 0 : index
    %c0_14 = arith.constant 0 : index
    %33 = vector.load %arg2[%c0_12, %c0_13, %c0_14] : memref<2x32x96xbf16, #tpu.memory_space<vmem>>, vector<1x32x96xbf16>
    %34 = vector.shape_cast %33 : vector<1x32x96xbf16> to vector<32x96xbf16>
    %cst_15 = arith.constant dense<0.000000e+00> : vector<8x96xf32>
    %35 = tpu.matmul %32, %34, %cst_15 {dimension_numbers = #tpu.dot_dimension_numbers<[1], [0], [0], [1], [0, 0, 1, 1], [], []>} : vector<8x32xbf16>, vector<32x96xbf16>, vector<8x96xf32> -> vector<8x96xf32>
    %c0_16 = arith.constant 0 : index
    %c0_17 = arith.constant 0 : index
    %c0_18 = arith.constant 0 : index
    %36 = vector.load %arg3[%c0_16, %c0_17, %c0_18] : memref<2x1x96xf32, #tpu.memory_space<vmem>>, vector<1x1x96xf32>
    %37 = vector.shape_cast %36 : vector<1x1x96xf32> to vector<1x96xf32>
    %38 = vector.broadcast %37 : vector<1x96xf32> to vector<8x96xf32>
    %39 = arith.addf %35, %38 : vector<8x96xf32>
    %40 = vector.extract_strided_slice %39 {offsets = [0, 0], sizes = [8, 32], strides = [1, 1]} : vector<8x96xf32> to vector<8x32xf32>
    %cst_19 = arith.constant 0.353553385 : f32
    %41 = vector.broadcast %cst_19 : f32 to vector<8x32xf32>
    %42 = arith.mulf %40, %41 : vector<8x32xf32>
    %43 = vector.extract_strided_slice %39 {offsets = [0, 32], sizes = [8, 32], strides = [1, 1]} : vector<8x96xf32> to vector<8x32xf32>
    %44 = vector.extract_strided_slice %39 {offsets = [0, 64], sizes = [8, 32], strides = [1, 1]} : vector<8x96xf32> to vector<8x32xf32>
    %45 = vector.shape_cast %42 : vector<8x32xf32> to vector<8x4x8xf32>
    %46 = tpu.transpose %45, [1, 0, 2] : vector<8x4x8xf32> -> vector<4x8x8xf32>
    %47 = vector.shape_cast %43 : vector<8x32xf32> to vector<8x4x8xf32>
    %48 = tpu.transpose %47, [1, 0, 2] : vector<8x4x8xf32> -> vector<4x8x8xf32>
    %49 = vector.shape_cast %44 : vector<8x32xf32> to vector<8x4x8xf32>
    %50 = tpu.transpose %49, [1, 0, 2] : vector<8x4x8xf32> -> vector<4x8x8xf32>
    %51 = arith.truncf %46 : vector<4x8x8xf32> to vector<4x8x8xbf16>
    %52 = arith.truncf %48 : vector<4x8x8xf32> to vector<4x8x8xbf16>
    "tpu.trace_start"() <{level = 10 : i32, message = "nqd,nkd->nqk"}> : () -> ()
    %cst_20 = arith.constant dense<0.000000e+00> : vector<4x8x8xf32>
    %53 = tpu.matmul %51, %52, %cst_20 {dimension_numbers = #tpu.dot_dimension_numbers<[2], [2], [1], [1], [0, 0, 0, 1, 1, 1], [0], [0]>} : vector<4x8x8xbf16>, vector<4x8x8xbf16>, vector<4x8x8xf32> -> vector<4x8x8xf32>
    %cst_21 = arith.constant -1.000000e+30 : f32
    "tpu.trace_stop"() : () -> ()
    %54 = vector.shape_cast %5 : vector<1x8x8xi1> to vector<1x8x8xi1>
    %55 = vector.broadcast %54 : vector<1x8x8xi1> to vector<4x8x8xi1>
    %56 = vector.broadcast %cst_21 : f32 to vector<4x8x8xf32>
    %57 = arith.select %55, %53, %56 : vector<4x8x8xi1>, vector<4x8x8xf32>
    %cst_22 = arith.constant dense<0xFF800000> : vector<4x8xf32>
    %58 = vector.multi_reduction <maximumf>, %57, %cst_22 [2] : vector<4x8x8xf32> to vector<4x8xf32>
    %59 = vector.shape_cast %58 : vector<4x8xf32> to vector<4x8x1xf32>
    %60 = vector.broadcast %59 : vector<4x8x1xf32> to vector<4x8x8xf32>
    %61 = arith.subf %57, %60 : vector<4x8x8xf32>
    %62 = math.exp %61 : vector<4x8x8xf32>
    %cst_23 = arith.constant dense<0.000000e+00> : vector<4x8xf32>
    %63 = vector.multi_reduction <add>, %62, %cst_23 [2] : vector<4x8x8xf32> to vector<4x8xf32>
    %64 = vector.shape_cast %63 : vector<4x8xf32> to vector<4x8x1xf32>
    %65 = tpu.reciprocal %64 {approx = true} : vector<4x8x1xf32> -> vector<4x8x1xf32>
    %66 = vector.broadcast %65 : vector<4x8x1xf32> to vector<4x8x8xf32>
    %67 = arith.mulf %62, %66 : vector<4x8x8xf32>
    %68 = arith.truncf %67 : vector<4x8x8xf32> to vector<4x8x8xbf16>
    %69 = arith.truncf %50 : vector<4x8x8xf32> to vector<4x8x8xbf16>
    "tpu.trace_start"() <{level = 10 : i32, message = "nqk,nkd->nqd"}> : () -> ()
    %cst_24 = arith.constant dense<0.000000e+00> : vector<4x8x8xf32>
    %70 = tpu.matmul %68, %69, %cst_24 {dimension_numbers = #tpu.dot_dimension_numbers<[2], [1], [1], [2], [0, 0, 0, 1, 1, 2], [0], [0]>} : vector<4x8x8xbf16>, vector<4x8x8xbf16>, vector<4x8x8xf32> -> vector<4x8x8xf32>
    "tpu.trace_stop"() : () -> ()
    %71 = tpu.transpose %70, [1, 0, 2] : vector<4x8x8xf32> -> vector<8x4x8xf32>
    %72 = vector.shape_cast %71 : vector<8x4x8xf32> to vector<8x32xf32>
    %73 = arith.truncf %72 : vector<8x32xf32> to vector<8x32xbf16>
    %c0_25 = arith.constant 0 : index
    %c0_26 = arith.constant 0 : index
    %c0_27 = arith.constant 0 : index
    %74 = vector.load %arg4[%c0_25, %c0_26, %c0_27] : memref<2x32x32xbf16, #tpu.memory_space<vmem>>, vector<1x32x32xbf16>
    %75 = vector.shape_cast %74 : vector<1x32x32xbf16> to vector<32x32xbf16>
    %cst_28 = arith.constant dense<0.000000e+00> : vector<8x32xf32>
    %76 = tpu.matmul %73, %75, %cst_28 {dimension_numbers = #tpu.dot_dimension_numbers<[1], [0], [0], [1], [0, 0, 1, 1], [], []>} : vector<8x32xbf16>, vector<32x32xbf16>, vector<8x32xf32> -> vector<8x32xf32>
    %c0_29 = arith.constant 0 : index
    %c0_30 = arith.constant 0 : index
    %c0_31 = arith.constant 0 : index
    %77 = vector.load %arg5[%c0_29, %c0_30, %c0_31] : memref<2x1x32xf32, #tpu.memory_space<vmem>>, vector<1x1x32xf32>
    %78 = vector.shape_cast %77 : vector<1x1x32xf32> to vector<1x32xf32>
    %79 = vector.broadcast %78 : vector<1x32xf32> to vector<8x32xf32>
    %80 = arith.addf %76, %79 : vector<8x32xf32>
    %81 = arith.addf %1, %80 : vector<8x32xf32>
    %c0_32 = arith.constant 0 : index
    %c0_33 = arith.constant 0 : index
    %c0_34 = arith.constant 0 : index
    %82 = vector.load %arg12[%c0_32, %c0_33, %c0_34] : memref<2x1x32xf32, #tpu.memory_space<vmem>>, vector<1x1x32xf32>
    %83 = vector.shape_cast %82 : vector<1x1x32xf32> to vector<1x32xf32>
    %c0_35 = arith.constant 0 : index
    %c0_36 = arith.constant 0 : index
    %c0_37 = arith.constant 0 : index
    %84 = vector.load %arg13[%c0_35, %c0_36, %c0_37] : memref<2x1x32xf32, #tpu.memory_space<vmem>>, vector<1x1x32xf32>
    %85 = vector.shape_cast %84 : vector<1x1x32xf32> to vector<1x32xf32>
    %cst_38 = arith.constant dense<0.000000e+00> : vector<8xf32>
    %86 = vector.multi_reduction <add>, %81, %cst_38 [1] : vector<8x32xf32> to vector<8xf32>
    %87 = vector.shape_cast %86 : vector<8xf32> to vector<8x1xf32>
    %cst_39 = arith.constant 3.200000e+01 : f32
    %88 = vector.broadcast %cst_39 : f32 to vector<8x1xf32>
    %89 = arith.divf %87, %88 : vector<8x1xf32>
    %90 = vector.broadcast %89 : vector<8x1xf32> to vector<8x32xf32>
    %91 = arith.subf %81, %90 : vector<8x32xf32>
    %92 = arith.mulf %91, %91 : vector<8x32xf32>
    %cst_40 = arith.constant dense<0.000000e+00> : vector<8xf32>
    %93 = vector.multi_reduction <add>, %92, %cst_40 [1] : vector<8x32xf32> to vector<8xf32>
    %94 = vector.shape_cast %93 : vector<8xf32> to vector<8x1xf32>
    %cst_41 = arith.constant 3.200000e+01 : f32
    %95 = vector.broadcast %cst_41 : f32 to vector<8x1xf32>
    %96 = arith.divf %94, %95 : vector<8x1xf32>
    %97 = vector.broadcast %89 : vector<8x1xf32> to vector<8x32xf32>
    %98 = arith.subf %81, %97 : vector<8x32xf32>
    %cst_42 = arith.constant 9.99999974E-6 : f32
    %99 = vector.broadcast %cst_42 : f32 to vector<8x1xf32>
    %100 = arith.addf %96, %99 : vector<8x1xf32>
    %101 = math.rsqrt %100 : vector<8x1xf32>
    %102 = vector.broadcast %101 : vector<8x1xf32> to vector<8x32xf32>
    %103 = arith.mulf %98, %102 : vector<8x32xf32>
    %104 = vector.broadcast %83 : vector<1x32xf32> to vector<8x32xf32>
    %105 = arith.mulf %103, %104 : vector<8x32xf32>
    %106 = vector.broadcast %85 : vector<1x32xf32> to vector<8x32xf32>
    %107 = arith.addf %105, %106 : vector<8x32xf32>
    %108 = arith.truncf %107 : vector<8x32xf32> to vector<8x32xbf16>
    %c0_43 = arith.constant 0 : index
    %c0_44 = arith.constant 0 : index
    %c0_45 = arith.constant 0 : index
    %109 = vector.load %arg6[%c0_43, %c0_44, %c0_45] : memref<2x32x128xbf16, #tpu.memory_space<vmem>>, vector<1x32x128xbf16>
    %110 = vector.shape_cast %109 : vector<1x32x128xbf16> to vector<32x128xbf16>
    %cst_46 = arith.constant dense<0.000000e+00> : vector<8x128xf32>
    %111 = tpu.matmul %108, %110, %cst_46 {dimension_numbers = #tpu.dot_dimension_numbers<[1], [0], [0], [1], [0, 0, 1, 1], [], []>} : vector<8x32xbf16>, vector<32x128xbf16>, vector<8x128xf32> -> vector<8x128xf32>
    %c0_47 = arith.constant 0 : index
    %c0_48 = arith.constant 0 : index
    %c0_49 = arith.constant 0 : index
    %112 = vector.load %arg7[%c0_47, %c0_48, %c0_49] : memref<2x1x128xf32, #tpu.memory_space<vmem>>, vector<1x1x128xf32>
    %113 = vector.shape_cast %112 : vector<1x1x128xf32> to vector<1x128xf32>
    %114 = vector.broadcast %113 : vector<1x128xf32> to vector<8x128xf32>
    %115 = arith.addf %111, %114 : vector<8x128xf32>
    %cst_50 = arith.constant 5.000000e-01 : f32
    %116 = vector.broadcast %cst_50 : f32 to vector<8x128xf32>
    %117 = arith.mulf %116, %115 : vector<8x128xf32>
    %cst_51 = arith.constant 0.707106769 : f32
    %118 = vector.broadcast %cst_51 : f32 to vector<8x128xf32>
    %119 = arith.mulf %115, %118 : vector<8x128xf32>
    %120 = math.erf %119 : vector<8x128xf32>
    %cst_52 = arith.constant 1.000000e+00 : f32
    %121 = vector.broadcast %cst_52 : f32 to vector<8x128xf32>
    %122 = arith.addf %121, %120 : vector<8x128xf32>
    %123 = arith.mulf %117, %122 : vector<8x128xf32>
    %124 = arith.truncf %123 : vector<8x128xf32> to vector<8x128xbf16>
    %c0_53 = arith.constant 0 : index
    %c0_54 = arith.constant 0 : index
    %c0_55 = arith.constant 0 : index
    %125 = vector.load %arg8[%c0_53, %c0_54, %c0_55] : memref<2x128x32xbf16, #tpu.memory_space<vmem>>, vector<1x128x32xbf16>
    %126 = vector.shape_cast %125 : vector<1x128x32xbf16> to vector<128x32xbf16>
    %cst_56 = arith.constant dense<0.000000e+00> : vector<8x32xf32>
    %127 = tpu.matmul %124, %126, %cst_56 {dimension_numbers = #tpu.dot_dimension_numbers<[1], [0], [0], [1], [0, 0, 1, 1], [], []>} : vector<8x128xbf16>, vector<128x32xbf16>, vector<8x32xf32> -> vector<8x32xf32>
    %c0_57 = arith.constant 0 : index
    %c0_58 = arith.constant 0 : index
    %c0_59 = arith.constant 0 : index
    %128 = vector.load %arg9[%c0_57, %c0_58, %c0_59] : memref<2x1x32xf32, #tpu.memory_space<vmem>>, vector<1x1x32xf32>
    %129 = vector.shape_cast %128 : vector<1x1x32xf32> to vector<1x32xf32>
    %130 = vector.broadcast %129 : vector<1x32xf32> to vector<8x32xf32>
    %131 = arith.addf %127, %130 : vector<8x32xf32>
    %132 = arith.addf %81, %131 : vector<8x32xf32>
    %c1 = arith.constant 1 : index
    %c0_60 = arith.constant 0 : index
    %c0_61 = arith.constant 0 : index
    %133 = vector.load %arg10[%c1, %c0_60, %c0_61] : memref<2x1x32xf32, #tpu.memory_space<vmem>>, vector<1x1x32xf32>
    %134 = vector.shape_cast %133 : vector<1x1x32xf32> to vector<1x32xf32>
    %c1_62 = arith.constant 1 : index
    %c0_63 = arith.constant 0 : index
    %c0_64 = arith.constant 0 : index
    %135 = vector.load %arg11[%c1_62, %c0_63, %c0_64] : memref<2x1x32xf32, #tpu.memory_space<vmem>>, vector<1x1x32xf32>
    %136 = vector.shape_cast %135 : vector<1x1x32xf32> to vector<1x32xf32>
    %cst_65 = arith.constant dense<0.000000e+00> : vector<8xf32>
    %137 = vector.multi_reduction <add>, %132, %cst_65 [1] : vector<8x32xf32> to vector<8xf32>
    %138 = vector.shape_cast %137 : vector<8xf32> to vector<8x1xf32>
    %cst_66 = arith.constant 3.200000e+01 : f32
    %139 = vector.broadcast %cst_66 : f32 to vector<8x1xf32>
    %140 = arith.divf %138, %139 : vector<8x1xf32>
    %141 = vector.broadcast %140 : vector<8x1xf32> to vector<8x32xf32>
    %142 = arith.subf %132, %141 : vector<8x32xf32>
    %143 = arith.mulf %142, %142 : vector<8x32xf32>
    %cst_67 = arith.constant dense<0.000000e+00> : vector<8xf32>
    %144 = vector.multi_reduction <add>, %143, %cst_67 [1] : vector<8x32xf32> to vector<8xf32>
    %145 = vector.shape_cast %144 : vector<8xf32> to vector<8x1xf32>
    %cst_68 = arith.constant 3.200000e+01 : f32
    %146 = vector.broadcast %cst_68 : f32 to vector<8x1xf32>
    %147 = arith.divf %145, %146 : vector<8x1xf32>
    %148 = vector.broadcast %140 : vector<8x1xf32> to vector<8x32xf32>
    %149 = arith.subf %132, %148 : vector<8x32xf32>
    %cst_69 = arith.constant 9.99999974E-6 : f32
    %150 = vector.broadcast %cst_69 : f32 to vector<8x1xf32>
    %151 = arith.addf %147, %150 : vector<8x1xf32>
    %152 = math.rsqrt %151 : vector<8x1xf32>
    %153 = vector.broadcast %152 : vector<8x1xf32> to vector<8x32xf32>
    %154 = arith.mulf %149, %153 : vector<8x32xf32>
    %155 = vector.broadcast %134 : vector<1x32xf32> to vector<8x32xf32>
    %156 = arith.mulf %154, %155 : vector<8x32xf32>
    %157 = vector.broadcast %136 : vector<1x32xf32> to vector<8x32xf32>
    %158 = arith.addf %156, %157 : vector<8x32xf32>
    %159 = arith.truncf %158 : vector<8x32xf32> to vector<8x32xbf16>
    %c1_70 = arith.constant 1 : index
    %c0_71 = arith.constant 0 : index
    %c0_72 = arith.constant 0 : index
    %160 = vector.load %arg2[%c1_70, %c0_71, %c0_72] : memref<2x32x96xbf16, #tpu.memory_space<vmem>>, vector<1x32x96xbf16>
    %161 = vector.shape_cast %160 : vector<1x32x96xbf16> to vector<32x96xbf16>
    %cst_73 = arith.constant dense<0.000000e+00> : vector<8x96xf32>
    %162 = tpu.matmul %159, %161, %cst_73 {dimension_numbers = #tpu.dot_dimension_numbers<[1], [0], [0], [1], [0, 0, 1, 1], [], []>} : vector<8x32xbf16>, vector<32x96xbf16>, vector<8x96xf32> -> vector<8x96xf32>
    %c1_74 = arith.constant 1 : index
    %c0_75 = arith.constant 0 : index
    %c0_76 = arith.constant 0 : index
    %163 = vector.load %arg3[%c1_74, %c0_75, %c0_76] : memref<2x1x96xf32, #tpu.memory_space<vmem>>, vector<1x1x96xf32>
    %164 = vector.shape_cast %163 : vector<1x1x96xf32> to vector<1x96xf32>
    %165 = vector.broadcast %164 : vector<1x96xf32> to vector<8x96xf32>
    %166 = arith.addf %162, %165 : vector<8x96xf32>
    %167 = vector.extract_strided_slice %166 {offsets = [0, 0], sizes = [8, 32], strides = [1, 1]} : vector<8x96xf32> to vector<8x32xf32>
    %cst_77 = arith.constant 0.353553385 : f32
    %168 = vector.broadcast %cst_77 : f32 to vector<8x32xf32>
    %169 = arith.mulf %167, %168 : vector<8x32xf32>
    %170 = vector.extract_strided_slice %166 {offsets = [0, 32], sizes = [8, 32], strides = [1, 1]} : vector<8x96xf32> to vector<8x32xf32>
    %171 = vector.extract_strided_slice %166 {offsets = [0, 64], sizes = [8, 32], strides = [1, 1]} : vector<8x96xf32> to vector<8x32xf32>
    %172 = vector.shape_cast %169 : vector<8x32xf32> to vector<8x4x8xf32>
    %173 = tpu.transpose %172, [1, 0, 2] : vector<8x4x8xf32> -> vector<4x8x8xf32>
    %174 = vector.shape_cast %170 : vector<8x32xf32> to vector<8x4x8xf32>
    %175 = tpu.transpose %174, [1, 0, 2] : vector<8x4x8xf32> -> vector<4x8x8xf32>
    %176 = vector.shape_cast %171 : vector<8x32xf32> to vector<8x4x8xf32>
    %177 = tpu.transpose %176, [1, 0, 2] : vector<8x4x8xf32> -> vector<4x8x8xf32>
    %178 = arith.truncf %173 : vector<4x8x8xf32> to vector<4x8x8xbf16>
    %179 = arith.truncf %175 : vector<4x8x8xf32> to vector<4x8x8xbf16>
    "tpu.trace_start"() <{level = 10 : i32, message = "nqd,nkd->nqk"}> : () -> ()
    %cst_78 = arith.constant dense<0.000000e+00> : vector<4x8x8xf32>
    %180 = tpu.matmul %178, %179, %cst_78 {dimension_numbers = #tpu.dot_dimension_numbers<[2], [2], [1], [1], [0, 0, 0, 1, 1, 1], [0], [0]>} : vector<4x8x8xbf16>, vector<4x8x8xbf16>, vector<4x8x8xf32> -> vector<4x8x8xf32>
    %cst_79 = arith.constant -1.000000e+30 : f32
    "tpu.trace_stop"() : () -> ()
    %181 = vector.shape_cast %5 : vector<1x8x8xi1> to vector<1x8x8xi1>
    %182 = vector.broadcast %181 : vector<1x8x8xi1> to vector<4x8x8xi1>
    %183 = vector.broadcast %cst_79 : f32 to vector<4x8x8xf32>
    %184 = arith.select %182, %180, %183 : vector<4x8x8xi1>, vector<4x8x8xf32>
    %cst_80 = arith.constant dense<0xFF800000> : vector<4x8xf32>
    %185 = vector.multi_reduction <maximumf>, %184, %cst_80 [2] : vector<4x8x8xf32> to vector<4x8xf32>
    %186 = vector.shape_cast %185 : vector<4x8xf32> to vector<4x8x1xf32>
    %187 = vector.broadcast %186 : vector<4x8x1xf32> to vector<4x8x8xf32>
    %188 = arith.subf %184, %187 : vector<4x8x8xf32>
    %189 = math.exp %188 : vector<4x8x8xf32>
    %cst_81 = arith.constant dense<0.000000e+00> : vector<4x8xf32>
    %190 = vector.multi_reduction <add>, %189, %cst_81 [2] : vector<4x8x8xf32> to vector<4x8xf32>
    %191 = vector.shape_cast %190 : vector<4x8xf32> to vector<4x8x1xf32>
    %192 = tpu.reciprocal %191 {approx = true} : vector<4x8x1xf32> -> vector<4x8x1xf32>
    %193 = vector.broadcast %192 : vector<4x8x1xf32> to vector<4x8x8xf32>
    %194 = arith.mulf %189, %193 : vector<4x8x8xf32>
    %195 = arith.truncf %194 : vector<4x8x8xf32> to vector<4x8x8xbf16>
    %196 = arith.truncf %177 : vector<4x8x8xf32> to vector<4x8x8xbf16>
    "tpu.trace_start"() <{level = 10 : i32, message = "nqk,nkd->nqd"}> : () -> ()
    %cst_82 = arith.constant dense<0.000000e+00> : vector<4x8x8xf32>
    %197 = tpu.matmul %195, %196, %cst_82 {dimension_numbers = #tpu.dot_dimension_numbers<[2], [1], [1], [2], [0, 0, 0, 1, 1, 2], [0], [0]>} : vector<4x8x8xbf16>, vector<4x8x8xbf16>, vector<4x8x8xf32> -> vector<4x8x8xf32>
    "tpu.trace_stop"() : () -> ()
    %198 = tpu.transpose %197, [1, 0, 2] : vector<4x8x8xf32> -> vector<8x4x8xf32>
    %199 = vector.shape_cast %198 : vector<8x4x8xf32> to vector<8x32xf32>
    %200 = arith.truncf %199 : vector<8x32xf32> to vector<8x32xbf16>
    %c1_83 = arith.constant 1 : index
    %c0_84 = arith.constant 0 : index
    %c0_85 = arith.constant 0 : index
    %201 = vector.load %arg4[%c1_83, %c0_84, %c0_85] : memref<2x32x32xbf16, #tpu.memory_space<vmem>>, vector<1x32x32xbf16>
    %202 = vector.shape_cast %201 : vector<1x32x32xbf16> to vector<32x32xbf16>
    %cst_86 = arith.constant dense<0.000000e+00> : vector<8x32xf32>
    %203 = tpu.matmul %200, %202, %cst_86 {dimension_numbers = #tpu.dot_dimension_numbers<[1], [0], [0], [1], [0, 0, 1, 1], [], []>} : vector<8x32xbf16>, vector<32x32xbf16>, vector<8x32xf32> -> vector<8x32xf32>
    %c1_87 = arith.constant 1 : index
    %c0_88 = arith.constant 0 : index
    %c0_89 = arith.constant 0 : index
    %204 = vector.load %arg5[%c1_87, %c0_88, %c0_89] : memref<2x1x32xf32, #tpu.memory_space<vmem>>, vector<1x1x32xf32>
    %205 = vector.shape_cast %204 : vector<1x1x32xf32> to vector<1x32xf32>
    %206 = vector.broadcast %205 : vector<1x32xf32> to vector<8x32xf32>
    %207 = arith.addf %203, %206 : vector<8x32xf32>
    %208 = arith.addf %132, %207 : vector<8x32xf32>
    %c1_90 = arith.constant 1 : index
    %c0_91 = arith.constant 0 : index
    %c0_92 = arith.constant 0 : index
    %209 = vector.load %arg12[%c1_90, %c0_91, %c0_92] : memref<2x1x32xf32, #tpu.memory_space<vmem>>, vector<1x1x32xf32>
    %210 = vector.shape_cast %209 : vector<1x1x32xf32> to vector<1x32xf32>
    %c1_93 = arith.constant 1 : index
    %c0_94 = arith.constant 0 : index
    %c0_95 = arith.constant 0 : index
    %211 = vector.load %arg13[%c1_93, %c0_94, %c0_95] : memref<2x1x32xf32, #tpu.memory_space<vmem>>, vector<1x1x32xf32>
    %212 = vector.shape_cast %211 : vector<1x1x32xf32> to vector<1x32xf32>
    %cst_96 = arith.constant dense<0.000000e+00> : vector<8xf32>
    %213 = vector.multi_reduction <add>, %208, %cst_96 [1] : vector<8x32xf32> to vector<8xf32>
    %214 = vector.shape_cast %213 : vector<8xf32> to vector<8x1xf32>
    %cst_97 = arith.constant 3.200000e+01 : f32
    %215 = vector.broadcast %cst_97 : f32 to vector<8x1xf32>
    %216 = arith.divf %214, %215 : vector<8x1xf32>
    %217 = vector.broadcast %216 : vector<8x1xf32> to vector<8x32xf32>
    %218 = arith.subf %208, %217 : vector<8x32xf32>
    %219 = arith.mulf %218, %218 : vector<8x32xf32>
    %cst_98 = arith.constant dense<0.000000e+00> : vector<8xf32>
    %220 = vector.multi_reduction <add>, %219, %cst_98 [1] : vector<8x32xf32> to vector<8xf32>
    %221 = vector.shape_cast %220 : vector<8xf32> to vector<8x1xf32>
    %cst_99 = arith.constant 3.200000e+01 : f32
    %222 = vector.broadcast %cst_99 : f32 to vector<8x1xf32>
    %223 = arith.divf %221, %222 : vector<8x1xf32>
    %224 = vector.broadcast %216 : vector<8x1xf32> to vector<8x32xf32>
    %225 = arith.subf %208, %224 : vector<8x32xf32>
    %cst_100 = arith.constant 9.99999974E-6 : f32
    %226 = vector.broadcast %cst_100 : f32 to vector<8x1xf32>
    %227 = arith.addf %223, %226 : vector<8x1xf32>
    %228 = math.rsqrt %227 : vector<8x1xf32>
    %229 = vector.broadcast %228 : vector<8x1xf32> to vector<8x32xf32>
    %230 = arith.mulf %225, %229 : vector<8x32xf32>
    %231 = vector.broadcast %210 : vector<1x32xf32> to vector<8x32xf32>
    %232 = arith.mulf %230, %231 : vector<8x32xf32>
    %233 = vector.broadcast %212 : vector<1x32xf32> to vector<8x32xf32>
    %234 = arith.addf %232, %233 : vector<8x32xf32>
    %235 = arith.truncf %234 : vector<8x32xf32> to vector<8x32xbf16>
    %c1_101 = arith.constant 1 : index
    %c0_102 = arith.constant 0 : index
    %c0_103 = arith.constant 0 : index
    %236 = vector.load %arg6[%c1_101, %c0_102, %c0_103] : memref<2x32x128xbf16, #tpu.memory_space<vmem>>, vector<1x32x128xbf16>
    %237 = vector.shape_cast %236 : vector<1x32x128xbf16> to vector<32x128xbf16>
    %cst_104 = arith.constant dense<0.000000e+00> : vector<8x128xf32>
    %238 = tpu.matmul %235, %237, %cst_104 {dimension_numbers = #tpu.dot_dimension_numbers<[1], [0], [0], [1], [0, 0, 1, 1], [], []>} : vector<8x32xbf16>, vector<32x128xbf16>, vector<8x128xf32> -> vector<8x128xf32>
    %c1_105 = arith.constant 1 : index
    %c0_106 = arith.constant 0 : index
    %c0_107 = arith.constant 0 : index
    %239 = vector.load %arg7[%c1_105, %c0_106, %c0_107] : memref<2x1x128xf32, #tpu.memory_space<vmem>>, vector<1x1x128xf32>
    %240 = vector.shape_cast %239 : vector<1x1x128xf32> to vector<1x128xf32>
    %241 = vector.broadcast %240 : vector<1x128xf32> to vector<8x128xf32>
    %242 = arith.addf %238, %241 : vector<8x128xf32>
    %cst_108 = arith.constant 5.000000e-01 : f32
    %243 = vector.broadcast %cst_108 : f32 to vector<8x128xf32>
    %244 = arith.mulf %243, %242 : vector<8x128xf32>
    %cst_109 = arith.constant 0.707106769 : f32
    %245 = vector.broadcast %cst_109 : f32 to vector<8x128xf32>
    %246 = arith.mulf %242, %245 : vector<8x128xf32>
    %247 = math.erf %246 : vector<8x128xf32>
    %cst_110 = arith.constant 1.000000e+00 : f32
    %248 = vector.broadcast %cst_110 : f32 to vector<8x128xf32>
    %249 = arith.addf %248, %247 : vector<8x128xf32>
    %250 = arith.mulf %244, %249 : vector<8x128xf32>
    %251 = arith.truncf %250 : vector<8x128xf32> to vector<8x128xbf16>
    %c1_111 = arith.constant 1 : index
    %c0_112 = arith.constant 0 : index
    %c0_113 = arith.constant 0 : index
    %252 = vector.load %arg8[%c1_111, %c0_112, %c0_113] : memref<2x128x32xbf16, #tpu.memory_space<vmem>>, vector<1x128x32xbf16>
    %253 = vector.shape_cast %252 : vector<1x128x32xbf16> to vector<128x32xbf16>
    %cst_114 = arith.constant dense<0.000000e+00> : vector<8x32xf32>
    %254 = tpu.matmul %251, %253, %cst_114 {dimension_numbers = #tpu.dot_dimension_numbers<[1], [0], [0], [1], [0, 0, 1, 1], [], []>} : vector<8x128xbf16>, vector<128x32xbf16>, vector<8x32xf32> -> vector<8x32xf32>
    %c1_115 = arith.constant 1 : index
    %c0_116 = arith.constant 0 : index
    %c0_117 = arith.constant 0 : index
    %255 = vector.load %arg9[%c1_115, %c0_116, %c0_117] : memref<2x1x32xf32, #tpu.memory_space<vmem>>, vector<1x1x32xf32>
    %256 = vector.shape_cast %255 : vector<1x1x32xf32> to vector<1x32xf32>
    %257 = vector.broadcast %256 : vector<1x32xf32> to vector<8x32xf32>
    %258 = arith.addf %254, %257 : vector<8x32xf32>
    %259 = arith.addf %208, %258 : vector<8x32xf32>
    %c0_118 = arith.constant 0 : index
    %c0_119 = arith.constant 0 : index
    %260 = vector.load %arg14[%c0_118, %c0_119] : memref<1x32xf32, #tpu.memory_space<vmem>>, vector<1x32xf32>
    %c0_120 = arith.constant 0 : index
    %c0_121 = arith.constant 0 : index
    %261 = vector.load %arg15[%c0_120, %c0_121] : memref<1x32xf32, #tpu.memory_space<vmem>>, vector<1x32xf32>
    %cst_122 = arith.constant dense<0.000000e+00> : vector<8xf32>
    %262 = vector.multi_reduction <add>, %259, %cst_122 [1] : vector<8x32xf32> to vector<8xf32>
    %263 = vector.shape_cast %262 : vector<8xf32> to vector<8x1xf32>
    %cst_123 = arith.constant 3.200000e+01 : f32
    %264 = vector.broadcast %cst_123 : f32 to vector<8x1xf32>
    %265 = arith.divf %263, %264 : vector<8x1xf32>
    %266 = vector.broadcast %265 : vector<8x1xf32> to vector<8x32xf32>
    %267 = arith.subf %259, %266 : vector<8x32xf32>
    %268 = arith.mulf %267, %267 : vector<8x32xf32>
    %cst_124 = arith.constant dense<0.000000e+00> : vector<8xf32>
    %269 = vector.multi_reduction <add>, %268, %cst_124 [1] : vector<8x32xf32> to vector<8xf32>
    %270 = vector.shape_cast %269 : vector<8xf32> to vector<8x1xf32>
    %cst_125 = arith.constant 3.200000e+01 : f32
    %271 = vector.broadcast %cst_125 : f32 to vector<8x1xf32>
    %272 = arith.divf %270, %271 : vector<8x1xf32>
    %273 = vector.broadcast %265 : vector<8x1xf32> to vector<8x32xf32>
    %274 = arith.subf %259, %273 : vector<8x32xf32>
    %cst_126 = arith.constant 9.99999974E-6 : f32
    %275 = vector.broadcast %cst_126 : f32 to vector<8x1xf32>
    %276 = arith.addf %272, %275 : vector<8x1xf32>
    %277 = math.rsqrt %276 : vector<8x1xf32>
    %278 = vector.broadcast %277 : vector<8x1xf32> to vector<8x32xf32>
    %279 = arith.mulf %274, %278 : vector<8x32xf32>
    %280 = vector.broadcast %260 : vector<1x32xf32> to vector<8x32xf32>
    %281 = arith.mulf %279, %280 : vector<8x32xf32>
    %282 = vector.broadcast %261 : vector<1x32xf32> to vector<8x32xf32>
    %283 = arith.addf %281, %282 : vector<8x32xf32>
    %284 = arith.truncf %283 : vector<8x32xf32> to vector<8x32xbf16>
    %c0_127 = arith.constant 0 : index
    %c0_128 = arith.constant 0 : index
    %285 = vector.load %arg16[%c0_127, %c0_128] : memref<32x128xbf16, #tpu.memory_space<vmem>>, vector<32x128xbf16>
    %cst_129 = arith.constant dense<0.000000e+00> : vector<8x128xf32>
    %286 = tpu.matmul %284, %285, %cst_129 {dimension_numbers = #tpu.dot_dimension_numbers<[1], [0], [0], [1], [0, 0, 1, 1], [], []>} : vector<8x32xbf16>, vector<32x128xbf16>, vector<8x128xf32> -> vector<8x128xf32>
    %c0_130 = arith.constant 0 : index
    %c0_131 = arith.constant 0 : index
    %287 = vector.load %arg17[%c0_130, %c0_131] : memref<1x128xf32, #tpu.memory_space<vmem>>, vector<1x128xf32>
    %288 = vector.broadcast %287 : vector<1x128xf32> to vector<8x128xf32>
    %289 = arith.addf %286, %288 : vector<8x128xf32>
    %290 = vector.shape_cast %289 : vector<8x128xf32> to vector<1x8x128xf32>
    %c0_132 = arith.constant 0 : index
    %c0_133 = arith.constant 0 : index
    %c0_134 = arith.constant 0 : index
    %291 = vector.load %arg18[%c0_132, %c0_133, %c0_134] : memref<1x8x128xf32, #tpu.memory_space<vmem>>, vector<1x8x128xf32>
    tpu.vector_store %arg18[%c0_132, %c0_133, %c0_134], %290 {strides = array<i32>} : memref<1x8x128xf32, #tpu.memory_space<vmem>>, vector<1x8x128xf32>,
    return
  }
  func.func @transform_0(%arg0: i32) -> (i32, i32, i32) {
    %c0_i32 = arith.constant 0 : i32
    %c0_i32_0 = arith.constant 0 : i32
    %c0_i32_1 = arith.constant 0 : i32
    return %arg0, %c0_i32, %c0_i32_0 : i32, i32, i32
  }
  func.func @transform_1(%arg0: i32) -> (i32, i32, i32) {
    %c0_i32 = arith.constant 0 : i32
    %c0_i32_0 = arith.constant 0 : i32
    %c0_i32_1 = arith.constant 0 : i32
    %c0_i32_2 = arith.constant 0 : i32
    return %c0_i32, %c0_i32_0, %c0_i32_1 : i32, i32, i32
  }
  func.func @transform_2(%arg0: i32) -> (i32, i32, i32) {
    %c0_i32 = arith.constant 0 : i32
    %c0_i32_0 = arith.constant 0 : i32
    %c0_i32_1 = arith.constant 0 : i32
    %c0_i32_2 = arith.constant 0 : i32
    return %c0_i32, %c0_i32_0, %c0_i32_1 : i32, i32, i32
  }
  func.func @transform_3(%arg0: i32) -> (i32, i32, i32) {
    %c0_i32 = arith.constant 0 : i32
    %c0_i32_0 = arith.constant 0 : i32
    %c0_i32_1 = arith.constant 0 : i32
    %c0_i32_2 = arith.constant 0 : i32
    return %c0_i32, %c0_i32_0, %c0_i32_1 : i32, i32, i32
  }
  func.func @transform_4(%arg0: i32) -> (i32, i32, i32) {
    %c0_i32 = arith.constant 0 : i32
    %c0_i32_0 = arith.constant 0 : i32
    %c0_i32_1 = arith.constant 0 : i32
    %c0_i32_2 = arith.constant 0 : i32
    return %c0_i32, %c0_i32_0, %c0_i32_1 : i32, i32, i32
  }
  func.func @transform_5(%arg0: i32) -> (i32, i32, i32) {
    %c0_i32 = arith.constant 0 : i32
    %c0_i32_0 = arith.constant 0 : i32
    %c0_i32_1 = arith.constant 0 : i32
    %c0_i32_2 = arith.constant 0 : i32
    return %c0_i32, %c0_i32_0, %c0_i32_1 : i32, i32, i32
  }
  func.func @transform_6(%arg0: i32) -> (i32, i32, i32) {
    %c0_i32 = arith.constant 0 : i32
    %c0_i32_0 = arith.constant 0 : i32
    %c0_i32_1 = arith.constant 0 : i32
    %c0_i32_2 = arith.constant 0 : i32
    return %c0_i32, %c0_i32_0, %c0_i32_1 : i32, i32, i32
  }
  func.func @transform_7(%arg0: i32) -> (i32, i32, i32) {
    %c0_i32 = arith.constant 0 : i32
    %c0_i32_0 = arith.constant 0 : i32
    %c0_i32_1 = arith.constant 0 : i32
    %c0_i32_2 = arith.constant 0 : i32
    return %c0_i32, %c0_i32_0, %c0_i32_1 : i32, i32, i32
  }
  func.func @transform_8(%arg0: i32) -> (i32, i32, i32) {
    %c0_i32 = arith.constant 0 : i32
    %c0_i32_0 = arith.constant 0 : i32
    %c0_i32_1 = arith.constant 0 : i32
    %c0_i32_2 = arith.constant 0 : i32
    return %c0_i32, %c0_i32_0, %c0_i32_1 : i32, i32, i32
  }
  func.func @transform_9(%arg0: i32) -> (i32, i32, i32) {
    %c0_i32 = arith.constant 0 : i32
    %c0_i32_0 = arith.constant 0 : i32
    %c0_i32_1 = arith.constant 0 : i32
    %c0_i32_2 = arith.constant 0 : i32
    return %c0_i32, %c0_i32_0, %c0_i32_1 : i32, i32, i32
  }
  func.func @transform_10(%arg0: i32) -> (i32, i32, i32) {
    %c0_i32 = arith.constant 0 : i32
    %c0_i32_0 = arith.constant 0 : i32
    %c0_i32_1 = arith.constant 0 : i32
    %c0_i32_2 = arith.constant 0 : i32
    return %c0_i32, %c0_i32_0, %c0_i32_1 : i32, i32, i32
  }
  func.func @transform_11(%arg0: i32) -> (i32, i32, i32) {
    %c0_i32 = arith.constant 0 : i32
    %c0_i32_0 = arith.constant 0 : i32
    %c0_i32_1 = arith.constant 0 : i32
    %c0_i32_2 = arith.constant 0 : i32
    return %c0_i32, %c0_i32_0, %c0_i32_1 : i32, i32, i32
  }
  func.func @transform_12(%arg0: i32) -> (i32, i32, i32) {
    %c0_i32 = arith.constant 0 : i32
    %c0_i32_0 = arith.constant 0 : i32
    %c0_i32_1 = arith.constant 0 : i32
    %c0_i32_2 = arith.constant 0 : i32
    return %c0_i32, %c0_i32_0, %c0_i32_1 : i32, i32, i32
  }
  func.func @transform_13(%arg0: i32) -> (i32, i32) {
    %c0_i32 = arith.constant 0 : i32
    %c0_i32_0 = arith.constant 0 : i32
    %c0_i32_1 = arith.constant 0 : i32
    return %c0_i32, %c0_i32_0 : i32, i32
  }
  func.func @transform_14(%arg0: i32) -> (i32, i32) {
    %c0_i32 = arith.constant 0 : i32
    %c0_i32_0 = arith.constant 0 : i32
    %c0_i32_1 = arith.constant 0 : i32
    return %c0_i32, %c0_i32_0 : i32, i32
  }
  func.func @transform_15(%arg0: i32) -> (i32, i32) {
    %c0_i32 = arith.constant 0 : i32
    %c0_i32_0 = arith.constant 0 : i32
    %c0_i32_1 = arith.constant 0 : i32
    return %c0_i32, %c0_i32_0 : i32, i32
  }
  func.func @transform_16(%arg0: i32) -> (i32, i32) {
    %c0_i32 = arith.constant 0 : i32
    %c0_i32_0 = arith.constant 0 : i32
    %c0_i32_1 = arith.constant 0 : i32
    return %c0_i32, %c0_i32_0 : i32, i32
  }
  func.func @transform_17(%arg0: i32) -> (i32, i32, i32) {
    %c0_i32 = arith.constant 0 : i32
    %c0_i32_0 = arith.constant 0 : i32
    %c0_i32_1 = arith.constant 0 : i32
    return %arg0, %c0_i32, %c0_i32_0 : i32, i32, i32
  }
}

</mosaic_0001>

<llo_original>
// kernel: char_transformer_forward.1
$region0: #{char_transformer_forward.1}
  #allocation0 [shape = 'u32[]', space=smem, size = 0x4, offset = 0x4, fixed_abs, tag = 'smem constant byte address 0x4 - core index']
  #allocation1 [shape = 'u32[144,128]{1,0:T(1,128)}', space=vmem, size = 0x12000, scoped, tag = 'internal scratch']
  %s0 = inlined_call_operand.vmem [shape: f32[2,8,32], index: 0, kind: input, shape index: {}]
  %s1 = inlined_call_operand.vmem [shape: bf16[2,32,96], index: 1, kind: input, shape index: {}]
  %s2 = inlined_call_operand.vmem [shape: f32[2,1,96], index: 2, kind: input, shape index: {}]
  %s3 = inlined_call_operand.vmem [shape: bf16[2,32,32], index: 3, kind: input, shape index: {}]
  %s4 = inlined_call_operand.vmem [shape: f32[2,1,32], index: 4, kind: input, shape index: {}]
  %s5 = inlined_call_operand.vmem [shape: bf16[2,32,128], index: 5, kind: input, shape index: {}]
  %s6 = inlined_call_operand.vmem [shape: f32[2,1,128], index: 6, kind: input, shape index: {}]
  %s7 = inlined_call_operand.vmem [shape: bf16[2,128,32], index: 7, kind: input, shape index: {}]
  %s8 = inlined_call_operand.vmem [shape: f32[2,1,32], index: 8, kind: input, shape index: {}]
  %s9 = inlined_call_operand.vmem [shape: f32[2,1,32], index: 9, kind: input, shape index: {}]
  %s10 = inlined_call_operand.vmem [shape: f32[2,1,32], index: 10, kind: input, shape index: {}]
  %s11 = inlined_call_operand.vmem [shape: f32[2,1,32], index: 11, kind: input, shape index: {}]
  %s12 = inlined_call_operand.vmem [shape: f32[2,1,32], index: 12, kind: input, shape index: {}]
  %s13 = inlined_call_operand.vmem [shape: f32[1,32], index: 13, kind: input, shape index: {}]
  %s14 = inlined_call_operand.vmem [shape: f32[1,32], index: 14, kind: input, shape index: {}]
  %s15 = inlined_call_operand.vmem [shape: bf16[32,128], index: 15, kind: input, shape index: {}]
  %s16 = inlined_call_operand.vmem [shape: f32[1,128], index: 16, kind: input, shape index: {}]
  %s17 = inlined_call_operand.hbm [shape: f32[2,8,128], index: 17, kind: output, shape index: {}]
  %s18 = sld [smem:[#allocation0]]
  $region101: #{char_transformer_forward.1} parent=0
    _
  %s20 = ssub.s32 1, %s18
  %s21 = scalar_select 0, %s20, %s18
  $region1: #{char_transformer_forward.1} parent=0
    #allocation2 [shape = 'u8[8192]{0}', space=vmem, size = 0x2000, scoped, tag = 'output window, operand 0']
    #allocation3 [shape = 's32[2]{0}', space=sflag, size = 0x8, scoped, tag = 'scoped memory for char_transformer_forward.1']
    %22 = vsyncpa [#allocation3], 0
    %s23 = scalar_lea.sflag [#allocation3], 1
    %24 = vsyncpa %s23, 0
    loop: start=0, step=1, limit=4
    $region2: #{char_transformer_forward.1} parent=1 // loop_pre_header
      _
    $region3: #{char_transformer_forward.1} parent=1 // loop_header
      %s26 = sphi 0, %s30
      %p27 = scmp.ge.s32.totalorder %s26, 4
      %s36 = sphi 0, %s38
      %s39 = sphi 0, %s36
      %s40 = sphi 0, %s39
      %s56 = sphi 0, %s40
      %s60 = sphi 0, %s60
      %s62 = sphi 0, %s60
      %s63 = sphi 0, %s62
      %s77 = sphi 0, %s63
      %s81 = sphi 0, %s81
      %s83 = sphi 0, %s81
      %s84 = sphi 0, %s83
      %s98 = sphi 0, %s84
      %s102 = sphi 0, %s102
      %s104 = sphi 0, %s102
      %s105 = sphi 0, %s104
      %s119 = sphi 0, %s105
      %s123 = sphi 0, %s123
      %s125 = sphi 0, %s123
      %s126 = sphi 0, %s125
      %s140 = sphi 0, %s126
      %s144 = sphi 0, %s144
      %s146 = sphi 0, %s144
      %s147 = sphi 0, %s146
      %s161 = sphi 0, %s147
      %s165 = sphi 0, %s165
      %s167 = sphi 0, %s165
      %s168 = sphi 0, %s167
      %s182 = sphi 0, %s168
      %s186 = sphi 0, %s186
      %s188 = sphi 0, %s186
      %s189 = sphi 0, %s188
      %s203 = sphi 0, %s189
      %s207 = sphi 0, %s207
      %s209 = sphi 0, %s207
      %s210 = sphi 0, %s209
      %s224 = sphi 0, %s210
      %s228 = sphi 0, %s228
      %s230 = sphi 0, %s228
      %s231 = sphi 0, %s230
      %s245 = sphi 0, %s231
      %s249 = sphi 0, %s249
      %s251 = sphi 0, %s249
      %s252 = sphi 0, %s251
      %s266 = sphi 0, %s252
      %s270 = sphi 0, %s270
      %s272 = sphi 0, %s270
      %s273 = sphi 0, %s272
      %s287 = sphi 0, %s273
      %s291 = sphi 0, %s291
      %s293 = sphi 0, %s291
      %s294 = sphi 0, %s293
      %s308 = sphi 0, %s294
      %s312 = sphi 0, %s312
      %s314 = sphi 0, %s312
      %s315 = sphi 0, %s314
      %s329 = sphi 0, %s315
      %s333 = sphi 0, %s333
      %s335 = sphi 0, %s333
      %s336 = sphi 0, %s335
      %s350 = sphi 0, %s336
      %s354 = sphi 0, %s354
      %s356 = sphi 0, %s354
      %s357 = sphi 0, %s356
      %s371 = sphi 0, %s357
      %s375 = sphi 0, %s375
      %s377 = sphi 0, %s375
      %s378 = sphi 0, %s377
      %s392 = sphi 0, %s378
      %s398 = sphi 0, %s400
      %s401 = sphi 0, %s398
      %s402 = sphi 0, %s401
      %s418 = sphi 0, %s402
    $region4: #{char_transformer_forward.1} parent=1 // loop_header_branch
      %29 = sbr.rel (%p27) target = $region8
    $region5: #{char_transformer_forward.1} parent=1 // loop_body
      %s31 = ssub.s32 %s26, 1
      %s32 = ssub.s32 %s26, 2
      %s33 = sadd.s32 %s26, 1
      %s34 = ssub.s32 %s26, %s33
      %p35 = scmp.eq.s32.totalorder %s34, 0
      %s37 = sadd.s32 %s36, 1
      %s38 = scalar_select %p35, %s36, %s37
      %p41 = pneg %p35
      %p42 = scmp.eq.s32.totalorder %s26, 1
      %p43 = por %p41, %p42
      %p44 = scmp.ne.s32.totalorder %s36, %s39
      %p45 = scmp.eq.s32.totalorder %s26, 0
      %p46 = por %p44, %p45
      %p47 = scmp.ne.s32.totalorder %s36, %s39
      %p48 = scmp.eq.s32.totalorder %s31, 1
      %p49 = por %p47, %p48
      %p50 = scmp.ne.s32.totalorder %s39, %s40
      %p51 = scmp.eq.s32.totalorder %s31, 0
      %p52 = por %p50, %p51
      %p53 = scmp.ne.s32.totalorder %s39, %s40
      %p54 = scmp.eq.s32.totalorder %s32, 1
      %p55 = por %p53, %p54
      %p57 = scmp.ne.s32.totalorder %s40, %s56
      %p58 = scmp.eq.s32.totalorder %s32, 0
      %p59 = por %p57, %p58
      %s61 = sadd.s32 %s60, 1
      %p64 = scmp.eq.s32.totalorder %s26, 1
      %p65 = scmp.ne.s32.totalorder %s60, %s62
      %p66 = scmp.eq.s32.totalorder %s26, 0
      %p67 = por %p65, %p66
      %p68 = scmp.ne.s32.totalorder %s60, %s62
      %p69 = scmp.eq.s32.totalorder %s31, 1
      %p70 = por %p68, %p69
      %p71 = scmp.ne.s32.totalorder %s62, %s63
      %p72 = scmp.eq.s32.totalorder %s31, 0
      %p73 = por %p71, %p72
      %p74 = scmp.ne.s32.totalorder %s62, %s63
      %p75 = scmp.eq.s32.totalorder %s32, 1
      %p76 = por %p74, %p75
      %p78 = scmp.ne.s32.totalorder %s63, %s77
      %p79 = scmp.eq.s32.totalorder %s32, 0
      %p80 = por %p78, %p79
      %s82 = sadd.s32 %s81, 1
      %p85 = scmp.eq.s32.totalorder %s26, 1
      %p86 = scmp.ne.s32.totalorder %s81, %s83
      %p87 = scmp.eq.s32.totalorder %s26, 0
      %p88 = por %p86, %p87
      %p89 = scmp.ne.s32.totalorder %s81, %s83
      %p90 = scmp.eq.s32.totalorder %s31, 1
      %p91 = por %p89, %p90
      %p92 = scmp.ne.s32.totalorder %s83, %s84
      %p93 = scmp.eq.s32.totalorder %s31, 0
      %p94 = por %p92, %p93
      %p95 = scmp.ne.s32.totalorder %s83, %s84
      %p96 = scmp.eq.s32.totalorder %s32, 1
      %p97 = por %p95, %p96
      %p99 = scmp.ne.s32.totalorder %s84, %s98
      %p100 = scmp.eq.s32.totalorder %s32, 0
      %p101 = por %p99, %p100
      %s103 = sadd.s32 %s102, 1
      %p106 = scmp.eq.s32.totalorder %s26, 1
      %p107 = scmp.ne.s32.totalorder %s102, %s104
      %p108 = scmp.eq.s32.totalorder %s26, 0
      %p109 = por %p107, %p108
      %p110 = scmp.ne.s32.totalorder %s102, %s104
      %p111 = scmp.eq.s32.totalorder %s31, 1
      %p112 = por %p110, %p111
      %p113 = scmp.ne.s32.totalorder %s104, %s105
      %p114 = scmp.eq.s32.totalorder %s31, 0
      %p115 = por %p113, %p114
      %p116 = scmp.ne.s32.totalorder %s104, %s105
      %p117 = scmp.eq.s32.totalorder %s32, 1
      %p118 = por %p116, %p117
      %p120 = scmp.ne.s32.totalorder %s105, %s119
      %p121 = scmp.eq.s32.totalorder %s32, 0
      %p122 = por %p120, %p121
      %s124 = sadd.s32 %s123, 1
      %p127 = scmp.eq.s32.totalorder %s26, 1
      %p128 = scmp.ne.s32.totalorder %s123, %s125
      %p129 = scmp.eq.s32.totalorder %s26, 0
      %p130 = por %p128, %p129
      %p131 = scmp.ne.s32.totalorder %s123, %s125
      %p132 = scmp.eq.s32.totalorder %s31, 1
      %p133 = por %p131, %p132
      %p134 = scmp.ne.s32.totalorder %s125, %s126
      %p135 = scmp.eq.s32.totalorder %s31, 0
      %p136 = por %p134, %p135
      %p137 = scmp.ne.s32.totalorder %s125, %s126
      %p138 = scmp.eq.s32.totalorder %s32, 1
      %p139 = por %p137, %p138
      %p141 = scmp.ne.s32.totalorder %s126, %s140
      %p142 = scmp.eq.s32.totalorder %s32, 0
      %p143 = por %p141, %p142
      %s145 = sadd.s32 %s144, 1
      %p148 = scmp.eq.s32.totalorder %s26, 1
      %p149 = scmp.ne.s32.totalorder %s144, %s146
      %p150 = scmp.eq.s32.totalorder %s26, 0
      %p151 = por %p149, %p150
      %p152 = scmp.ne.s32.totalorder %s144, %s146
      %p153 = scmp.eq.s32.totalorder %s31, 1
      %p154 = por %p152, %p153
      %p155 = scmp.ne.s32.totalorder %s146, %s147
      %p156 = scmp.eq.s32.totalorder %s31, 0
      %p157 = por %p155, %p156
      %p158 = scmp.ne.s32.totalorder %s146, %s147
      %p159 = scmp.eq.s32.totalorder %s32, 1
      %p160 = por %p158, %p159
      %p162 = scmp.ne.s32.totalorder %s147, %s161
      %p163 = scmp.eq.s32.totalorder %s32, 0
      %p164 = por %p162, %p163
      %s166 = sadd.s32 %s165, 1
      %p169 = scmp.eq.s32.totalorder %s26, 1
      %p170 = scmp.ne.s32.totalorder %s165, %s167
      %p171 = scmp.eq.s32.totalorder %s26, 0
      %p172 = por %p170, %p171
      %p173 = scmp.ne.s32.totalorder %s165, %s167
      %p174 = scmp.eq.s32.totalorder %s31, 1
      %p175 = por %p173, %p174
      %p176 = scmp.ne.s32.totalorder %s167, %s168
      %p177 = scmp.eq.s32.totalorder %s31, 0
      %p178 = por %p176, %p177
      %p179 = scmp.ne.s32.totalorder %s167, %s168
      %p180 = scmp.eq.s32.totalorder %s32, 1
      %p181 = por %p179, %p180
      %p183 = scmp.ne.s32.totalorder %s168, %s182
      %p184 = scmp.eq.s32.totalorder %s32, 0
      %p185 = por %p183, %p184
      %s187 = sadd.s32 %s186, 1
      %p190 = scmp.eq.s32.totalorder %s26, 1
      %p191 = scmp.ne.s32.totalorder %s186, %s188
      %p192 = scmp.eq.s32.totalorder %s26, 0
      %p193 = por %p191, %p192
      %p194 = scmp.ne.s32.totalorder %s186, %s188
      %p195 = scmp.eq.s32.totalorder %s31, 1
      %p196 = por %p194, %p195
      %p197 = scmp.ne.s32.totalorder %s188, %s189
      %p198 = scmp.eq.s32.totalorder %s31, 0
      %p199 = por %p197, %p198
      %p200 = scmp.ne.s32.totalorder %s188, %s189
      %p201 = scmp.eq.s32.totalorder %s32, 1
      %p202 = por %p200, %p201
      %p204 = scmp.ne.s32.totalorder %s189, %s203
      %p205 = scmp.eq.s32.totalorder %s32, 0
      %p206 = por %p204, %p205
      %s208 = sadd.s32 %s207, 1
      %p211 = scmp.eq.s32.totalorder %s26, 1
      %p212 = scmp.ne.s32.totalorder %s207, %s209
      %p213 = scmp.eq.s32.totalorder %s26, 0
      %p214 = por %p212, %p213
      %p215 = scmp.ne.s32.totalorder %s207, %s209
      %p216 = scmp.eq.s32.totalorder %s31, 1
      %p217 = por %p215, %p216
      %p218 = scmp.ne.s32.totalorder %s209, %s210
      %p219 = scmp.eq.s32.totalorder %s31, 0
      %p220 = por %p218, %p219
      %p221 = scmp.ne.s32.totalorder %s209, %s210
      %p222 = scmp.eq.s32.totalorder %s32, 1
      %p223 = por %p221, %p222
      %p225 = scmp.ne.s32.totalorder %s210, %s224
      %p226 = scmp.eq.s32.totalorder %s32, 0
      %p227 = por %p225, %p226
      %s229 = sadd.s32 %s228, 1
      %p232 = scmp.eq.s32.totalorder %s26, 1
      %p233 = scmp.ne.s32.totalorder %s228, %s230
      %p234 = scmp.eq.s32.totalorder %s26, 0
      %p235 = por %p233, %p234
      %p236 = scmp.ne.s32.totalorder %s228, %s230
      %p237 = scmp.eq.s32.totalorder %s31, 1
      %p238 = por %p236, %p237
      %p239 = scmp.ne.s32.totalorder %s230, %s231
      %p240 = scmp.eq.s32.totalorder %s31, 0
      %p241 = por %p239, %p240
      %p242 = scmp.ne.s32.totalorder %s230, %s231
      %p243 = scmp.eq.s32.totalorder %s32, 1
      %p244 = por %p242, %p243
      %p246 = scmp.ne.s32.totalorder %s231, %s245
      %p247 = scmp.eq.s32.totalorder %s32, 0
      %p248 = por %p246, %p247
      %s250 = sadd.s32 %s249, 1
      %p253 = scmp.eq.s32.totalorder %s26, 1
      %p254 = scmp.ne.s32.totalorder %s249, %s251
      %p255 = scmp.eq.s32.totalorder %s26, 0
      %p256 = por %p254, %p255
      %p257 = scmp.ne.s32.totalorder %s249, %s251
      %p258 = scmp.eq.s32.totalorder %s31, 1
      %p259 = por %p257, %p258
      %p260 = scmp.ne.s32.totalorder %s251, %s252
      %p261 = scmp.eq.s32.totalorder %s31, 0
      %p262 = por %p260, %p261
      %p263 = scmp.ne.s32.totalorder %s251, %s252
      %p264 = scmp.eq.s32.totalorder %s32, 1
      %p265 = por %p263, %p264
      %p267 = scmp.ne.s32.totalorder %s252, %s266
      %p268 = scmp.eq.s32.totalorder %s32, 0
      %p269 = por %p267, %p268
      %s271 = sadd.s32 %s270, 1
      %p274 = scmp.eq.s32.totalorder %s26, 1
      %p275 = scmp.ne.s32.totalorder %s270, %s272
      %p276 = scmp.eq.s32.totalorder %s26, 0
      %p277 = por %p275, %p276
      %p278 = scmp.ne.s32.totalorder %s270, %s272
      %p279 = scmp.eq.s32.totalorder %s31, 1
      %p280 = por %p278, %p279
      %p281 = scmp.ne.s32.totalorder %s272, %s273
      %p282 = scmp.eq.s32.totalorder %s31, 0
      %p283 = por %p281, %p282
      %p284 = scmp.ne.s32.totalorder %s272, %s273
      %p285 = scmp.eq.s32.totalorder %s32, 1
      %p286 = por %p284, %p285
      %p288 = scmp.ne.s32.totalorder %s273, %s287
      %p289 = scmp.eq.s32.totalorder %s32, 0
      %p290 = por %p288, %p289
      %s292 = sadd.s32 %s291, 1
      %p295 = scmp.eq.s32.totalorder %s26, 1
      %p296 = scmp.ne.s32.totalorder %s291, %s293
      %p297 = scmp.eq.s32.totalorder %s26, 0
      %p298 = por %p296, %p297
      %p299 = scmp.ne.s32.totalorder %s291, %s293
      %p300 = scmp.eq.s32.totalorder %s31, 1
      %p301 = por %p299, %p300
      %p302 = scmp.ne.s32.totalorder %s293, %s294
      %p303 = scmp.eq.s32.totalorder %s31, 0
      %p304 = por %p302, %p303
      %p305 = scmp.ne.s32.totalorder %s293, %s294
      %p306 = scmp.eq.s32.totalorder %s32, 1
      %p307 = por %p305, %p306
      %p309 = scmp.ne.s32.totalorder %s294, %s308
      %p310 = scmp.eq.s32.totalorder %s32, 0
      %p311 = por %p309, %p310
      %s313 = sadd.s32 %s312, 1
      %p316 = scmp.eq.s32.totalorder %s26, 1
      %p317 = scmp.ne.s32.totalorder %s312, %s314
      %p318 = scmp.eq.s32.totalorder %s26, 0
      %p319 = por %p317, %p318
      %p320 = scmp.ne.s32.totalorder %s312, %s314
      %p321 = scmp.eq.s32.totalorder %s31, 1
      %p322 = por %p320, %p321
      %p323 = scmp.ne.s32.totalorder %s314, %s315
      %p324 = scmp.eq.s32.totalorder %s31, 0
      %p325 = por %p323, %p324
      %p326 = scmp.ne.s32.totalorder %s314, %s315
      %p327 = scmp.eq.s32.totalorder %s32, 1
      %p328 = por %p326, %p327
      %p330 = scmp.ne.s32.totalorder %s315, %s329
      %p331 = scmp.eq.s32.totalorder %s32, 0
      %p332 = por %p330, %p331
      %s334 = sadd.s32 %s333, 1
      %p337 = scmp.eq.s32.totalorder %s26, 1
      %p338 = scmp.ne.s32.totalorder %s333, %s335
      %p339 = scmp.eq.s32.totalorder %s26, 0
      %p340 = por %p338, %p339
      %p341 = scmp.ne.s32.totalorder %s333, %s335
      %p342 = scmp.eq.s32.totalorder %s31, 1
      %p343 = por %p341, %p342
      %p344 = scmp.ne.s32.totalorder %s335, %s336
      %p345 = scmp.eq.s32.totalorder %s31, 0
      %p346 = por %p344, %p345
      %p347 = scmp.ne.s32.totalorder %s335, %s336
      %p348 = scmp.eq.s32.totalorder %s32, 1
      %p349 = por %p347, %p348
      %p351 = scmp.ne.s32.totalorder %s336, %s350
      %p352 = scmp.eq.s32.totalorder %s32, 0
      %p353 = por %p351, %p352
      %s355 = sadd.s32 %s354, 1
      %p358 = scmp.eq.s32.totalorder %s26, 1
      %p359 = scmp.ne.s32.totalorder %s354, %s356
      %p360 = scmp.eq.s32.totalorder %s26, 0
      %p361 = por %p359, %p360
      %p362 = scmp.ne.s32.totalorder %s354, %s356
      %p363 = scmp.eq.s32.totalorder %s31, 1
      %p364 = por %p362, %p363
      %p365 = scmp.ne.s32.totalorder %s356, %s357
      %p366 = scmp.eq.s32.totalorder %s31, 0
      %p367 = por %p365, %p366
      %p368 = scmp.ne.s32.totalorder %s356, %s357
      %p369 = scmp.eq.s32.totalorder %s32, 1
      %p370 = por %p368, %p369
      %p372 = scmp.ne.s32.totalorder %s357, %s371
      %p373 = scmp.eq.s32.totalorder %s32, 0
      %p374 = por %p372, %p373
      %s376 = sadd.s32 %s375, 1
      %p379 = scmp.eq.s32.totalorder %s26, 1
      %p380 = scmp.ne.s32.totalorder %s375, %s377
      %p381 = scmp.eq.s32.totalorder %s26, 0
      %p382 = por %p380, %p381
      %p383 = scmp.ne.s32.totalorder %s375, %s377
      %p384 = scmp.eq.s32.totalorder %s31, 1
      %p385 = por %p383, %p384
      %p386 = scmp.ne.s32.totalorder %s377, %s378
      %p387 = scmp.eq.s32.totalorder %s31, 0
      %p388 = por %p386, %p387
      %p389 = scmp.ne.s32.totalorder %s377, %s378
      %p390 = scmp.eq.s32.totalorder %s32, 1
      %p391 = por %p389, %p390
      %p393 = scmp.ne.s32.totalorder %s378, %s392
      %p394 = scmp.eq.s32.totalorder %s32, 0
      %p395 = por %p393, %p394
      %s396 = ssub.s32 %s26, %s33
      %p397 = scmp.eq.s32.totalorder %s396, 0
      %s399 = sadd.s32 %s398, 1
      %s400 = scalar_select %p397, %s398, %s399
      %p403 = pneg %p397
      %p404 = scmp.eq.s32.totalorder %s26, 1
      %p405 = por %p403, %p404
      %p406 = scmp.ne.s32.totalorder %s398, %s401
      %p407 = scmp.eq.s32.totalorder %s26, 0
      %p408 = por %p406, %p407
      %p409 = scmp.ne.s32.totalorder %s398, %s401
      %p410 = scmp.eq.s32.totalorder %s31, 1
      %p411 = por %p409, %p410
      %p412 = scmp.ne.s32.totalorder %s401, %s402
      %p413 = scmp.eq.s32.totalorder %s31, 0
      %p414 = por %p412, %p413
      %p415 = scmp.ne.s32.totalorder %s401, %s402
      %p416 = scmp.eq.s32.totalorder %s32, 1
      %p417 = por %p415, %p416
      %p419 = scmp.ne.s32.totalorder %s402, %s418
      %p420 = scmp.eq.s32.totalorder %s32, 0
      %p421 = por %p419, %p420
      %p422 = scmp.le.s32.totalorder 1, %s26
      %p423 = scmp.lt.s32.totalorder %s26, 3
      %p424 = pnand %p422, %p423
      %p425 = pneg %p424
      // Predicated region
      $region9: #{char_transformer_forward.1} parent=5 // pred_check
        _
      $region10: #{char_transformer_forward.1} parent=5 // pred_check_branch
        %427 = sbr.rel (%p424) target = $region12
      $region11: #{char_transformer_forward.1} parent=5 // pred_region
        %s428 = ssub.s32 %s26, 1
        // Predicated region
        $region13: #{char_transformer_forward.1} parent=11 // pred_check
          %p429 = pneg %p73
        $region14: #{char_transformer_forward.1} parent=11 // pred_check_branch
          %431 = sbr.rel (%p429) target = $region16
        $region15: #{char_transformer_forward.1} parent=11 // pred_region
          _
        $region16: #{char_transformer_forward.1} parent=11 // pred_fallthru
          _
        // Predicated region
        $region17: #{char_transformer_forward.1} parent=11 // pred_check
          %p432 = pneg %p94
        $region18: #{char_transformer_forward.1} parent=11 // pred_check_branch
          %434 = sbr.rel (%p432) target = $region20
        $region19: #{char_transformer_forward.1} parent=11 // pred_region
          _
        $region20: #{char_transformer_forward.1} parent=11 // pred_fallthru
          _
        // Predicated region
        $region21: #{char_transformer_forward.1} parent=11 // pred_check
          %p435 = pneg %p115
        $region22: #{char_transformer_forward.1} parent=11 // pred_check_branch
          %437 = sbr.rel (%p435) target = $region24
        $region23: #{char_transformer_forward.1} parent=11 // pred_region
          _
        $region24: #{char_transformer_forward.1} parent=11 // pred_fallthru
          _
        // Predicated region
        $region25: #{char_transformer_forward.1} parent=11 // pred_check
          %p438 = pneg %p136
        $region26: #{char_transformer_forward.1} parent=11 // pred_check_branch
          %440 = sbr.rel (%p438) target = $region28
        $region27: #{char_transformer_forward.1} parent=11 // pred_region
          _
        $region28: #{char_transformer_forward.1} parent=11 // pred_fallthru
          _
        // Predicated region
        $region29: #{char_transformer_forward.1} parent=11 // pred_check
          %p441 = pneg %p157
        $region30: #{char_transformer_forward.1} parent=11 // pred_check_branch
          %443 = sbr.rel (%p441) target = $region32
        $region31: #{char_transformer_forward.1} parent=11 // pred_region
          _
        $region32: #{char_transformer_forward.1} parent=11 // pred_fallthru
          _
        // Predicated region
        $region33: #{char_transformer_forward.1} parent=11 // pred_check
          %p444 = pneg %p178
        $region34: #{char_transformer_forward.1} parent=11 // pred_check_branch
          %446 = sbr.rel (%p444) target = $region36
        $region35: #{char_transformer_forward.1} parent=11 // pred_region
          _
        $region36: #{char_transformer_forward.1} parent=11 // pred_fallthru
          _
        // Predicated region
        $region37: #{char_transformer_forward.1} parent=11 // pred_check
          %p447 = pneg %p199
        $region38: #{char_transformer_forward.1} parent=11 // pred_check_branch
          %449 = sbr.rel (%p447) target = $region40
        $region39: #{char_transformer_forward.1} parent=11 // pred_region
          _
        $region40: #{char_transformer_forward.1} parent=11 // pred_fallthru
          _
        // Predicated region
        $region41: #{char_transformer_forward.1} parent=11 // pred_check
          %p450 = pneg %p220
        $region42: #{char_transformer_forward.1} parent=11 // pred_check_branch
          %452 = sbr.rel (%p450) target = $region44
        $region43: #{char_transformer_forward.1} parent=11 // pred_region
          _
        $region44: #{char_transformer_forward.1} parent=11 // pred_fallthru
          _
        // Predicated region
        $region45: #{char_transformer_forward.1} parent=11 // pred_check
          %p453 = pneg %p241
        $region46: #{char_transformer_forward.1} parent=11 // pred_check_branch
          %455 = sbr.rel (%p453) target = $region48
        $region47: #{char_transformer_forward.1} parent=11 // pred_region
          _
        $region48: #{char_transformer_forward.1} parent=11 // pred_fallthru
          _
        // Predicated region
        $region49: #{char_transformer_forward.1} parent=11 // pred_check
          %p456 = pneg %p262
        $region50: #{char_transformer_forward.1} parent=11 // pred_check_branch
          %458 = sbr.rel (%p456) target = $region52
        $region51: #{char_transformer_forward.1} parent=11 // pred_region
          _
        $region52: #{char_transformer_forward.1} parent=11 // pred_fallthru
          _
        // Predicated region
        $region53: #{char_transformer_forward.1} parent=11 // pred_check
          %p459 = pneg %p283
        $region54: #{char_transformer_forward.1} parent=11 // pred_check_branch
          %461 = sbr.rel (%p459) target = $region56
        $region55: #{char_transformer_forward.1} parent=11 // pred_region
          _
        $region56: #{char_transformer_forward.1} parent=11 // pred_fallthru
          _
        // Predicated region
        $region57: #{char_transformer_forward.1} parent=11 // pred_check
          %p462 = pneg %p304
        $region58: #{char_transformer_forward.1} parent=11 // pred_check_branch
          %464 = sbr.rel (%p462) target = $region60
        $region59: #{char_transformer_forward.1} parent=11 // pred_region
          _
        $region60: #{char_transformer_forward.1} parent=11 // pred_fallthru
          _
        // Predicated region
        $region61: #{char_transformer_forward.1} parent=11 // pred_check
          %p465 = pneg %p325
        $region62: #{char_transformer_forward.1} parent=11 // pred_check_branch
          %467 = sbr.rel (%p465) target = $region64
        $region63: #{char_transformer_forward.1} parent=11 // pred_region
          _
        $region64: #{char_transformer_forward.1} parent=11 // pred_fallthru
          _
        // Predicated region
        $region65: #{char_transformer_forward.1} parent=11 // pred_check
          %p468 = pneg %p346
        $region66: #{char_transformer_forward.1} parent=11 // pred_check_branch
          %470 = sbr.rel (%p468) target = $region68
        $region67: #{char_transformer_forward.1} parent=11 // pred_region
          _
        $region68: #{char_transformer_forward.1} parent=11 // pred_fallthru
          _
        // Predicated region
        $region69: #{char_transformer_forward.1} parent=11 // pred_check
          %p471 = pneg %p367
        $region70: #{char_transformer_forward.1} parent=11 // pred_check_branch
          %473 = sbr.rel (%p471) target = $region72
        $region71: #{char_transformer_forward.1} parent=11 // pred_region
          _
        $region72: #{char_transformer_forward.1} parent=11 // pred_fallthru
          _
        // Predicated region
        $region73: #{char_transformer_forward.1} parent=11 // pred_check
          %p474 = pneg %p388
        $region74: #{char_transformer_forward.1} parent=11 // pred_check_branch
          %476 = sbr.rel (%p474) target = $region76
        $region75: #{char_transformer_forward.1} parent=11 // pred_region
          _
        $region76: #{char_transformer_forward.1} parent=11 // pred_fallthru
          _
      $region12: #{char_transformer_forward.1} parent=5 // pred_fallthru
        _
      %p477 = scmp.lt.s32.totalorder %s26, 2
      // Predicated region
      $region77: #{char_transformer_forward.1} parent=5 // pred_check
        %p478 = pneg %p477
      $region78: #{char_transformer_forward.1} parent=5 // pred_check_branch
        %480 = sbr.rel (%p478) target = $region80
      $region79: #{char_transformer_forward.1} parent=5 // pred_region
        // Predicated region
        $region81: #{char_transformer_forward.1} parent=79 // pred_check
          %p481 = pneg %p46
        $region82: #{char_transformer_forward.1} parent=79 // pred_check_branch
          %483 = sbr.rel (%p481) target = $region84
        $region83: #{char_transformer_forward.1} parent=79 // pred_region
          %p484 = scmp.lt.s32.totalorder %s26, 1
          %s485 = scalar_select %p484, %s26, 1
          %s486 = smul.addr %s485, 8
          %s487 = scalar_lea.vmem %s0, %s486
        $region84: #{char_transformer_forward.1} parent=79 // pred_fallthru
          _
      $region80: #{char_transformer_forward.1} parent=5 // pred_fallthru
        _
      %p488 = scmp.le.s32.totalorder 1, %s26
      %p489 = scmp.lt.s32.totalorder %s26, 3
      %p490 = pnand %p488, %p489
      %p491 = pneg %p490
      // Predicated region
      $region85: #{char_transformer_forward.1} parent=5 // pred_check
        _
      $region86: #{char_transformer_forward.1} parent=5 // pred_check_branch
        %493 = sbr.rel (%p490) target = $region88
      $region87: #{char_transformer_forward.1} parent=5 // pred_region
        %s494 = ssub.s32 %s26, 1
        %p495 = scmp.lt.s32.totalorder %s31, 1
        %s496 = scalar_select %p495, %s31, 1
        %s497 = smul.addr %s496, 8
        %s498 = scalar_lea.vmem %s0, %s497
        %p499 = pneg %p52
        %p500 = pneg %p49
        %p501 = pneg %p73
        %p502 = pneg %p70
        %p503 = pneg %p94
        %p504 = pneg %p91
        %p505 = pneg %p115
        %p506 = pneg %p112
        %p507 = pneg %p136
        %p508 = pneg %p133
        %p509 = pneg %p157
        %p510 = pneg %p154
        %p511 = pneg %p178
        %p512 = pneg %p175
        %p513 = pneg %p199
        %p514 = pneg %p196
        %p515 = pneg %p220
        %p516 = pneg %p217
        %p517 = pneg %p241
        %p518 = pneg %p238
        %p519 = pneg %p262
        %p520 = pneg %p259
        %p521 = pneg %p283
        %p522 = pneg %p280
        %p523 = pneg %p304
        %p524 = pneg %p301
        %p525 = pneg %p325
        %p526 = pneg %p322
        %p527 = pneg %p346
        %p528 = pneg %p343
        %p529 = pneg %p367
        %p530 = pneg %p364
        %p531 = pneg %p388
        %p532 = pneg %p385
        %p533 = pneg %p414
        %p534 = pneg %p411
        %s535 = sand.u32 %s401, 1
        %s536 = scalar_lea.sflag [#allocation3], %s535
        %s537 = sand.u32 %s401, 1
        %s538 = smul.addr %s537, 8
        %s539 = scalar_lea.vmem [#allocation2], %s538
        %p540 = scmp.lt.s32.totalorder %s31, 1
        %s541 = scalar_select %p540, %s31, 1
        %s542 = smul.addr %s541, 8
        %s543 = scalar_lea.vmem %s0, %s542
        %v545 = vld [vmem:[%s543] sm:$0xff]
        %v546 = vlaneseq
        %v547 = vshrl.u32 %v546, 7
        %v548 = vlaneseq
        %v549 = vand.u32 %v548, 127
        %vm550 = vcmp.le.s32.totalorder %v549, %v547
        %v551 = vld [vmem:[%s9] sm:$0x1]
        %v552 = vld [vmem:[%s10] sm:$0x1]
        %vm553 = vcmask 261120
        %v554 = vsel %vm553, %v545, 0.0
        %555 = vadd.xlane.f32.xlu0 %v554
        %v556 = vpop.xlane.xlu0 %555
        %v557 = vrcp.pop 32.0
        %v558 = vmul.f32 %v556, %v557
        %v559 = vsub.f32 %v545, %v558
        %v560 = vmul.f32 %v559, %v559
        %v561 = vsel %vm553, %v560, 0.0
        %562 = vadd.xlane.f32.xlu0 %v561
        %v563 = vpop.xlane.xlu0 %562
        %v564 = vmul.f32 %v563, %v557
        %v565 = vadd.f32 %v564, 1e-05
        %v566 = vrsqrt.pop %v565
        %v567 = vmul.f32 %v559, %v566
        %v569 = vlaneseq
        %v570 = vshrl.u32 %v569, 7
        %v571 = vsub.s32 0, %v570
        %v572 = vrot.slane %v551, %v571
        %v574 = vmul.f32 %v567, %v572
        %v576 = vlaneseq
        %v577 = vshrl.u32 %v576, 7
        %v578 = vsub.s32 0, %v577
        %v579 = vrot.slane %v552, %v578
        %v581 = vadd.f32 %v574, %v579
        %v582 = vpack.c.bf16 %v581, %v581
        %v583 = vld [vmem:[%s1] sm:$0xf]
        %v584 = vld [vmem:[%s1 + $0x4] sm:$0xf]
        %v585 = vld [vmem:[%s1 + $0x8] sm:$0xf]
        %v586 = vld [vmem:[%s1 + $0xc] sm:$0xf]
        %v587 = vld [vmem:[%s2] sm:$0x1]
        %v589 = vlaneseq
        %v590 = vshrl.u32 %v589, 7
        %v591 = vsub.s32 0, %v590
        %v592 = vrot.slane %v587, %v591
        %v598 = vunpack.c.l.b16 %v583
        %v599 = vunpack.c.l.b16 %v584
        %v600 = vunpack.c.l.b16 %v585
        %v601 = vunpack.c.l.b16 %v586
        %v602 = vpack.c.b16 %v599, %v598
        %v603 = vpack.c.b16 %v601, %v600
        %v607 = vsel %vm553, %v582, 0
        %609 = vmatprep.subr.bf16.mxu0 0
        %610 = vmatpush1.bf16.msra.mxu0 %v602
        %611 = vmatprep.subr.bf16.mxu0 0
        %612 = vmatpush1.bf16.msra.mxu0 %v603
        %613 = vmatprep.subr.bf16.mxu0 0
        %614 = vmatpush1.bf16.msra.mxu0 0
        %615 = vmatprep.subr.bf16.mxu0 0
        %616 = vmatpush1.bf16.msra.mxu0 0
        %617 = vmatprep.subr.bf16.mxu0 0
        %618 = vmatpush1.bf16.msra.mxu0 0
        %619 = vmatprep.subr.bf16.mxu0 0
        %620 = vmatpush1.bf16.msra.mxu0 0
        %621 = vmatprep.subr.bf16.mxu0 0
        %622 = vmatpush1.bf16.msra.mxu0 0
        %623 = vmatprep.subr.bf16.mxu0 0
        %624 = vmatpush1.bf16.msra.mxu0 0
        %625 = vmatprep.subr.bf16.mxu0 0
        %626 = vmatpush1.bf16.msra.mxu0 0
        %627 = vmatprep.subr.bf16.mxu0 0
        %628 = vmatpush1.bf16.msra.mxu0 0
        %629 = vmatprep.subr.bf16.mxu0 0
        %630 = vmatpush1.bf16.msra.mxu0 0
        %631 = vmatprep.subr.bf16.mxu0 0
        %632 = vmatpush1.bf16.msra.mxu0 0
        %633 = vmatprep.subr.bf16.mxu0 0
        %634 = vmatpush1.bf16.msra.mxu0 0
        %635 = vmatprep.subr.bf16.mxu0 0
        %636 = vmatpush1.bf16.msra.mxu0 0
        %637 = vmatprep.subr.bf16.mxu0 0
        %638 = vmatpush1.bf16.msra.mxu0 0
        %639 = vmatprep.subr.bf16.mxu0 0
        %640 = vmatpush1.bf16.msra.mxu0 0
        %641 = vmatprep.mubr.bf16.mxu0 0
        %642 = vmatmul.mubr.bf16.gmra.mrb[0].mxu0 %v607
        %v643 = vpop.f32.mrb[0].mxu0
        %v644 = vadd.f32 %v592, %v643
        %v645 = vpop.f32.mrb[0].mxu0
        %v646 = vpop.f32.mrb[0].mxu0
        %v647 = vpop.f32.mrb[0].mxu0
        %648 = vdwg.mxu0
        %v649 = vmul.f32 %v644, 0.35355338
        %651 = vrot.lane.b32.xlu0 %v649, 120
        %v652 = vpop.permute.xlu0 %651
        %654 = vrot.lane.b32.xlu0 %v649, 112
        %v655 = vpop.permute.xlu0 %654
        %657 = vrot.lane.b32.xlu0 %v649, 104
        %v658 = vpop.permute.xlu0 %657
        %v660 = vcombine.low %v649, %v655
        %v661 = vcombine.high %v649, %v655
        %v663 = vunpack.c.l.s4 1983009808
        %v664 = vunpack.c.0.s8 %v663
        %v665 = vlaneseq
        %v666 = vshrl.u32 %v665, 7
        %v667 = vsub.s32 %v664, %v666
        %v668 = vrot.slane %v660, %v667
        %v670 = vunpack.c.l.s4 1983009808
        %v671 = vunpack.c.0.s8 %v670
        %v672 = vlaneseq
        %v673 = vshrl.u32 %v672, 7
        %v674 = vsub.s32 %v671, %v673
        %v675 = vrot.slane %v661, %v674
        %v676 = vcombine.low %v652, %v658
        %v677 = vcombine.high %v652, %v658
        %v679 = vunpack.c.l.s4 1983009808
        %v680 = vunpack.c.0.s8 %v679
        %v681 = vlaneseq
        %v682 = vshrl.u32 %v681, 7
        %v683 = vsub.s32 %v680, %v682
        %v684 = vrot.slane %v676, %v683
        %v686 = vunpack.c.l.s4 1983009808
        %v687 = vunpack.c.0.s8 %v686
        %v688 = vlaneseq
        %v689 = vshrl.u32 %v688, 7
        %v690 = vsub.s32 %v687, %v689
        %v691 = vrot.slane %v677, %v690
        %v692 = vcombine.low %v668, %v684
        %v693 = vcombine.high %v668, %v684
        %v695 = vunpack.c.l.s4 1934713408
        %v696 = vunpack.c.0.s8 %v695
        %v697 = vlaneseq
        %v698 = vshrl.u32 %v697, 7
        %v699 = vsub.s32 %v696, %v698
        %v700 = vrot.slane %v692, %v699
        %v702 = vunpack.c.l.s4 1934713408
        %v703 = vunpack.c.0.s8 %v702
        %v704 = vlaneseq
        %v705 = vshrl.u32 %v704, 7
        %v706 = vsub.s32 %v703, %v705
        %v707 = vrot.slane %v693, %v706
        %v708 = vcombine.low %v675, %v691
        %v709 = vcombine.high %v675, %v691
        %v711 = vunpack.c.l.s4 1934713408
        %v712 = vunpack.c.0.s8 %v711
        %v713 = vlaneseq
        %v714 = vshrl.u32 %v713, 7
        %v715 = vsub.s32 %v712, %v714
        %v716 = vrot.slane %v708, %v715
        %v718 = vunpack.c.l.s4 1934713408
        %v719 = vunpack.c.0.s8 %v718
        %v720 = vlaneseq
        %v721 = vshrl.u32 %v720, 7
        %v722 = vsub.s32 %v719, %v721
        %v723 = vrot.slane %v709, %v722
        %v724 = vcombine.high %v700, 0.0
        %v725 = vcombine.high %v707, 0.0
        %v726 = vcombine.high %v716, 0.0
        %v727 = vcombine.high %v723, 0.0
        %v728 = vcombine.low %v700, %v707
        %v730 = vunpack.c.l.s4 1983009808
        %v731 = vunpack.c.0.s8 %v730
        %v732 = vlaneseq
        %v733 = vshrl.u32 %v732, 7
        %v734 = vsub.s32 %v731, %v733
        %v735 = vrot.slane %v728, %v734
        %v736 = vcombine.low %v724, %v725
        %v738 = vunpack.c.l.s4 1983009808
        %v739 = vunpack.c.0.s8 %v738
        %v740 = vlaneseq
        %v741 = vshrl.u32 %v740, 7
        %v742 = vsub.s32 %v739, %v741
        %v743 = vrot.slane %v736, %v742
        %v744 = vcombine.low %v716, %v723
        %v746 = vunpack.c.l.s4 1983009808
        %v747 = vunpack.c.0.s8 %v746
        %v748 = vlaneseq
        %v749 = vshrl.u32 %v748, 7
        %v750 = vsub.s32 %v747, %v749
        %v751 = vrot.slane %v744, %v750
        %v752 = vcombine.low %v726, %v727
        %v754 = vunpack.c.l.s4 1983009808
        %v755 = vunpack.c.0.s8 %v754
        %v756 = vlaneseq
        %v757 = vshrl.u32 %v756, 7
        %v758 = vsub.s32 %v755, %v757
        %v759 = vrot.slane %v752, %v758
        %v760 = vcombine.low %v735, %v743
        %v761 = vcombine.high %v735, %v743
        %v763 = vunpack.c.l.s4 1934713408
        %v764 = vunpack.c.0.s8 %v763
        %v765 = vlaneseq
        %v766 = vshrl.u32 %v765, 7
        %v767 = vsub.s32 %v764, %v766
        %v768 = vrot.slane %v760, %v767
        %v770 = vunpack.c.l.s4 1934713408
        %v771 = vunpack.c.0.s8 %v770
        %v772 = vlaneseq
        %v773 = vshrl.u32 %v772, 7
        %v774 = vsub.s32 %v771, %v773
        %v775 = vrot.slane %v761, %v774
        %v776 = vcombine.low %v751, %v759
        %v777 = vcombine.high %v751, %v759
        %v779 = vunpack.c.l.s4 1934713408
        %v780 = vunpack.c.0.s8 %v779
        %v781 = vlaneseq
        %v782 = vshrl.u32 %v781, 7
        %v783 = vsub.s32 %v780, %v782
        %v784 = vrot.slane %v776, %v783
        %v786 = vunpack.c.l.s4 1934713408
        %v787 = vunpack.c.0.s8 %v786
        %v788 = vlaneseq
        %v789 = vshrl.u32 %v788, 7
        %v790 = vsub.s32 %v787, %v789
        %v791 = vrot.slane %v777, %v790
        %v792 = vcombine.low %v768, %v784
        %v793 = vcombine.high %v768, %v784
        %v794 = vcombine.low %v775, %v791
        %v795 = vcombine.high %v775, %v791
        %797 = vrot.lane.b32.xlu0 %v644, 120
        %v798 = vpop.permute.xlu0 %797
        %799 = vrot.lane.b32.xlu0 %v644, 112
        %v800 = vpop.permute.xlu0 %799
        %801 = vrot.lane.b32.xlu0 %v644, 104
        %v802 = vpop.permute.xlu0 %801
        %803 = vrot.lane.b32.xlu0 %v644, 96
        %v804 = vpop.permute.xlu0 %803
        %805 = vrot.lane.b32.xlu0 %v798, 96
        %v806 = vpop.permute.xlu0 %805
        %807 = vrot.lane.b32.xlu0 %v800, 96
        %v808 = vpop.permute.xlu0 %807
        %809 = vrot.lane.b32.xlu0 %v802, 96
        %v810 = vpop.permute.xlu0 %809
        %v815 = vcombine.low %v804, %v808
        %v816 = vcombine.high %v804, %v808
        %v818 = vunpack.c.l.s4 1983009808
        %v819 = vunpack.c.0.s8 %v818
        %v820 = vlaneseq
        %v821 = vshrl.u32 %v820, 7
        %v822 = vsub.s32 %v819, %v821
        %v823 = vrot.slane %v815, %v822
        %v825 = vunpack.c.l.s4 1983009808
        %v826 = vunpack.c.0.s8 %v825
        %v827 = vlaneseq
        %v828 = vshrl.u32 %v827, 7
        %v829 = vsub.s32 %v826, %v828
        %v830 = vrot.slane %v816, %v829
        %v831 = vcombine.low %v806, %v810
        %v832 = vcombine.high %v806, %v810
        %v834 = vunpack.c.l.s4 1983009808
        %v835 = vunpack.c.0.s8 %v834
        %v836 = vlaneseq
        %v837 = vshrl.u32 %v836, 7
        %v838 = vsub.s32 %v835, %v837
        %v839 = vrot.slane %v831, %v838
        %v841 = vunpack.c.l.s4 1983009808
        %v842 = vunpack.c.0.s8 %v841
        %v843 = vlaneseq
        %v844 = vshrl.u32 %v843, 7
        %v845 = vsub.s32 %v842, %v844
        %v846 = vrot.slane %v832, %v845
        %v847 = vcombine.low %v823, %v839
        %v848 = vcombine.high %v823, %v839
        %v850 = vunpack.c.l.s4 1934713408
        %v851 = vunpack.c.0.s8 %v850
        %v852 = vlaneseq
        %v853 = vshrl.u32 %v852, 7
        %v854 = vsub.s32 %v851, %v853
        %v855 = vrot.slane %v847, %v854
        %v857 = vunpack.c.l.s4 1934713408
        %v858 = vunpack.c.0.s8 %v857
        %v859 = vlaneseq
        %v860 = vshrl.u32 %v859, 7
        %v861 = vsub.s32 %v858, %v860
        %v862 = vrot.slane %v848, %v861
        %v863 = vcombine.low %v830, %v846
        %v864 = vcombine.high %v830, %v846
        %v866 = vunpack.c.l.s4 1934713408
        %v867 = vunpack.c.0.s8 %v866
        %v868 = vlaneseq
        %v869 = vshrl.u32 %v868, 7
        %v870 = vsub.s32 %v867, %v869
        %v871 = vrot.slane %v863, %v870
        %v873 = vunpack.c.l.s4 1934713408
        %v874 = vunpack.c.0.s8 %v873
        %v875 = vlaneseq
        %v876 = vshrl.u32 %v875, 7
        %v877 = vsub.s32 %v874, %v876
        %v878 = vrot.slane %v864, %v877
        %v879 = vcombine.high %v855, 0.0
        %v880 = vcombine.high %v862, 0.0
        %v881 = vcombine.high %v871, 0.0
        %v882 = vcombine.high %v878, 0.0
        %v883 = vcombine.low %v855, %v862
        %v885 = vunpack.c.l.s4 1983009808
        %v886 = vunpack.c.0.s8 %v885
        %v887 = vlaneseq
        %v888 = vshrl.u32 %v887, 7
        %v889 = vsub.s32 %v886, %v888
        %v890 = vrot.slane %v883, %v889
        %v891 = vcombine.low %v879, %v880
        %v893 = vunpack.c.l.s4 1983009808
        %v894 = vunpack.c.0.s8 %v893
        %v895 = vlaneseq
        %v896 = vshrl.u32 %v895, 7
        %v897 = vsub.s32 %v894, %v896
        %v898 = vrot.slane %v891, %v897
        %v899 = vcombine.low %v871, %v878
        %v901 = vunpack.c.l.s4 1983009808
        %v902 = vunpack.c.0.s8 %v901
        %v903 = vlaneseq
        %v904 = vshrl.u32 %v903, 7
        %v905 = vsub.s32 %v902, %v904
        %v906 = vrot.slane %v899, %v905
        %v907 = vcombine.low %v881, %v882
        %v909 = vunpack.c.l.s4 1983009808
        %v910 = vunpack.c.0.s8 %v909
        %v911 = vlaneseq
        %v912 = vshrl.u32 %v911, 7
        %v913 = vsub.s32 %v910, %v912
        %v914 = vrot.slane %v907, %v913
        %v915 = vcombine.low %v890, %v898
        %v916 = vcombine.high %v890, %v898
        %v918 = vunpack.c.l.s4 1934713408
        %v919 = vunpack.c.0.s8 %v918
        %v920 = vlaneseq
        %v921 = vshrl.u32 %v920, 7
        %v922 = vsub.s32 %v919, %v921
        %v923 = vrot.slane %v915, %v922
        %v925 = vunpack.c.l.s4 1934713408
        %v926 = vunpack.c.0.s8 %v925
        %v927 = vlaneseq
        %v928 = vshrl.u32 %v927, 7
        %v929 = vsub.s32 %v926, %v928
        %v930 = vrot.slane %v916, %v929
        %v931 = vcombine.low %v906, %v914
        %v932 = vcombine.high %v906, %v914
        %v934 = vunpack.c.l.s4 1934713408
        %v935 = vunpack.c.0.s8 %v934
        %v936 = vlaneseq
        %v937 = vshrl.u32 %v936, 7
        %v938 = vsub.s32 %v935, %v937
        %v939 = vrot.slane %v931, %v938
        %v941 = vunpack.c.l.s4 1934713408
        %v942 = vunpack.c.0.s8 %v941
        %v943 = vlaneseq
        %v944 = vshrl.u32 %v943, 7
        %v945 = vsub.s32 %v942, %v944
        %v946 = vrot.slane %v932, %v945
        %v947 = vcombine.low %v923, %v939
        %v948 = vcombine.high %v923, %v939
        %v949 = vcombine.low %v930, %v946
        %v950 = vcombine.high %v930, %v946
        %951 = vrot.lane.b32.xlu0 %v644, 64
        %v952 = vpop.permute.xlu0 %951
        %953 = vrot.lane.b32.xlu0 %v798, 64
        %v954 = vpop.permute.xlu0 %953
        %955 = vrot.lane.b32.xlu0 %v800, 64
        %v956 = vpop.permute.xlu0 %955
        %957 = vrot.lane.b32.xlu0 %v802, 64
        %v958 = vpop.permute.xlu0 %957
        %v963 = vcombine.low %v952, %v956
        %v964 = vcombine.high %v952, %v956
        %v966 = vunpack.c.l.s4 1983009808
        %v967 = vunpack.c.0.s8 %v966
        %v968 = vlaneseq
        %v969 = vshrl.u32 %v968, 7
        %v970 = vsub.s32 %v967, %v969
        %v971 = vrot.slane %v963, %v970
        %v973 = vunpack.c.l.s4 1983009808
        %v974 = vunpack.c.0.s8 %v973
        %v975 = vlaneseq
        %v976 = vshrl.u32 %v975, 7
        %v977 = vsub.s32 %v974, %v976
        %v978 = vrot.slane %v964, %v977
        %v979 = vcombine.low %v954, %v958
        %v980 = vcombine.high %v954, %v958
        %v982 = vunpack.c.l.s4 1983009808
        %v983 = vunpack.c.0.s8 %v982
        %v984 = vlaneseq
        %v985 = vshrl.u32 %v984, 7
        %v986 = vsub.s32 %v983, %v985
        %v987 = vrot.slane %v979, %v986
        %v989 = vunpack.c.l.s4 1983009808
        %v990 = vunpack.c.0.s8 %v989
        %v991 = vlaneseq
        %v992 = vshrl.u32 %v991, 7
        %v993 = vsub.s32 %v990, %v992
        %v994 = vrot.slane %v980, %v993
        %v995 = vcombine.low %v971, %v987
        %v996 = vcombine.high %v971, %v987
        %v998 = vunpack.c.l.s4 1934713408
        %v999 = vunpack.c.0.s8 %v998
        %v1000 = vlaneseq
        %v1001 = vshrl.u32 %v1000, 7
        %v1002 = vsub.s32 %v999, %v1001
        %v1003 = vrot.slane %v995, %v1002
        %v1005 = vunpack.c.l.s4 1934713408
        %v1006 = vunpack.c.0.s8 %v1005
        %v1007 = vlaneseq
        %v1008 = vshrl.u32 %v1007, 7
        %v1009 = vsub.s32 %v1006, %v1008
        %v1010 = vrot.slane %v996, %v1009
        %v1011 = vcombine.low %v978, %v994
        %v1012 = vcombine.high %v978, %v994
        %v1014 = vunpack.c.l.s4 1934713408
        %v1015 = vunpack.c.0.s8 %v1014
        %v1016 = vlaneseq
        %v1017 = vshrl.u32 %v1016, 7
        %v1018 = vsub.s32 %v1015, %v1017
        %v1019 = vrot.slane %v1011, %v1018
        %v1021 = vunpack.c.l.s4 1934713408
        %v1022 = vunpack.c.0.s8 %v1021
        %v1023 = vlaneseq
        %v1024 = vshrl.u32 %v1023, 7
        %v1025 = vsub.s32 %v1022, %v1024
        %v1026 = vrot.slane %v1012, %v1025
        %v1027 = vcombine.high %v1003, 0.0
        %v1028 = vcombine.high %v1010, 0.0
        %v1029 = vcombine.high %v1019, 0.0
        %v1030 = vcombine.high %v1026, 0.0
        %v1031 = vcombine.low %v1003, %v1010
        %v1033 = vunpack.c.l.s4 1983009808
        %v1034 = vunpack.c.0.s8 %v1033
        %v1035 = vlaneseq
        %v1036 = vshrl.u32 %v1035, 7
        %v1037 = vsub.s32 %v1034, %v1036
        %v1038 = vrot.slane %v1031, %v1037
        %v1039 = vcombine.low %v1027, %v1028
        %v1041 = vunpack.c.l.s4 1983009808
        %v1042 = vunpack.c.0.s8 %v1041
        %v1043 = vlaneseq
        %v1044 = vshrl.u32 %v1043, 7
        %v1045 = vsub.s32 %v1042, %v1044
        %v1046 = vrot.slane %v1039, %v1045
        %v1047 = vcombine.low %v1019, %v1026
        %v1049 = vunpack.c.l.s4 1983009808
        %v1050 = vunpack.c.0.s8 %v1049
        %v1051 = vlaneseq
        %v1052 = vshrl.u32 %v1051, 7
        %v1053 = vsub.s32 %v1050, %v1052
        %v1054 = vrot.slane %v1047, %v1053
        %v1055 = vcombine.low %v1029, %v1030
        %v1057 = vunpack.c.l.s4 1983009808
        %v1058 = vunpack.c.0.s8 %v1057
        %v1059 = vlaneseq
        %v1060 = vshrl.u32 %v1059, 7
        %v1061 = vsub.s32 %v1058, %v1060
        %v1062 = vrot.slane %v1055, %v1061
        %v1063 = vcombine.low %v1038, %v1046
        %v1064 = vcombine.high %v1038, %v1046
        %v1066 = vunpack.c.l.s4 1934713408
        %v1067 = vunpack.c.0.s8 %v1066
        %v1068 = vlaneseq
        %v1069 = vshrl.u32 %v1068, 7
        %v1070 = vsub.s32 %v1067, %v1069
        %v1071 = vrot.slane %v1063, %v1070
        %v1073 = vunpack.c.l.s4 1934713408
        %v1074 = vunpack.c.0.s8 %v1073
        %v1075 = vlaneseq
        %v1076 = vshrl.u32 %v1075, 7
        %v1077 = vsub.s32 %v1074, %v1076
        %v1078 = vrot.slane %v1064, %v1077
        %v1079 = vcombine.low %v1054, %v1062
        %v1080 = vcombine.high %v1054, %v1062
        %v1082 = vunpack.c.l.s4 1934713408
        %v1083 = vunpack.c.0.s8 %v1082
        %v1084 = vlaneseq
        %v1085 = vshrl.u32 %v1084, 7
        %v1086 = vsub.s32 %v1083, %v1085
        %v1087 = vrot.slane %v1079, %v1086
        %v1089 = vunpack.c.l.s4 1934713408
        %v1090 = vunpack.c.0.s8 %v1089
        %v1091 = vlaneseq
        %v1092 = vshrl.u32 %v1091, 7
        %v1093 = vsub.s32 %v1090, %v1092
        %v1094 = vrot.slane %v1080, %v1093
        %v1095 = vcombine.low %v1071, %v1087
        %v1096 = vcombine.high %v1071, %v1087
        %v1097 = vcombine.low %v1078, %v1094
        %v1098 = vcombine.high %v1078, %v1094
        %v1099 = vpack.c.bf16 %v792, %v792
        %v1100 = vpack.c.bf16 %v793, %v793
        %v1101 = vpack.c.bf16 %v794, %v794
        %v1102 = vpack.c.bf16 %v795, %v795
        %v1103 = vpack.c.bf16 %v947, %v947
        %v1104 = vpack.c.bf16 %v948, %v948
        %v1105 = vpack.c.bf16 %v949, %v949
        %v1106 = vpack.c.bf16 %v950, %v950
        %vm1107 = vcmask 64512
        %v1109 = vsel %vm1107, %v1099, 0
        %v1112 = vsel %vm1107, %v1103, 0
        %1114 = vmatprep.subr.bf16.mxu0 0
        %1115 = vmatpush1.bf16.xpose.msra.mxu0 %v1112
        %1116 = vmatprep.subr.bf16.mxu0 0
        %1117 = vmatpush1.bf16.xpose.msra.mxu0 0
        %1118 = vmatprep.subr.bf16.mxu0 0
        %1119 = vmatpush1.bf16.xpose.msra.mxu0 0
        %1120 = vmatprep.subr.bf16.mxu0 0
        %1121 = vmatpush1.bf16.xpose.msra.mxu0 0
        %1122 = vmatprep.subr.bf16.mxu0 0
        %1123 = vmatpush1.bf16.xpose.msra.mxu0 0
        %1124 = vmatprep.subr.bf16.mxu0 0
        %1125 = vmatpush1.bf16.xpose.msra.mxu0 0
        %1126 = vmatprep.subr.bf16.mxu0 0
        %1127 = vmatpush1.bf16.xpose.msra.mxu0 0
        %1128 = vmatprep.subr.bf16.mxu0 0
        %1129 = vmatpush1.bf16.xpose.msra.mxu0 0
        %1130 = vmatprep.subr.bf16.mxu0 0
        %1131 = vmatpush1.bf16.xpose.msra.mxu0 0
        %1132 = vmatprep.subr.bf16.mxu0 0
        %1133 = vmatpush1.bf16.xpose.msra.mxu0 0
        %1134 = vmatprep.subr.bf16.mxu0 0
        %1135 = vmatpush1.bf16.xpose.msra.mxu0 0
        %1136 = vmatprep.subr.bf16.mxu0 0
        %1137 = vmatpush1.bf16.xpose.msra.mxu0 0
        %1138 = vmatprep.subr.bf16.mxu0 0
        %1139 = vmatpush1.bf16.xpose.msra.mxu0 0
        %1140 = vmatprep.subr.bf16.mxu0 0
        %1141 = vmatpush1.bf16.xpose.msra.mxu0 0
        %1142 = vmatprep.subr.bf16.mxu0 0
        %1143 = vmatpush1.bf16.xpose.msra.mxu0 0
        %1144 = vmatprep.subr.bf16.mxu0 0
        %1145 = vmatpush1.bf16.xpose.msra.mxu0 0
        %1146 = vmatprep.mubr.bf16.mxu0 0
        %1147 = vmatmul.mubr.bf16.gmra.mrb[0].mxu0 %v1109
        %v1148 = vpop.f32.mrb[0].mxu0
        %v1149 = vadd.f32 0.0, %v1148
        %v1150 = vpop.f32.mrb[0].mxu0
        %v1151 = vpop.f32.mrb[0].mxu0
        %v1152 = vpop.f32.mrb[0].mxu0
        %1153 = vdwg.mxu0
        %v1155 = vsel %vm1107, %v1100, 0
        %v1158 = vsel %vm1107, %v1104, 0
        %1160 = vmatprep.subr.bf16.mxu0 0
        %1161 = vmatpush1.bf16.xpose.msra.mxu0 %v1158
        %1162 = vmatprep.subr.bf16.mxu0 0
        %1163 = vmatpush1.bf16.xpose.msra.mxu0 0
        %1164 = vmatprep.subr.bf16.mxu0 0
        %1165 = vmatpush1.bf16.xpose.msra.mxu0 0
        %1166 = vmatprep.subr.bf16.mxu0 0
        %1167 = vmatpush1.bf16.xpose.msra.mxu0 0
        %1168 = vmatprep.subr.bf16.mxu0 0
        %1169 = vmatpush1.bf16.xpose.msra.mxu0 0
        %1170 = vmatprep.subr.bf16.mxu0 0
        %1171 = vmatpush1.bf16.xpose.msra.mxu0 0
        %1172 = vmatprep.subr.bf16.mxu0 0
        %1173 = vmatpush1.bf16.xpose.msra.mxu0 0
        %1174 = vmatprep.subr.bf16.mxu0 0
        %1175 = vmatpush1.bf16.xpose.msra.mxu0 0
        %1176 = vmatprep.subr.bf16.mxu0 0
        %1177 = vmatpush1.bf16.xpose.msra.mxu0 0
        %1178 = vmatprep.subr.bf16.mxu0 0
        %1179 = vmatpush1.bf16.xpose.msra.mxu0 0
        %1180 = vmatprep.subr.bf16.mxu0 0
        %1181 = vmatpush1.bf16.xpose.msra.mxu0 0
        %1182 = vmatprep.subr.bf16.mxu0 0
        %1183 = vmatpush1.bf16.xpose.msra.mxu0 0
        %1184 = vmatprep.subr.bf16.mxu0 0
        %1185 = vmatpush1.bf16.xpose.msra.mxu0 0
        %1186 = vmatprep.subr.bf16.mxu0 0
        %1187 = vmatpush1.bf16.xpose.msra.mxu0 0
        %1188 = vmatprep.subr.bf16.mxu0 0
        %1189 = vmatpush1.bf16.xpose.msra.mxu0 0
        %1190 = vmatprep.subr.bf16.mxu0 0
        %1191 = vmatpush1.bf16.xpose.msra.mxu0 0
        %1192 = vmatprep.mubr.bf16.mxu0 0
        %1193 = vmatmul.mubr.bf16.gmra.mrb[0].mxu0 %v1155
        %v1194 = vpop.f32.mrb[0].mxu0
        %v1195 = vadd.f32 0.0, %v1194
        %v1196 = vpop.f32.mrb[0].mxu0
        %v1197 = vpop.f32.mrb[0].mxu0
        %v1198 = vpop.f32.mrb[0].mxu0
        %1199 = vdwg.mxu0
        %v1201 = vsel %vm1107, %v1101, 0
        %v1204 = vsel %vm1107, %v1105, 0
        %1206 = vmatprep.subr.bf16.mxu0 0
        %1207 = vmatpush1.bf16.xpose.msra.mxu0 %v1204
        %1208 = vmatprep.subr.bf16.mxu0 0
        %1209 = vmatpush1.bf16.xpose.msra.mxu0 0
        %1210 = vmatprep.subr.bf16.mxu0 0
        %1211 = vmatpush1.bf16.xpose.msra.mxu0 0
        %1212 = vmatprep.subr.bf16.mxu0 0
        %1213 = vmatpush1.bf16.xpose.msra.mxu0 0
        %1214 = vmatprep.subr.bf16.mxu0 0
        %1215 = vmatpush1.bf16.xpose.msra.mxu0 0
        %1216 = vmatprep.subr.bf16.mxu0 0
        %1217 = vmatpush1.bf16.xpose.msra.mxu0 0
        %1218 = vmatprep.subr.bf16.mxu0 0
        %1219 = vmatpush1.bf16.xpose.msra.mxu0 0
        %1220 = vmatprep.subr.bf16.mxu0 0
        %1221 = vmatpush1.bf16.xpose.msra.mxu0 0
        %1222 = vmatprep.subr.bf16.mxu0 0
        %1223 = vmatpush1.bf16.xpose.msra.mxu0 0
        %1224 = vmatprep.subr.bf16.mxu0 0
        %1225 = vmatpush1.bf16.xpose.msra.mxu0 0
        %1226 = vmatprep.subr.bf16.mxu0 0
        %1227 = vmatpush1.bf16.xpose.msra.mxu0 0
        %1228 = vmatprep.subr.bf16.mxu0 0
        %1229 = vmatpush1.bf16.xpose.msra.mxu0 0
        %1230 = vmatprep.subr.bf16.mxu0 0
        %1231 = vmatpush1.bf16.xpose.msra.mxu0 0
        %1232 = vmatprep.subr.bf16.mxu0 0
        %1233 = vmatpush1.bf16.xpose.msra.mxu0 0
        %1234 = vmatprep.subr.bf16.mxu0 0
        %1235 = vmatpush1.bf16.xpose.msra.mxu0 0
        %1236 = vmatprep.subr.bf16.mxu0 0
        %1237 = vmatpush1.bf16.xpose.msra.mxu0 0
        %1238 = vmatprep.mubr.bf16.mxu0 0
        %1239 = vmatmul.mubr.bf16.gmra.mrb[0].mxu0 %v1201
        %v1240 = vpop.f32.mrb[0].mxu0
        %v1241 = vadd.f32 0.0, %v1240
        %v1242 = vpop.f32.mrb[0].mxu0
        %v1243 = vpop.f32.mrb[0].mxu0
        %v1244 = vpop.f32.mrb[0].mxu0
        %1245 = vdwg.mxu0
        %v1247 = vsel %vm1107, %v1102, 0
        %v1250 = vsel %vm1107, %v1106, 0
        %1252 = vmatprep.subr.bf16.mxu0 0
        %1253 = vmatpush1.bf16.xpose.msra.mxu0 %v1250
        %1254 = vmatprep.subr.bf16.mxu0 0
        %1255 = vmatpush1.bf16.xpose.msra.mxu0 0
        %1256 = vmatprep.subr.bf16.mxu0 0
        %1257 = vmatpush1.bf16.xpose.msra.mxu0 0
        %1258 = vmatprep.subr.bf16.mxu0 0
        %1259 = vmatpush1.bf16.xpose.msra.mxu0 0
        %1260 = vmatprep.subr.bf16.mxu0 0
        %1261 = vmatpush1.bf16.xpose.msra.mxu0 0
        %1262 = vmatprep.subr.bf16.mxu0 0
        %1263 = vmatpush1.bf16.xpose.msra.mxu0 0
        %1264 = vmatprep.subr.bf16.mxu0 0
        %1265 = vmatpush1.bf16.xpose.msra.mxu0 0
        %1266 = vmatprep.subr.bf16.mxu0 0
        %1267 = vmatpush1.bf16.xpose.msra.mxu0 0
        %1268 = vmatprep.subr.bf16.mxu0 0
        %1269 = vmatpush1.bf16.xpose.msra.mxu0 0
        %1270 = vmatprep.subr.bf16.mxu0 0
        %1271 = vmatpush1.bf16.xpose.msra.mxu0 0
        %1272 = vmatprep.subr.bf16.mxu0 0
        %1273 = vmatpush1.bf16.xpose.msra.mxu0 0
        %1274 = vmatprep.subr.bf16.mxu0 0
        %1275 = vmatpush1.bf16.xpose.msra.mxu0 0
        %1276 = vmatprep.subr.bf16.mxu0 0
        %1277 = vmatpush1.bf16.xpose.msra.mxu0 0
        %1278 = vmatprep.subr.bf16.mxu0 0
        %1279 = vmatpush1.bf16.xpose.msra.mxu0 0
        %1280 = vmatprep.subr.bf16.mxu0 0
        %1281 = vmatpush1.bf16.xpose.msra.mxu0 0
        %1282 = vmatprep.subr.bf16.mxu0 0
        %1283 = vmatpush1.bf16.xpose.msra.mxu0 0
        %1284 = vmatprep.mubr.bf16.mxu0 0
        %1285 = vmatmul.mubr.bf16.gmra.mrb[0].mxu0 %v1247
        %v1286 = vpop.f32.mrb[0].mxu0
        %v1287 = vadd.f32 0.0, %v1286
        %v1288 = vpop.f32.mrb[0].mxu0
        %v1289 = vpop.f32.mrb[0].mxu0
        %v1290 = vpop.f32.mrb[0].mxu0
        %1291 = vdwg.mxu0
        %v1292 = vsel %vm550, 1, 0
        %vm1293 = vcmp.eq.s32.totalorder %v1292, 1
        %v1294 = vsel %vm1293, %v1149, -1e+30
        %v1295 = vsel %vm1293, %v1195, -1e+30
        %v1296 = vsel %vm1293, %v1241, -1e+30
        %v1297 = vsel %vm1293, %v1287, -1e+30
        %v1298 = vsel %vm1107, %v1294, -inf
        %1299 = vmax.xlane.f32.xlu0 %v1298
        %v1300 = vpop.xlane.xlu0 %1299
        %v1301 = vsel %vm1107, %v1295, -inf
        %1302 = vmax.xlane.f32.xlu0 %v1301
        %v1303 = vpop.xlane.xlu0 %1302
        %v1304 = vsel %vm1107, %v1296, -inf
        %1305 = vmax.xlane.f32.xlu0 %v1304
        %v1306 = vpop.xlane.xlu0 %1305
        %v1307 = vsel %vm1107, %v1297, -inf
        %1308 = vmax.xlane.f32.xlu0 %v1307
        %v1309 = vpop.xlane.xlu0 %1308
        %v1310 = vsub.f32 %v1294, %v1300
        %v1311 = vsub.f32 %v1295, %v1303
        %v1312 = vsub.f32 %v1296, %v1306
        %v1313 = vsub.f32 %v1297, %v1309
        %v1314 = vmul.f32 %v1310, 1.442695
        %v1315 = vpow.pop %v1314
        %v1316 = vmul.f32 %v1311, 1.442695
        %v1317 = vpow.pop %v1316
        %v1318 = vmul.f32 %v1312, 1.442695
        %v1319 = vpow.pop %v1318
        %v1320 = vmul.f32 %v1313, 1.442695
        %v1321 = vpow.pop %v1320
        %v1322 = vsel %vm1107, %v1315, 0.0
        %1323 = vadd.xlane.f32.xlu0 %v1322
        %v1324 = vpop.xlane.xlu0 %1323
        %v1325 = vsel %vm1107, %v1317, 0.0
        %1326 = vadd.xlane.f32.xlu0 %v1325
        %v1327 = vpop.xlane.xlu0 %1326
        %v1328 = vsel %vm1107, %v1319, 0.0
        %1329 = vadd.xlane.f32.xlu0 %v1328
        %v1330 = vpop.xlane.xlu0 %1329
        %v1331 = vsel %vm1107, %v1321, 0.0
        %1332 = vadd.xlane.f32.xlu0 %v1331
        %v1333 = vpop.xlane.xlu0 %1332
        %v1334 = vrcp.pop %v1324
        %v1335 = vrcp.pop %v1327
        %v1336 = vrcp.pop %v1330
        %v1337 = vrcp.pop %v1333
        %v1338 = vmul.f32 %v1315, %v1334
        %v1339 = vmul.f32 %v1317, %v1335
        %v1340 = vmul.f32 %v1319, %v1336
        %v1341 = vmul.f32 %v1321, %v1337
        %v1342 = vpack.c.bf16 %v1338, %v1338
        %v1343 = vpack.c.bf16 %v1339, %v1339
        %v1344 = vpack.c.bf16 %v1340, %v1340
        %v1345 = vpack.c.bf16 %v1341, %v1341
        %v1346 = vpack.c.bf16 %v1095, %v1095
        %v1347 = vpack.c.bf16 %v1096, %v1096
        %v1348 = vpack.c.bf16 %v1097, %v1097
        %v1349 = vpack.c.bf16 %v1098, %v1098
        %v1351 = vsel %vm1107, %v1342, 0
        %vm1353 = vcmask 1043456
        %v1355 = vsel %vm1353, %v1346, 0
        %1357 = vmatprep.subr.bf16.mxu0 0
        %1358 = vmatpush1.bf16.msra.mxu0 %v1355
        %1359 = vmatprep.subr.bf16.mxu0 0
        %1360 = vmatpush1.bf16.msra.mxu0 0
        %1361 = vmatprep.subr.bf16.mxu0 0
        %1362 = vmatpush1.bf16.msra.mxu0 0
        %1363 = vmatprep.subr.bf16.mxu0 0
        %1364 = vmatpush1.bf16.msra.mxu0 0
        %1365 = vmatprep.subr.bf16.mxu0 0
        %1366 = vmatpush1.bf16.msra.mxu0 0
        %1367 = vmatprep.subr.bf16.mxu0 0
        %1368 = vmatpush1.bf16.msra.mxu0 0
        %1369 = vmatprep.subr.bf16.mxu0 0
        %1370 = vmatpush1.bf16.msra.mxu0 0
        %1371 = vmatprep.subr.bf16.mxu0 0
        %1372 = vmatpush1.bf16.msra.mxu0 0
        %1373 = vmatprep.subr.bf16.mxu0 0
        %1374 = vmatpush1.bf16.msra.mxu0 0
        %1375 = vmatprep.subr.bf16.mxu0 0
        %1376 = vmatpush1.bf16.msra.mxu0 0
        %1377 = vmatprep.subr.bf16.mxu0 0
        %1378 = vmatpush1.bf16.msra.mxu0 0
        %1379 = vmatprep.subr.bf16.mxu0 0
        %1380 = vmatpush1.bf16.msra.mxu0 0
        %1381 = vmatprep.subr.bf16.mxu0 0
        %1382 = vmatpush1.bf16.msra.mxu0 0
        %1383 = vmatprep.subr.bf16.mxu0 0
        %1384 = vmatpush1.bf16.msra.mxu0 0
        %1385 = vmatprep.subr.bf16.mxu0 0
        %1386 = vmatpush1.bf16.msra.mxu0 0
        %1387 = vmatprep.subr.bf16.mxu0 0
        %1388 = vmatpush1.bf16.msra.mxu0 0
        %1389 = vmatprep.mubr.bf16.mxu0 0
        %1390 = vmatmul.mubr.bf16.gmra.mrb[0].mxu0 %v1351
        %v1391 = vpop.f32.mrb[0].mxu0
        %v1392 = vadd.f32 0.0, %v1391
        %v1393 = vpop.f32.mrb[0].mxu0
        %v1394 = vpop.f32.mrb[0].mxu0
        %v1395 = vpop.f32.mrb[0].mxu0
        %1396 = vdwg.mxu0
        %v1398 = vsel %vm1107, %v1343, 0
        %v1401 = vsel %vm1353, %v1347, 0
        %1403 = vmatprep.subr.bf16.mxu0 0
        %1404 = vmatpush1.bf16.msra.mxu0 %v1401
        %1405 = vmatprep.subr.bf16.mxu0 0
        %1406 = vmatpush1.bf16.msra.mxu0 0
        %1407 = vmatprep.subr.bf16.mxu0 0
        %1408 = vmatpush1.bf16.msra.mxu0 0
        %1409 = vmatprep.subr.bf16.mxu0 0
        %1410 = vmatpush1.bf16.msra.mxu0 0
        %1411 = vmatprep.subr.bf16.mxu0 0
        %1412 = vmatpush1.bf16.msra.mxu0 0
        %1413 = vmatprep.subr.bf16.mxu0 0
        %1414 = vmatpush1.bf16.msra.mxu0 0
        %1415 = vmatprep.subr.bf16.mxu0 0
        %1416 = vmatpush1.bf16.msra.mxu0 0
        %1417 = vmatprep.subr.bf16.mxu0 0
        %1418 = vmatpush1.bf16.msra.mxu0 0
        %1419 = vmatprep.subr.bf16.mxu0 0
        %1420 = vmatpush1.bf16.msra.mxu0 0
        %1421 = vmatprep.subr.bf16.mxu0 0
        %1422 = vmatpush1.bf16.msra.mxu0 0
        %1423 = vmatprep.subr.bf16.mxu0 0
        %1424 = vmatpush1.bf16.msra.mxu0 0
        %1425 = vmatprep.subr.bf16.mxu0 0
        %1426 = vmatpush1.bf16.msra.mxu0 0
        %1427 = vmatprep.subr.bf16.mxu0 0
        %1428 = vmatpush1.bf16.msra.mxu0 0
        %1429 = vmatprep.subr.bf16.mxu0 0
        %1430 = vmatpush1.bf16.msra.mxu0 0
        %1431 = vmatprep.subr.bf16.mxu0 0
        %1432 = vmatpush1.bf16.msra.mxu0 0
        %1433 = vmatprep.subr.bf16.mxu0 0
        %1434 = vmatpush1.bf16.msra.mxu0 0
        %1435 = vmatprep.mubr.bf16.mxu0 0
        %1436 = vmatmul.mubr.bf16.gmra.mrb[0].mxu0 %v1398
        %v1437 = vpop.f32.mrb[0].mxu0
        %v1438 = vadd.f32 0.0, %v1437
        %v1439 = vpop.f32.mrb[0].mxu0
        %v1440 = vpop.f32.mrb[0].mxu0
        %v1441 = vpop.f32.mrb[0].mxu0
        %1442 = vdwg.mxu0
        %v1444 = vsel %vm1107, %v1344, 0
        %v1447 = vsel %vm1353, %v1348, 0
        %1449 = vmatprep.subr.bf16.mxu0 0
        %1450 = vmatpush1.bf16.msra.mxu0 %v1447
        %1451 = vmatprep.subr.bf16.mxu0 0
        %1452 = vmatpush1.bf16.msra.mxu0 0
        %1453 = vmatprep.subr.bf16.mxu0 0
        %1454 = vmatpush1.bf16.msra.mxu0 0
        %1455 = vmatprep.subr.bf16.mxu0 0
        %1456 = vmatpush1.bf16.msra.mxu0 0
        %1457 = vmatprep.subr.bf16.mxu0 0
        %1458 = vmatpush1.bf16.msra.mxu0 0
        %1459 = vmatprep.subr.bf16.mxu0 0
        %1460 = vmatpush1.bf16.msra.mxu0 0
        %1461 = vmatprep.subr.bf16.mxu0 0
        %1462 = vmatpush1.bf16.msra.mxu0 0
        %1463 = vmatprep.subr.bf16.mxu0 0
        %1464 = vmatpush1.bf16.msra.mxu0 0
        %1465 = vmatprep.subr.bf16.mxu0 0
        %1466 = vmatpush1.bf16.msra.mxu0 0
        %1467 = vmatprep.subr.bf16.mxu0 0
        %1468 = vmatpush1.bf16.msra.mxu0 0
        %1469 = vmatprep.subr.bf16.mxu0 0
        %1470 = vmatpush1.bf16.msra.mxu0 0
        %1471 = vmatprep.subr.bf16.mxu0 0
        %1472 = vmatpush1.bf16.msra.mxu0 0
        %1473 = vmatprep.subr.bf16.mxu0 0
        %1474 = vmatpush1.bf16.msra.mxu0 0
        %1475 = vmatprep.subr.bf16.mxu0 0
        %1476 = vmatpush1.bf16.msra.mxu0 0
        %1477 = vmatprep.subr.bf16.mxu0 0
        %1478 = vmatpush1.bf16.msra.mxu0 0
        %1479 = vmatprep.subr.bf16.mxu0 0
        %1480 = vmatpush1.bf16.msra.mxu0 0
        %1481 = vmatprep.mubr.bf16.mxu0 0
        %1482 = vmatmul.mubr.bf16.gmra.mrb[0].mxu0 %v1444
        %v1483 = vpop.f32.mrb[0].mxu0
        %v1484 = vadd.f32 0.0, %v1483
        %v1485 = vpop.f32.mrb[0].mxu0
        %v1486 = vpop.f32.mrb[0].mxu0
        %v1487 = vpop.f32.mrb[0].mxu0
        %1488 = vdwg.mxu0
        %v1490 = vsel %vm1107, %v1345, 0
        %v1493 = vsel %vm1353, %v1349, 0
        %1495 = vmatprep.subr.bf16.mxu0 0
        %1496 = vmatpush1.bf16.msra.mxu0 %v1493
        %1497 = vmatprep.subr.bf16.mxu0 0
        %1498 = vmatpush1.bf16.msra.mxu0 0
        %1499 = vmatprep.subr.bf16.mxu0 0
        %1500 = vmatpush1.bf16.msra.mxu0 0
        %1501 = vmatprep.subr.bf16.mxu0 0
        %1502 = vmatpush1.bf16.msra.mxu0 0
        %1503 = vmatprep.subr.bf16.mxu0 0
        %1504 = vmatpush1.bf16.msra.mxu0 0
        %1505 = vmatprep.subr.bf16.mxu0 0
        %1506 = vmatpush1.bf16.msra.mxu0 0
        %1507 = vmatprep.subr.bf16.mxu0 0
        %1508 = vmatpush1.bf16.msra.mxu0 0
        %1509 = vmatprep.subr.bf16.mxu0 0
        %1510 = vmatpush1.bf16.msra.mxu0 0
        %1511 = vmatprep.subr.bf16.mxu0 0
        %1512 = vmatpush1.bf16.msra.mxu0 0
        %1513 = vmatprep.subr.bf16.mxu0 0
        %1514 = vmatpush1.bf16.msra.mxu0 0
        %1515 = vmatprep.subr.bf16.mxu0 0
        %1516 = vmatpush1.bf16.msra.mxu0 0
        %1517 = vmatprep.subr.bf16.mxu0 0
        %1518 = vmatpush1.bf16.msra.mxu0 0
        %1519 = vmatprep.subr.bf16.mxu0 0
        %1520 = vmatpush1.bf16.msra.mxu0 0
        %1521 = vmatprep.subr.bf16.mxu0 0
        %1522 = vmatpush1.bf16.msra.mxu0 0
        %1523 = vmatprep.subr.bf16.mxu0 0
        %1524 = vmatpush1.bf16.msra.mxu0 0
        %1525 = vmatprep.subr.bf16.mxu0 0
        %1526 = vmatpush1.bf16.msra.mxu0 0
        %1527 = vmatprep.mubr.bf16.mxu0 0
        %1528 = vmatmul.mubr.bf16.gmra.mrb[0].mxu0 %v1490
        %v1529 = vpop.f32.mrb[0].mxu0
        %v1530 = vadd.f32 0.0, %v1529
        %v1531 = vpop.f32.mrb[0].mxu0
        %v1532 = vpop.f32.mrb[0].mxu0
        %v1533 = vpop.f32.mrb[0].mxu0
        %1534 = vdwg.mxu0
        %v1535 = vcombine.low %v1392, %v1484
        %v1536 = vcombine.high %v1392, %v1484
        %v1538 = vunpack.c.l.s4 1983009808
        %v1539 = vunpack.c.0.s8 %v1538
        %v1540 = vlaneseq
        %v1541 = vshrl.u32 %v1540, 7
        %v1542 = vsub.s32 %v1539, %v1541
        %v1543 = vrot.slane %v1535, %v1542
        %v1545 = vunpack.c.l.s4 1983009808
        %v1546 = vunpack.c.0.s8 %v1545
        %v1547 = vlaneseq
        %v1548 = vshrl.u32 %v1547, 7
        %v1549 = vsub.s32 %v1546, %v1548
        %v1550 = vrot.slane %v1536, %v1549
        %v1551 = vcombine.low %v1438, %v1530
        %v1552 = vcombine.high %v1438, %v1530
        %v1554 = vunpack.c.l.s4 1983009808
        %v1555 = vunpack.c.0.s8 %v1554
        %v1556 = vlaneseq
        %v1557 = vshrl.u32 %v1556, 7
        %v1558 = vsub.s32 %v1555, %v1557
        %v1559 = vrot.slane %v1551, %v1558
        %v1561 = vunpack.c.l.s4 1983009808
        %v1562 = vunpack.c.0.s8 %v1561
        %v1563 = vlaneseq
        %v1564 = vshrl.u32 %v1563, 7
        %v1565 = vsub.s32 %v1562, %v1564
        %v1566 = vrot.slane %v1552, %v1565
        %v1567 = vcombine.low %v1543, %v1559
        %v1568 = vcombine.high %v1543, %v1559
        %v1570 = vunpack.c.l.s4 1934713408
        %v1571 = vunpack.c.0.s8 %v1570
        %v1572 = vlaneseq
        %v1573 = vshrl.u32 %v1572, 7
        %v1574 = vsub.s32 %v1571, %v1573
        %v1575 = vrot.slane %v1567, %v1574
        %v1577 = vunpack.c.l.s4 1934713408
        %v1578 = vunpack.c.0.s8 %v1577
        %v1579 = vlaneseq
        %v1580 = vshrl.u32 %v1579, 7
        %v1581 = vsub.s32 %v1578, %v1580
        %v1582 = vrot.slane %v1568, %v1581
        %v1583 = vcombine.low %v1550, %v1566
        %v1584 = vcombine.high %v1550, %v1566
        %v1586 = vunpack.c.l.s4 1934713408
        %v1587 = vunpack.c.0.s8 %v1586
        %v1588 = vlaneseq
        %v1589 = vshrl.u32 %v1588, 7
        %v1590 = vsub.s32 %v1587, %v1589
        %v1591 = vrot.slane %v1583, %v1590
        %v1593 = vunpack.c.l.s4 1934713408
        %v1594 = vunpack.c.0.s8 %v1593
        %v1595 = vlaneseq
        %v1596 = vshrl.u32 %v1595, 7
        %v1597 = vsub.s32 %v1594, %v1596
        %v1598 = vrot.slane %v1584, %v1597
        %v1599 = vcombine.high %v1575, 0.0
        %v1600 = vcombine.high %v1582, 0.0
        %v1601 = vcombine.high %v1591, 0.0
        %v1602 = vcombine.high %v1598, 0.0
        %v1603 = vcombine.low %v1575, %v1582
        %v1605 = vunpack.c.l.s4 1983009808
        %v1606 = vunpack.c.0.s8 %v1605
        %v1607 = vlaneseq
        %v1608 = vshrl.u32 %v1607, 7
        %v1609 = vsub.s32 %v1606, %v1608
        %v1610 = vrot.slane %v1603, %v1609
        %v1611 = vcombine.low %v1599, %v1600
        %v1613 = vunpack.c.l.s4 1983009808
        %v1614 = vunpack.c.0.s8 %v1613
        %v1615 = vlaneseq
        %v1616 = vshrl.u32 %v1615, 7
        %v1617 = vsub.s32 %v1614, %v1616
        %v1618 = vrot.slane %v1611, %v1617
        %v1619 = vcombine.low %v1591, %v1598
        %v1621 = vunpack.c.l.s4 1983009808
        %v1622 = vunpack.c.0.s8 %v1621
        %v1623 = vlaneseq
        %v1624 = vshrl.u32 %v1623, 7
        %v1625 = vsub.s32 %v1622, %v1624
        %v1626 = vrot.slane %v1619, %v1625
        %v1627 = vcombine.low %v1601, %v1602
        %v1629 = vunpack.c.l.s4 1983009808
        %v1630 = vunpack.c.0.s8 %v1629
        %v1631 = vlaneseq
        %v1632 = vshrl.u32 %v1631, 7
        %v1633 = vsub.s32 %v1630, %v1632
        %v1634 = vrot.slane %v1627, %v1633
        %v1635 = vcombine.low %v1610, %v1618
        %v1636 = vcombine.high %v1610, %v1618
        %v1638 = vunpack.c.l.s4 1934713408
        %v1639 = vunpack.c.0.s8 %v1638
        %v1640 = vlaneseq
        %v1641 = vshrl.u32 %v1640, 7
        %v1642 = vsub.s32 %v1639, %v1641
        %v1643 = vrot.slane %v1635, %v1642
        %v1645 = vunpack.c.l.s4 1934713408
        %v1646 = vunpack.c.0.s8 %v1645
        %v1647 = vlaneseq
        %v1648 = vshrl.u32 %v1647, 7
        %v1649 = vsub.s32 %v1646, %v1648
        %v1650 = vrot.slane %v1636, %v1649
        %v1651 = vcombine.low %v1626, %v1634
        %v1652 = vcombine.high %v1626, %v1634
        %v1654 = vunpack.c.l.s4 1934713408
        %v1655 = vunpack.c.0.s8 %v1654
        %v1656 = vlaneseq
        %v1657 = vshrl.u32 %v1656, 7
        %v1658 = vsub.s32 %v1655, %v1657
        %v1659 = vrot.slane %v1651, %v1658
        %v1661 = vunpack.c.l.s4 1934713408
        %v1662 = vunpack.c.0.s8 %v1661
        %v1663 = vlaneseq
        %v1664 = vshrl.u32 %v1663, 7
        %v1665 = vsub.s32 %v1662, %v1664
        %v1666 = vrot.slane %v1652, %v1665
        %v1667 = vcombine.low %v1643, %v1659
        %v1668 = vcombine.high %v1643, %v1659
        %v1669 = vcombine.low %v1650, %v1666
        %v1670 = vcombine.high %v1650, %v1666
        %1672 = vrot.lane.b32.xlu0 %v1668, 8
        %v1673 = vpop.permute.xlu0 %1672
        %1676 = vrot.lane.b32.xlu0 %v1669, 16
        %v1677 = vpop.permute.xlu0 %1676
        %1680 = vrot.lane.b32.xlu0 %v1670, 24
        %v1681 = vpop.permute.xlu0 %1680
        %v1683 = vsel %vm1107, %v1667, %v1673
        %vm1684 = vcmask 130048
        %v1685 = vsel %vm1684, %v1683, %v1677
        %vm1686 = vcmask 195584
        %v1687 = vsel %vm1686, %v1685, %v1681
        %v1688 = vpack.c.bf16 %v1687, %v1687
        %v1689 = vld [vmem:[%s3] sm:$0xf]
        %v1690 = vld [vmem:[%s3 + $0x4] sm:$0xf]
        %v1691 = vld [vmem:[%s3 + $0x8] sm:$0xf]
        %v1692 = vld [vmem:[%s3 + $0xc] sm:$0xf]
        %v1693 = vld [vmem:[%s4] sm:$0x1]
        %v1695 = vlaneseq
        %v1696 = vshrl.u32 %v1695, 7
        %v1697 = vsub.s32 0, %v1696
        %v1698 = vrot.slane %v1693, %v1697
        %v1704 = vunpack.c.l.b16 %v1689
        %v1705 = vunpack.c.l.b16 %v1690
        %v1706 = vunpack.c.l.b16 %v1691
        %v1707 = vunpack.c.l.b16 %v1692
        %v1708 = vpack.c.b16 %v1705, %v1704
        %v1709 = vpack.c.b16 %v1707, %v1706
        %v1713 = vsel %vm553, %v1688, 0
        %1715 = vmatprep.subr.bf16.mxu0 0
        %1716 = vmatpush1.bf16.msra.mxu0 %v1708
        %1717 = vmatprep.subr.bf16.mxu0 0
        %1718 = vmatpush1.bf16.msra.mxu0 %v1709
        %1719 = vmatprep.subr.bf16.mxu0 0
        %1720 = vmatpush1.bf16.msra.mxu0 0
        %1721 = vmatprep.subr.bf16.mxu0 0
        %1722 = vmatpush1.bf16.msra.mxu0 0
        %1723 = vmatprep.subr.bf16.mxu0 0
        %1724 = vmatpush1.bf16.msra.mxu0 0
        %1725 = vmatprep.subr.bf16.mxu0 0
        %1726 = vmatpush1.bf16.msra.mxu0 0
        %1727 = vmatprep.subr.bf16.mxu0 0
        %1728 = vmatpush1.bf16.msra.mxu0 0
        %1729 = vmatprep.subr.bf16.mxu0 0
        %1730 = vmatpush1.bf16.msra.mxu0 0
        %1731 = vmatprep.subr.bf16.mxu0 0
        %1732 = vmatpush1.bf16.msra.mxu0 0
        %1733 = vmatprep.subr.bf16.mxu0 0
        %1734 = vmatpush1.bf16.msra.mxu0 0
        %1735 = vmatprep.subr.bf16.mxu0 0
        %1736 = vmatpush1.bf16.msra.mxu0 0
        %1737 = vmatprep.subr.bf16.mxu0 0
        %1738 = vmatpush1.bf16.msra.mxu0 0
        %1739 = vmatprep.subr.bf16.mxu0 0
        %1740 = vmatpush1.bf16.msra.mxu0 0
        %1741 = vmatprep.subr.bf16.mxu0 0
        %1742 = vmatpush1.bf16.msra.mxu0 0
        %1743 = vmatprep.subr.bf16.mxu0 0
        %1744 = vmatpush1.bf16.msra.mxu0 0
        %1745 = vmatprep.subr.bf16.mxu0 0
        %1746 = vmatpush1.bf16.msra.mxu0 0
        %1747 = vmatprep.mubr.bf16.mxu0 0
        %1748 = vmatmul.mubr.bf16.gmra.mrb[0].mxu0 %v1713
        %v1749 = vpop.f32.mrb[0].mxu0
        %v1750 = vadd.f32 %v1698, %v1749
        %v1751 = vpop.f32.mrb[0].mxu0
        %v1752 = vpop.f32.mrb[0].mxu0
        %v1753 = vpop.f32.mrb[0].mxu0
        %1754 = vdwg.mxu0
        %v1755 = vadd.f32 %v545, %v1750
        %v1756 = vld [vmem:[%s11] sm:$0x1]
        %v1757 = vld [vmem:[%s12] sm:$0x1]
        %v1758 = vsel %vm553, %v1755, 0.0
        %1759 = vadd.xlane.f32.xlu0 %v1758
        %v1760 = vpop.xlane.xlu0 %1759
        %v1761 = vmul.f32 %v1760, %v557
        %v1762 = vsub.f32 %v1755, %v1761
        %v1763 = vmul.f32 %v1762, %v1762
        %v1764 = vsel %vm553, %v1763, 0.0
        %1765 = vadd.xlane.f32.xlu0 %v1764
        %v1766 = vpop.xlane.xlu0 %1765
        %v1767 = vmul.f32 %v1766, %v557
        %v1768 = vadd.f32 %v1767, 1e-05
        %v1769 = vrsqrt.pop %v1768
        %v1770 = vmul.f32 %v1762, %v1769
        %v1772 = vlaneseq
        %v1773 = vshrl.u32 %v1772, 7
        %v1774 = vsub.s32 0, %v1773
        %v1775 = vrot.slane %v1756, %v1774
        %v1777 = vmul.f32 %v1770, %v1775
        %v1779 = vlaneseq
        %v1780 = vshrl.u32 %v1779, 7
        %v1781 = vsub.s32 0, %v1780
        %v1782 = vrot.slane %v1757, %v1781
        %v1784 = vadd.f32 %v1777, %v1782
        %v1785 = vpack.c.bf16 %v1784, %v1784
        %v1786 = vld [vmem:[%s5] sm:$0xf]
        %v1787 = vld [vmem:[%s5 + $0x4] sm:$0xf]
        %v1788 = vld [vmem:[%s5 + $0x8] sm:$0xf]
        %v1789 = vld [vmem:[%s5 + $0xc] sm:$0xf]
        %v1790 = vld [vmem:[%s6] sm:$0x1]
        %v1792 = vlaneseq
        %v1793 = vshrl.u32 %v1792, 7
        %v1794 = vsub.s32 0, %v1793
        %v1795 = vrot.slane %v1790, %v1794
        %v1801 = vunpack.c.l.b16 %v1786
        %v1802 = vunpack.c.l.b16 %v1787
        %v1803 = vunpack.c.l.b16 %v1788
        %v1804 = vunpack.c.l.b16 %v1789
        %v1805 = vpack.c.b16 %v1802, %v1801
        %v1806 = vpack.c.b16 %v1804, %v1803
        %v1810 = vsel %vm553, %v1785, 0
        %1812 = vmatprep.subr.bf16.mxu0 0
        %1813 = vmatpush1.bf16.msra.mxu0 %v1805
        %1814 = vmatprep.subr.bf16.mxu0 0
        %1815 = vmatpush1.bf16.msra.mxu0 %v1806
        %1816 = vmatprep.subr.bf16.mxu0 0
        %1817 = vmatpush1.bf16.msra.mxu0 0
        %1818 = vmatprep.subr.bf16.mxu0 0
        %1819 = vmatpush1.bf16.msra.mxu0 0
        %1820 = vmatprep.subr.bf16.mxu0 0
        %1821 = vmatpush1.bf16.msra.mxu0 0
        %1822 = vmatprep.subr.bf16.mxu0 0
        %1823 = vmatpush1.bf16.msra.mxu0 0
        %1824 = vmatprep.subr.bf16.mxu0 0
        %1825 = vmatpush1.bf16.msra.mxu0 0
        %1826 = vmatprep.subr.bf16.mxu0 0
        %1827 = vmatpush1.bf16.msra.mxu0 0
        %1828 = vmatprep.subr.bf16.mxu0 0
        %1829 = vmatpush1.bf16.msra.mxu0 0
        %1830 = vmatprep.subr.bf16.mxu0 0
        %1831 = vmatpush1.bf16.msra.mxu0 0
        %1832 = vmatprep.subr.bf16.mxu0 0
        %1833 = vmatpush1.bf16.msra.mxu0 0
        %1834 = vmatprep.subr.bf16.mxu0 0
        %1835 = vmatpush1.bf16.msra.mxu0 0
        %1836 = vmatprep.subr.bf16.mxu0 0
        %1837 = vmatpush1.bf16.msra.mxu0 0
        %1838 = vmatprep.subr.bf16.mxu0 0
        %1839 = vmatpush1.bf16.msra.mxu0 0
        %1840 = vmatprep.subr.bf16.mxu0 0
        %1841 = vmatpush1.bf16.msra.mxu0 0
        %1842 = vmatprep.subr.bf16.mxu0 0
        %1843 = vmatpush1.bf16.msra.mxu0 0
        %1844 = vmatprep.mubr.bf16.mxu0 0
        %1845 = vmatmul.mubr.bf16.gmra.mrb[0].mxu0 %v1810
        %v1846 = vpop.f32.mrb[0].mxu0
        %v1847 = vadd.f32 %v1795, %v1846
        %v1848 = vpop.f32.mrb[0].mxu0
        %v1849 = vpop.f32.mrb[0].mxu0
        %v1850 = vpop.f32.mrb[0].mxu0
        %1851 = vdwg.mxu0
        %v1852 = vmul.f32 %v1847, 0.5
        %v1853 = vmul.f32 %v1847, 0.70710677
        %v1854 = verf.f32.pop %v1853
        %v1855 = vadd.f32 %v1854, 1.0
        %v1856 = vmul.f32 %v1852, %v1855
        %v1857 = vpack.c.bf16 %v1856, %v1856
        %v1858 = vld [vmem:[%s7] sm:$0xf]
        %v1859 = vld [vmem:[%s7 + $0x4] sm:$0xf]
        %v1860 = vld [vmem:[%s7 + $0x8] sm:$0xf]
        %v1861 = vld [vmem:[%s7 + $0xc] sm:$0xf]
        %v1862 = vld [vmem:[%s7 + $0x10] sm:$0xf]
        %v1863 = vld [vmem:[%s7 + $0x14] sm:$0xf]
        %v1864 = vld [vmem:[%s7 + $0x18] sm:$0xf]
        %v1865 = vld [vmem:[%s7 + $0x1c] sm:$0xf]
        %v1866 = vld [vmem:[%s7 + $0x20] sm:$0xf]
        %v1867 = vld [vmem:[%s7 + $0x24] sm:$0xf]
        %v1868 = vld [vmem:[%s7 + $0x28] sm:$0xf]
        %v1869 = vld [vmem:[%s7 + $0x2c] sm:$0xf]
        %v1870 = vld [vmem:[%s7 + $0x30] sm:$0xf]
        %v1871 = vld [vmem:[%s7 + $0x34] sm:$0xf]
        %v1872 = vld [vmem:[%s7 + $0x38] sm:$0xf]
        %v1873 = vld [vmem:[%s7 + $0x3c] sm:$0xf]
        %v1874 = vld [vmem:[%s8] sm:$0x1]
        %v1876 = vlaneseq
        %v1877 = vshrl.u32 %v1876, 7
        %v1878 = vsub.s32 0, %v1877
        %v1879 = vrot.slane %v1874, %v1878
        %v1897 = vunpack.c.l.b16 %v1858
        %v1898 = vunpack.c.l.b16 %v1859
        %v1899 = vunpack.c.l.b16 %v1860
        %v1900 = vunpack.c.l.b16 %v1861
        %v1901 = vunpack.c.l.b16 %v1862
        %v1902 = vunpack.c.l.b16 %v1863
        %v1903 = vunpack.c.l.b16 %v1864
        %v1904 = vunpack.c.l.b16 %v1865
        %v1905 = vunpack.c.l.b16 %v1866
        %v1906 = vunpack.c.l.b16 %v1867
        %v1907 = vunpack.c.l.b16 %v1868
        %v1908 = vunpack.c.l.b16 %v1869
        %v1909 = vunpack.c.l.b16 %v1870
        %v1910 = vunpack.c.l.b16 %v1871
        %v1911 = vunpack.c.l.b16 %v1872
        %v1912 = vunpack.c.l.b16 %v1873
        %v1913 = vpack.c.b16 %v1898, %v1897
        %v1914 = vpack.c.b16 %v1900, %v1899
        %v1915 = vpack.c.b16 %v1902, %v1901
        %v1916 = vpack.c.b16 %v1904, %v1903
        %v1917 = vpack.c.b16 %v1906, %v1905
        %v1918 = vpack.c.b16 %v1908, %v1907
        %v1919 = vpack.c.b16 %v1910, %v1909
        %v1920 = vpack.c.b16 %v1912, %v1911
        %1929 = vmatprep.subr.bf16.mxu0 0
        %1930 = vmatpush1.bf16.msra.mxu0 %v1913
        %1931 = vmatprep.subr.bf16.mxu0 0
        %1932 = vmatpush1.bf16.msra.mxu0 %v1914
        %1933 = vmatprep.subr.bf16.mxu0 0
        %1934 = vmatpush1.bf16.msra.mxu0 %v1915
        %1935 = vmatprep.subr.bf16.mxu0 0
        %1936 = vmatpush1.bf16.msra.mxu0 %v1916
        %1937 = vmatprep.subr.bf16.mxu0 0
        %1938 = vmatpush1.bf16.msra.mxu0 %v1917
        %1939 = vmatprep.subr.bf16.mxu0 0
        %1940 = vmatpush1.bf16.msra.mxu0 %v1918
        %1941 = vmatprep.subr.bf16.mxu0 0
        %1942 = vmatpush1.bf16.msra.mxu0 %v1919
        %1943 = vmatprep.subr.bf16.mxu0 0
        %1944 = vmatpush1.bf16.msra.mxu0 %v1920
        %1945 = vmatprep.subr.bf16.mxu0 0
        %1946 = vmatpush1.bf16.msra.mxu0 0
        %1947 = vmatprep.subr.bf16.mxu0 0
        %1948 = vmatpush1.bf16.msra.mxu0 0
        %1949 = vmatprep.subr.bf16.mxu0 0
        %1950 = vmatpush1.bf16.msra.mxu0 0
        %1951 = vmatprep.subr.bf16.mxu0 0
        %1952 = vmatpush1.bf16.msra.mxu0 0
        %1953 = vmatprep.subr.bf16.mxu0 0
        %1954 = vmatpush1.bf16.msra.mxu0 0
        %1955 = vmatprep.subr.bf16.mxu0 0
        %1956 = vmatpush1.bf16.msra.mxu0 0
        %1957 = vmatprep.subr.bf16.mxu0 0
        %1958 = vmatpush1.bf16.msra.mxu0 0
        %1959 = vmatprep.subr.bf16.mxu0 0
        %1960 = vmatpush1.bf16.msra.mxu0 0
        %1961 = vmatprep.mubr.bf16.mxu0 0
        %1962 = vmatmul.mubr.bf16.gmra.mrb[0].mxu0 %v1857
        %v1963 = vpop.f32.mrb[0].mxu0
        %v1964 = vadd.f32 %v1879, %v1963
        %v1965 = vpop.f32.mrb[0].mxu0
        %v1966 = vpop.f32.mrb[0].mxu0
        %v1967 = vpop.f32.mrb[0].mxu0
        %1968 = vdwg.mxu0
        %v1969 = vadd.f32 %v1755, %v1964
        %s1970 = scalar_lea.vmem %s9, 1
        %v1971 = vld [vmem:[%s1970] sm:$0x1]
        %s1972 = scalar_lea.vmem %s10, 1
        %v1973 = vld [vmem:[%s1972] sm:$0x1]
        %v1974 = vsel %vm553, %v1969, 0.0
        %1975 = vadd.xlane.f32.xlu0 %v1974
        %v1976 = vpop.xlane.xlu0 %1975
        %v1977 = vmul.f32 %v1976, %v557
        %v1978 = vsub.f32 %v1969, %v1977
        %v1979 = vmul.f32 %v1978, %v1978
        %v1980 = vsel %vm553, %v1979, 0.0
        %1981 = vadd.xlane.f32.xlu0 %v1980
        %v1982 = vpop.xlane.xlu0 %1981
        %v1983 = vmul.f32 %v1982, %v557
        %v1984 = vadd.f32 %v1983, 1e-05
        %v1985 = vrsqrt.pop %v1984
        %v1986 = vmul.f32 %v1978, %v1985
        %v1988 = vlaneseq
        %v1989 = vshrl.u32 %v1988, 7
        %v1990 = vsub.s32 0, %v1989
        %v1991 = vrot.slane %v1971, %v1990
        %v1993 = vmul.f32 %v1986, %v1991
        %v1995 = vlaneseq
        %v1996 = vshrl.u32 %v1995, 7
        %v1997 = vsub.s32 0, %v1996
        %v1998 = vrot.slane %v1973, %v1997
        %v2000 = vadd.f32 %v1993, %v1998
        %v2001 = vpack.c.bf16 %v2000, %v2000
        %s2002 = scalar_lea.vmem %s1, 16
        %v2003 = vld [vmem:[%s2002] sm:$0xf]
        %v2004 = vld [vmem:[%s2002 + $0x4] sm:$0xf]
        %v2005 = vld [vmem:[%s2002 + $0x8] sm:$0xf]
        %v2006 = vld [vmem:[%s2002 + $0xc] sm:$0xf]
        %s2007 = scalar_lea.vmem %s2, 1
        %v2008 = vld [vmem:[%s2007] sm:$0x1]
        %v2010 = vlaneseq
        %v2011 = vshrl.u32 %v2010, 7
        %v2012 = vsub.s32 0, %v2011
        %v2013 = vrot.slane %v2008, %v2012
        %v2019 = vunpack.c.l.b16 %v2003
        %v2020 = vunpack.c.l.b16 %v2004
        %v2021 = vunpack.c.l.b16 %v2005
        %v2022 = vunpack.c.l.b16 %v2006
        %v2023 = vpack.c.b16 %v2020, %v2019
        %v2024 = vpack.c.b16 %v2022, %v2021
        %v2028 = vsel %vm553, %v2001, 0
        %2030 = vmatprep.subr.bf16.mxu0 0
        %2031 = vmatpush1.bf16.msra.mxu0 %v2023
        %2032 = vmatprep.subr.bf16.mxu0 0
        %2033 = vmatpush1.bf16.msra.mxu0 %v2024
        %2034 = vmatprep.subr.bf16.mxu0 0
        %2035 = vmatpush1.bf16.msra.mxu0 0
        %2036 = vmatprep.subr.bf16.mxu0 0
        %2037 = vmatpush1.bf16.msra.mxu0 0
        %2038 = vmatprep.subr.bf16.mxu0 0
        %2039 = vmatpush1.bf16.msra.mxu0 0
        %2040 = vmatprep.subr.bf16.mxu0 0
        %2041 = vmatpush1.bf16.msra.mxu0 0
        %2042 = vmatprep.subr.bf16.mxu0 0
        %2043 = vmatpush1.bf16.msra.mxu0 0
        %2044 = vmatprep.subr.bf16.mxu0 0
        %2045 = vmatpush1.bf16.msra.mxu0 0
        %2046 = vmatprep.subr.bf16.mxu0 0
        %2047 = vmatpush1.bf16.msra.mxu0 0
        %2048 = vmatprep.subr.bf16.mxu0 0
        %2049 = vmatpush1.bf16.msra.mxu0 0
        %2050 = vmatprep.subr.bf16.mxu0 0
        %2051 = vmatpush1.bf16.msra.mxu0 0
        %2052 = vmatprep.subr.bf16.mxu0 0
        %2053 = vmatpush1.bf16.msra.mxu0 0
        %2054 = vmatprep.subr.bf16.mxu0 0
        %2055 = vmatpush1.bf16.msra.mxu0 0
        %2056 = vmatprep.subr.bf16.mxu0 0
        %2057 = vmatpush1.bf16.msra.mxu0 0
        %2058 = vmatprep.subr.bf16.mxu0 0
        %2059 = vmatpush1.bf16.msra.mxu0 0
        %2060 = vmatprep.subr.bf16.mxu0 0
        %2061 = vmatpush1.bf16.msra.mxu0 0
        %2062 = vmatprep.mubr.bf16.mxu0 0
        %2063 = vmatmul.mubr.bf16.gmra.mrb[0].mxu0 %v2028
        %v2064 = vpop.f32.mrb[0].mxu0
        %v2065 = vadd.f32 %v2013, %v2064
        %v2066 = vpop.f32.mrb[0].mxu0
        %v2067 = vpop.f32.mrb[0].mxu0
        %v2068 = vpop.f32.mrb[0].mxu0
        %2069 = vdwg.mxu0
        %v2070 = vmul.f32 %v2065, 0.35355338
        %2072 = vrot.lane.b32.xlu0 %v2070, 120
        %v2073 = vpop.permute.xlu0 %2072
        %2075 = vrot.lane.b32.xlu0 %v2070, 112
        %v2076 = vpop.permute.xlu0 %2075
        %2078 = vrot.lane.b32.xlu0 %v2070, 104
        %v2079 = vpop.permute.xlu0 %2078
        %v2081 = vcombine.low %v2070, %v2076
        %v2082 = vcombine.high %v2070, %v2076
        %v2084 = vunpack.c.l.s4 1983009808
        %v2085 = vunpack.c.0.s8 %v2084
        %v2086 = vlaneseq
        %v2087 = vshrl.u32 %v2086, 7
        %v2088 = vsub.s32 %v2085, %v2087
        %v2089 = vrot.slane %v2081, %v2088
        %v2091 = vunpack.c.l.s4 1983009808
        %v2092 = vunpack.c.0.s8 %v2091
        %v2093 = vlaneseq
        %v2094 = vshrl.u32 %v2093, 7
        %v2095 = vsub.s32 %v2092, %v2094
        %v2096 = vrot.slane %v2082, %v2095
        %v2097 = vcombine.low %v2073, %v2079
        %v2098 = vcombine.high %v2073, %v2079
        %v2100 = vunpack.c.l.s4 1983009808
        %v2101 = vunpack.c.0.s8 %v2100
        %v2102 = vlaneseq
        %v2103 = vshrl.u32 %v2102, 7
        %v2104 = vsub.s32 %v2101, %v2103
        %v2105 = vrot.slane %v2097, %v2104
        %v2107 = vunpack.c.l.s4 1983009808
        %v2108 = vunpack.c.0.s8 %v2107
        %v2109 = vlaneseq
        %v2110 = vshrl.u32 %v2109, 7
        %v2111 = vsub.s32 %v2108, %v2110
        %v2112 = vrot.slane %v2098, %v2111
        %v2113 = vcombine.low %v2089, %v2105
        %v2114 = vcombine.high %v2089, %v2105
        %v2116 = vunpack.c.l.s4 1934713408
        %v2117 = vunpack.c.0.s8 %v2116
        %v2118 = vlaneseq
        %v2119 = vshrl.u32 %v2118, 7
        %v2120 = vsub.s32 %v2117, %v2119
        %v2121 = vrot.slane %v2113, %v2120
        %v2123 = vunpack.c.l.s4 1934713408
        %v2124 = vunpack.c.0.s8 %v2123
        %v2125 = vlaneseq
        %v2126 = vshrl.u32 %v2125, 7
        %v2127 = vsub.s32 %v2124, %v2126
        %v2128 = vrot.slane %v2114, %v2127
        %v2129 = vcombine.low %v2096, %v2112
        %v2130 = vcombine.high %v2096, %v2112
        %v2132 = vunpack.c.l.s4 1934713408
        %v2133 = vunpack.c.0.s8 %v2132
        %v2134 = vlaneseq
        %v2135 = vshrl.u32 %v2134, 7
        %v2136 = vsub.s32 %v2133, %v2135
        %v2137 = vrot.slane %v2129, %v2136
        %v2139 = vunpack.c.l.s4 1934713408
        %v2140 = vunpack.c.0.s8 %v2139
        %v2141 = vlaneseq
        %v2142 = vshrl.u32 %v2141, 7
        %v2143 = vsub.s32 %v2140, %v2142
        %v2144 = vrot.slane %v2130, %v2143
        %v2145 = vcombine.high %v2121, 0.0
        %v2146 = vcombine.high %v2128, 0.0
        %v2147 = vcombine.high %v2137, 0.0
        %v2148 = vcombine.high %v2144, 0.0
        %v2149 = vcombine.low %v2121, %v2128
        %v2151 = vunpack.c.l.s4 1983009808
        %v2152 = vunpack.c.0.s8 %v2151
        %v2153 = vlaneseq
        %v2154 = vshrl.u32 %v2153, 7
        %v2155 = vsub.s32 %v2152, %v2154
        %v2156 = vrot.slane %v2149, %v2155
        %v2157 = vcombine.low %v2145, %v2146
        %v2159 = vunpack.c.l.s4 1983009808
        %v2160 = vunpack.c.0.s8 %v2159
        %v2161 = vlaneseq
        %v2162 = vshrl.u32 %v2161, 7
        %v2163 = vsub.s32 %v2160, %v2162
        %v2164 = vrot.slane %v2157, %v2163
        %v2165 = vcombine.low %v2137, %v2144
        %v2167 = vunpack.c.l.s4 1983009808
        %v2168 = vunpack.c.0.s8 %v2167
        %v2169 = vlaneseq
        %v2170 = vshrl.u32 %v2169, 7
        %v2171 = vsub.s32 %v2168, %v2170
        %v2172 = vrot.slane %v2165, %v2171
        %v2173 = vcombine.low %v2147, %v2148
        %v2175 = vunpack.c.l.s4 1983009808
        %v2176 = vunpack.c.0.s8 %v2175
        %v2177 = vlaneseq
        %v2178 = vshrl.u32 %v2177, 7
        %v2179 = vsub.s32 %v2176, %v2178
        %v2180 = vrot.slane %v2173, %v2179
        %v2181 = vcombine.low %v2156, %v2164
        %v2182 = vcombine.high %v2156, %v2164
        %v2184 = vunpack.c.l.s4 1934713408
        %v2185 = vunpack.c.0.s8 %v2184
        %v2186 = vlaneseq
        %v2187 = vshrl.u32 %v2186, 7
        %v2188 = vsub.s32 %v2185, %v2187
        %v2189 = vrot.slane %v2181, %v2188
        %v2191 = vunpack.c.l.s4 1934713408
        %v2192 = vunpack.c.0.s8 %v2191
        %v2193 = vlaneseq
        %v2194 = vshrl.u32 %v2193, 7
        %v2195 = vsub.s32 %v2192, %v2194
        %v2196 = vrot.slane %v2182, %v2195
        %v2197 = vcombine.low %v2172, %v2180
        %v2198 = vcombine.high %v2172, %v2180
        %v2200 = vunpack.c.l.s4 1934713408
        %v2201 = vunpack.c.0.s8 %v2200
        %v2202 = vlaneseq
        %v2203 = vshrl.u32 %v2202, 7
        %v2204 = vsub.s32 %v2201, %v2203
        %v2205 = vrot.slane %v2197, %v2204
        %v2207 = vunpack.c.l.s4 1934713408
        %v2208 = vunpack.c.0.s8 %v2207
        %v2209 = vlaneseq
        %v2210 = vshrl.u32 %v2209, 7
        %v2211 = vsub.s32 %v2208, %v2210
        %v2212 = vrot.slane %v2198, %v2211
        %v2213 = vcombine.low %v2189, %v2205
        %v2214 = vcombine.high %v2189, %v2205
        %v2215 = vcombine.low %v2196, %v2212
        %v2216 = vcombine.high %v2196, %v2212
        %2218 = vrot.lane.b32.xlu0 %v2065, 120
        %v2219 = vpop.permute.xlu0 %2218
        %2220 = vrot.lane.b32.xlu0 %v2065, 112
        %v2221 = vpop.permute.xlu0 %2220
        %2222 = vrot.lane.b32.xlu0 %v2065, 104
        %v2223 = vpop.permute.xlu0 %2222
        %2224 = vrot.lane.b32.xlu0 %v2065, 96
        %v2225 = vpop.permute.xlu0 %2224
        %2226 = vrot.lane.b32.xlu0 %v2219, 96
        %v2227 = vpop.permute.xlu0 %2226
        %2228 = vrot.lane.b32.xlu0 %v2221, 96
        %v2229 = vpop.permute.xlu0 %2228
        %2230 = vrot.lane.b32.xlu0 %v2223, 96
        %v2231 = vpop.permute.xlu0 %2230
        %v2236 = vcombine.low %v2225, %v2229
        %v2237 = vcombine.high %v2225, %v2229
        %v2239 = vunpack.c.l.s4 1983009808
        %v2240 = vunpack.c.0.s8 %v2239
        %v2241 = vlaneseq
        %v2242 = vshrl.u32 %v2241, 7
        %v2243 = vsub.s32 %v2240, %v2242
        %v2244 = vrot.slane %v2236, %v2243
        %v2246 = vunpack.c.l.s4 1983009808
        %v2247 = vunpack.c.0.s8 %v2246
        %v2248 = vlaneseq
        %v2249 = vshrl.u32 %v2248, 7
        %v2250 = vsub.s32 %v2247, %v2249
        %v2251 = vrot.slane %v2237, %v2250
        %v2252 = vcombine.low %v2227, %v2231
        %v2253 = vcombine.high %v2227, %v2231
        %v2255 = vunpack.c.l.s4 1983009808
        %v2256 = vunpack.c.0.s8 %v2255
        %v2257 = vlaneseq
        %v2258 = vshrl.u32 %v2257, 7
        %v2259 = vsub.s32 %v2256, %v2258
        %v2260 = vrot.slane %v2252, %v2259
        %v2262 = vunpack.c.l.s4 1983009808
        %v2263 = vunpack.c.0.s8 %v2262
        %v2264 = vlaneseq
        %v2265 = vshrl.u32 %v2264, 7
        %v2266 = vsub.s32 %v2263, %v2265
        %v2267 = vrot.slane %v2253, %v2266
        %v2268 = vcombine.low %v2244, %v2260
        %v2269 = vcombine.high %v2244, %v2260
        %v2271 = vunpack.c.l.s4 1934713408
        %v2272 = vunpack.c.0.s8 %v2271
        %v2273 = vlaneseq
        %v2274 = vshrl.u32 %v2273, 7
        %v2275 = vsub.s32 %v2272, %v2274
        %v2276 = vrot.slane %v2268, %v2275
        %v2278 = vunpack.c.l.s4 1934713408
        %v2279 = vunpack.c.0.s8 %v2278
        %v2280 = vlaneseq
        %v2281 = vshrl.u32 %v2280, 7
        %v2282 = vsub.s32 %v2279, %v2281
        %v2283 = vrot.slane %v2269, %v2282
        %v2284 = vcombine.low %v2251, %v2267
        %v2285 = vcombine.high %v2251, %v2267
        %v2287 = vunpack.c.l.s4 1934713408
        %v2288 = vunpack.c.0.s8 %v2287
        %v2289 = vlaneseq
        %v2290 = vshrl.u32 %v2289, 7
        %v2291 = vsub.s32 %v2288, %v2290
        %v2292 = vrot.slane %v2284, %v2291
        %v2294 = vunpack.c.l.s4 1934713408
        %v2295 = vunpack.c.0.s8 %v2294
        %v2296 = vlaneseq
        %v2297 = vshrl.u32 %v2296, 7
        %v2298 = vsub.s32 %v2295, %v2297
        %v2299 = vrot.slane %v2285, %v2298
        %v2300 = vcombine.high %v2276, 0.0
        %v2301 = vcombine.high %v2283, 0.0
        %v2302 = vcombine.high %v2292, 0.0
        %v2303 = vcombine.high %v2299, 0.0
        %v2304 = vcombine.low %v2276, %v2283
        %v2306 = vunpack.c.l.s4 1983009808
        %v2307 = vunpack.c.0.s8 %v2306
        %v2308 = vlaneseq
        %v2309 = vshrl.u32 %v2308, 7
        %v2310 = vsub.s32 %v2307, %v2309
        %v2311 = vrot.slane %v2304, %v2310
        %v2312 = vcombine.low %v2300, %v2301
        %v2314 = vunpack.c.l.s4 1983009808
        %v2315 = vunpack.c.0.s8 %v2314
        %v2316 = vlaneseq
        %v2317 = vshrl.u32 %v2316, 7
        %v2318 = vsub.s32 %v2315, %v2317
        %v2319 = vrot.slane %v2312, %v2318
        %v2320 = vcombine.low %v2292, %v2299
        %v2322 = vunpack.c.l.s4 1983009808
        %v2323 = vunpack.c.0.s8 %v2322
        %v2324 = vlaneseq
        %v2325 = vshrl.u32 %v2324, 7
        %v2326 = vsub.s32 %v2323, %v2325
        %v2327 = vrot.slane %v2320, %v2326
        %v2328 = vcombine.low %v2302, %v2303
        %v2330 = vunpack.c.l.s4 1983009808
        %v2331 = vunpack.c.0.s8 %v2330
        %v2332 = vlaneseq
        %v2333 = vshrl.u32 %v2332, 7
        %v2334 = vsub.s32 %v2331, %v2333
        %v2335 = vrot.slane %v2328, %v2334
        %v2336 = vcombine.low %v2311, %v2319
        %v2337 = vcombine.high %v2311, %v2319
        %v2339 = vunpack.c.l.s4 1934713408
        %v2340 = vunpack.c.0.s8 %v2339
        %v2341 = vlaneseq
        %v2342 = vshrl.u32 %v2341, 7
        %v2343 = vsub.s32 %v2340, %v2342
        %v2344 = vrot.slane %v2336, %v2343
        %v2346 = vunpack.c.l.s4 1934713408
        %v2347 = vunpack.c.0.s8 %v2346
        %v2348 = vlaneseq
        %v2349 = vshrl.u32 %v2348, 7
        %v2350 = vsub.s32 %v2347, %v2349
        %v2351 = vrot.slane %v2337, %v2350
        %v2352 = vcombine.low %v2327, %v2335
        %v2353 = vcombine.high %v2327, %v2335
        %v2355 = vunpack.c.l.s4 1934713408
        %v2356 = vunpack.c.0.s8 %v2355
        %v2357 = vlaneseq
        %v2358 = vshrl.u32 %v2357, 7
        %v2359 = vsub.s32 %v2356, %v2358
        %v2360 = vrot.slane %v2352, %v2359
        %v2362 = vunpack.c.l.s4 1934713408
        %v2363 = vunpack.c.0.s8 %v2362
        %v2364 = vlaneseq
        %v2365 = vshrl.u32 %v2364, 7
        %v2366 = vsub.s32 %v2363, %v2365
        %v2367 = vrot.slane %v2353, %v2366
        %v2368 = vcombine.low %v2344, %v2360
        %v2369 = vcombine.high %v2344, %v2360
        %v2370 = vcombine.low %v2351, %v2367
        %v2371 = vcombine.high %v2351, %v2367
        %2372 = vrot.lane.b32.xlu0 %v2065, 64
        %v2373 = vpop.permute.xlu0 %2372
        %2374 = vrot.lane.b32.xlu0 %v2219, 64
        %v2375 = vpop.permute.xlu0 %2374
        %2376 = vrot.lane.b32.xlu0 %v2221, 64
        %v2377 = vpop.permute.xlu0 %2376
        %2378 = vrot.lane.b32.xlu0 %v2223, 64
        %v2379 = vpop.permute.xlu0 %2378
        %v2384 = vcombine.low %v2373, %v2377
        %v2385 = vcombine.high %v2373, %v2377
        %v2387 = vunpack.c.l.s4 1983009808
        %v2388 = vunpack.c.0.s8 %v2387
        %v2389 = vlaneseq
        %v2390 = vshrl.u32 %v2389, 7
        %v2391 = vsub.s32 %v2388, %v2390
        %v2392 = vrot.slane %v2384, %v2391
        %v2394 = vunpack.c.l.s4 1983009808
        %v2395 = vunpack.c.0.s8 %v2394
        %v2396 = vlaneseq
        %v2397 = vshrl.u32 %v2396, 7
        %v2398 = vsub.s32 %v2395, %v2397
        %v2399 = vrot.slane %v2385, %v2398
        %v2400 = vcombine.low %v2375, %v2379
        %v2401 = vcombine.high %v2375, %v2379
        %v2403 = vunpack.c.l.s4 1983009808
        %v2404 = vunpack.c.0.s8 %v2403
        %v2405 = vlaneseq
        %v2406 = vshrl.u32 %v2405, 7
        %v2407 = vsub.s32 %v2404, %v2406
        %v2408 = vrot.slane %v2400, %v2407
        %v2410 = vunpack.c.l.s4 1983009808
        %v2411 = vunpack.c.0.s8 %v2410
        %v2412 = vlaneseq
        %v2413 = vshrl.u32 %v2412, 7
        %v2414 = vsub.s32 %v2411, %v2413
        %v2415 = vrot.slane %v2401, %v2414
        %v2416 = vcombine.low %v2392, %v2408
        %v2417 = vcombine.high %v2392, %v2408
        %v2419 = vunpack.c.l.s4 1934713408
        %v2420 = vunpack.c.0.s8 %v2419
        %v2421 = vlaneseq
        %v2422 = vshrl.u32 %v2421, 7
        %v2423 = vsub.s32 %v2420, %v2422
        %v2424 = vrot.slane %v2416, %v2423
        %v2426 = vunpack.c.l.s4 1934713408
        %v2427 = vunpack.c.0.s8 %v2426
        %v2428 = vlaneseq
        %v2429 = vshrl.u32 %v2428, 7
        %v2430 = vsub.s32 %v2427, %v2429
        %v2431 = vrot.slane %v2417, %v2430
        %v2432 = vcombine.low %v2399, %v2415
        %v2433 = vcombine.high %v2399, %v2415
        %v2435 = vunpack.c.l.s4 1934713408
        %v2436 = vunpack.c.0.s8 %v2435
        %v2437 = vlaneseq
        %v2438 = vshrl.u32 %v2437, 7
        %v2439 = vsub.s32 %v2436, %v2438
        %v2440 = vrot.slane %v2432, %v2439
        %v2442 = vunpack.c.l.s4 1934713408
        %v2443 = vunpack.c.0.s8 %v2442
        %v2444 = vlaneseq
        %v2445 = vshrl.u32 %v2444, 7
        %v2446 = vsub.s32 %v2443, %v2445
        %v2447 = vrot.slane %v2433, %v2446
        %v2448 = vcombine.high %v2424, 0.0
        %v2449 = vcombine.high %v2431, 0.0
        %v2450 = vcombine.high %v2440, 0.0
        %v2451 = vcombine.high %v2447, 0.0
        %v2452 = vcombine.low %v2424, %v2431
        %v2454 = vunpack.c.l.s4 1983009808
        %v2455 = vunpack.c.0.s8 %v2454
        %v2456 = vlaneseq
        %v2457 = vshrl.u32 %v2456, 7
        %v2458 = vsub.s32 %v2455, %v2457
        %v2459 = vrot.slane %v2452, %v2458
        %v2460 = vcombine.low %v2448, %v2449
        %v2462 = vunpack.c.l.s4 1983009808
        %v2463 = vunpack.c.0.s8 %v2462
        %v2464 = vlaneseq
        %v2465 = vshrl.u32 %v2464, 7
        %v2466 = vsub.s32 %v2463, %v2465
        %v2467 = vrot.slane %v2460, %v2466
        %v2468 = vcombine.low %v2440, %v2447
        %v2470 = vunpack.c.l.s4 1983009808
        %v2471 = vunpack.c.0.s8 %v2470
        %v2472 = vlaneseq
        %v2473 = vshrl.u32 %v2472, 7
        %v2474 = vsub.s32 %v2471, %v2473
        %v2475 = vrot.slane %v2468, %v2474
        %v2476 = vcombine.low %v2450, %v2451
        %v2478 = vunpack.c.l.s4 1983009808
        %v2479 = vunpack.c.0.s8 %v2478
        %v2480 = vlaneseq
        %v2481 = vshrl.u32 %v2480, 7
        %v2482 = vsub.s32 %v2479, %v2481
        %v2483 = vrot.slane %v2476, %v2482
        %v2484 = vcombine.low %v2459, %v2467
        %v2485 = vcombine.high %v2459, %v2467
        %v2487 = vunpack.c.l.s4 1934713408
        %v2488 = vunpack.c.0.s8 %v2487
        %v2489 = vlaneseq
        %v2490 = vshrl.u32 %v2489, 7
        %v2491 = vsub.s32 %v2488, %v2490
        %v2492 = vrot.slane %v2484, %v2491
        %v2494 = vunpack.c.l.s4 1934713408
        %v2495 = vunpack.c.0.s8 %v2494
        %v2496 = vlaneseq
        %v2497 = vshrl.u32 %v2496, 7
        %v2498 = vsub.s32 %v2495, %v2497
        %v2499 = vrot.slane %v2485, %v2498
        %v2500 = vcombine.low %v2475, %v2483
        %v2501 = vcombine.high %v2475, %v2483
        %v2503 = vunpack.c.l.s4 1934713408
        %v2504 = vunpack.c.0.s8 %v2503
        %v2505 = vlaneseq
        %v2506 = vshrl.u32 %v2505, 7
        %v2507 = vsub.s32 %v2504, %v2506
        %v2508 = vrot.slane %v2500, %v2507
        %v2510 = vunpack.c.l.s4 1934713408
        %v2511 = vunpack.c.0.s8 %v2510
        %v2512 = vlaneseq
        %v2513 = vshrl.u32 %v2512, 7
        %v2514 = vsub.s32 %v2511, %v2513
        %v2515 = vrot.slane %v2501, %v2514
        %v2516 = vcombine.low %v2492, %v2508
        %v2517 = vcombine.high %v2492, %v2508
        %v2518 = vcombine.low %v2499, %v2515
        %v2519 = vcombine.high %v2499, %v2515
        %v2520 = vpack.c.bf16 %v2213, %v2213
        %v2521 = vpack.c.bf16 %v2214, %v2214
        %v2522 = vpack.c.bf16 %v2215, %v2215
        %v2523 = vpack.c.bf16 %v2216, %v2216
        %v2524 = vpack.c.bf16 %v2368, %v2368
        %v2525 = vpack.c.bf16 %v2369, %v2369
        %v2526 = vpack.c.bf16 %v2370, %v2370
        %v2527 = vpack.c.bf16 %v2371, %v2371
        %v2529 = vsel %vm1107, %v2520, 0
        %v2532 = vsel %vm1107, %v2524, 0
        %2534 = vmatprep.subr.bf16.mxu0 0
        %2535 = vmatpush1.bf16.xpose.msra.mxu0 %v2532
        %2536 = vmatprep.subr.bf16.mxu0 0
        %2537 = vmatpush1.bf16.xpose.msra.mxu0 0
        %2538 = vmatprep.subr.bf16.mxu0 0
        %2539 = vmatpush1.bf16.xpose.msra.mxu0 0
        %2540 = vmatprep.subr.bf16.mxu0 0
        %2541 = vmatpush1.bf16.xpose.msra.mxu0 0
        %2542 = vmatprep.subr.bf16.mxu0 0
        %2543 = vmatpush1.bf16.xpose.msra.mxu0 0
        %2544 = vmatprep.subr.bf16.mxu0 0
        %2545 = vmatpush1.bf16.xpose.msra.mxu0 0
        %2546 = vmatprep.subr.bf16.mxu0 0
        %2547 = vmatpush1.bf16.xpose.msra.mxu0 0
        %2548 = vmatprep.subr.bf16.mxu0 0
        %2549 = vmatpush1.bf16.xpose.msra.mxu0 0
        %2550 = vmatprep.subr.bf16.mxu0 0
        %2551 = vmatpush1.bf16.xpose.msra.mxu0 0
        %2552 = vmatprep.subr.bf16.mxu0 0
        %2553 = vmatpush1.bf16.xpose.msra.mxu0 0
        %2554 = vmatprep.subr.bf16.mxu0 0
        %2555 = vmatpush1.bf16.xpose.msra.mxu0 0
        %2556 = vmatprep.subr.bf16.mxu0 0
        %2557 = vmatpush1.bf16.xpose.msra.mxu0 0
        %2558 = vmatprep.subr.bf16.mxu0 0
        %2559 = vmatpush1.bf16.xpose.msra.mxu0 0
        %2560 = vmatprep.subr.bf16.mxu0 0
        %2561 = vmatpush1.bf16.xpose.msra.mxu0 0
        %2562 = vmatprep.subr.bf16.mxu0 0
        %2563 = vmatpush1.bf16.xpose.msra.mxu0 0
        %2564 = vmatprep.subr.bf16.mxu0 0
        %2565 = vmatpush1.bf16.xpose.msra.mxu0 0
        %2566 = vmatprep.mubr.bf16.mxu0 0
        %2567 = vmatmul.mubr.bf16.gmra.mrb[0].mxu0 %v2529
        %v2568 = vpop.f32.mrb[0].mxu0
        %v2569 = vadd.f32 0.0, %v2568
        %v2570 = vpop.f32.mrb[0].mxu0
        %v2571 = vpop.f32.mrb[0].mxu0
        %v2572 = vpop.f32.mrb[0].mxu0
        %2573 = vdwg.mxu0
        %v2575 = vsel %vm1107, %v2521, 0
        %v2578 = vsel %vm1107, %v2525, 0
        %2580 = vmatprep.subr.bf16.mxu0 0
        %2581 = vmatpush1.bf16.xpose.msra.mxu0 %v2578
        %2582 = vmatprep.subr.bf16.mxu0 0
        %2583 = vmatpush1.bf16.xpose.msra.mxu0 0
        %2584 = vmatprep.subr.bf16.mxu0 0
        %2585 = vmatpush1.bf16.xpose.msra.mxu0 0
        %2586 = vmatprep.subr.bf16.mxu0 0
        %2587 = vmatpush1.bf16.xpose.msra.mxu0 0
        %2588 = vmatprep.subr.bf16.mxu0 0
        %2589 = vmatpush1.bf16.xpose.msra.mxu0 0
        %2590 = vmatprep.subr.bf16.mxu0 0
        %2591 = vmatpush1.bf16.xpose.msra.mxu0 0
        %2592 = vmatprep.subr.bf16.mxu0 0
        %2593 = vmatpush1.bf16.xpose.msra.mxu0 0
        %2594 = vmatprep.subr.bf16.mxu0 0
        %2595 = vmatpush1.bf16.xpose.msra.mxu0 0
        %2596 = vmatprep.subr.bf16.mxu0 0
        %2597 = vmatpush1.bf16.xpose.msra.mxu0 0
        %2598 = vmatprep.subr.bf16.mxu0 0
        %2599 = vmatpush1.bf16.xpose.msra.mxu0 0
        %2600 = vmatprep.subr.bf16.mxu0 0
        %2601 = vmatpush1.bf16.xpose.msra.mxu0 0
        %2602 = vmatprep.subr.bf16.mxu0 0
        %2603 = vmatpush1.bf16.xpose.msra.mxu0 0
        %2604 = vmatprep.subr.bf16.mxu0 0
        %2605 = vmatpush1.bf16.xpose.msra.mxu0 0
        %2606 = vmatprep.subr.bf16.mxu0 0
        %2607 = vmatpush1.bf16.xpose.msra.mxu0 0
        %2608 = vmatprep.subr.bf16.mxu0 0
        %2609 = vmatpush1.bf16.xpose.msra.mxu0 0
        %2610 = vmatprep.subr.bf16.mxu0 0
        %2611 = vmatpush1.bf16.xpose.msra.mxu0 0
        %2612 = vmatprep.mubr.bf16.mxu0 0
        %2613 = vmatmul.mubr.bf16.gmra.mrb[0].mxu0 %v2575
        %v2614 = vpop.f32.mrb[0].mxu0
        %v2615 = vadd.f32 0.0, %v2614
        %v2616 = vpop.f32.mrb[0].mxu0
        %v2617 = vpop.f32.mrb[0].mxu0
        %v2618 = vpop.f32.mrb[0].mxu0
        %2619 = vdwg.mxu0
        %v2621 = vsel %vm1107, %v2522, 0
        %v2624 = vsel %vm1107, %v2526, 0
        %2626 = vmatprep.subr.bf16.mxu0 0
        %2627 = vmatpush1.bf16.xpose.msra.mxu0 %v2624
        %2628 = vmatprep.subr.bf16.mxu0 0
        %2629 = vmatpush1.bf16.xpose.msra.mxu0 0
        %2630 = vmatprep.subr.bf16.mxu0 0
        %2631 = vmatpush1.bf16.xpose.msra.mxu0 0
        %2632 = vmatprep.subr.bf16.mxu0 0
        %2633 = vmatpush1.bf16.xpose.msra.mxu0 0
        %2634 = vmatprep.subr.bf16.mxu0 0
        %2635 = vmatpush1.bf16.xpose.msra.mxu0 0
        %2636 = vmatprep.subr.bf16.mxu0 0
        %2637 = vmatpush1.bf16.xpose.msra.mxu0 0
        %2638 = vmatprep.subr.bf16.mxu0 0
        %2639 = vmatpush1.bf16.xpose.msra.mxu0 0
        %2640 = vmatprep.subr.bf16.mxu0 0
        %2641 = vmatpush1.bf16.xpose.msra.mxu0 0
        %2642 = vmatprep.subr.bf16.mxu0 0
        %2643 = vmatpush1.bf16.xpose.msra.mxu0 0
        %2644 = vmatprep.subr.bf16.mxu0 0
        %2645 = vmatpush1.bf16.xpose.msra.mxu0 0
        %2646 = vmatprep.subr.bf16.mxu0 0
        %2647 = vmatpush1.bf16.xpose.msra.mxu0 0
        %2648 = vmatprep.subr.bf16.mxu0 0
        %2649 = vmatpush1.bf16.xpose.msra.mxu0 0
        %2650 = vmatprep.subr.bf16.mxu0 0
        %2651 = vmatpush1.bf16.xpose.msra.mxu0 0
        %2652 = vmatprep.subr.bf16.mxu0 0
        %2653 = vmatpush1.bf16.xpose.msra.mxu0 0
        %2654 = vmatprep.subr.bf16.mxu0 0
        %2655 = vmatpush1.bf16.xpose.msra.mxu0 0
        %2656 = vmatprep.subr.bf16.mxu0 0
        %2657 = vmatpush1.bf16.xpose.msra.mxu0 0
        %2658 = vmatprep.mubr.bf16.mxu0 0
        %2659 = vmatmul.mubr.bf16.gmra.mrb[0].mxu0 %v2621
        %v2660 = vpop.f32.mrb[0].mxu0
        %v2661 = vadd.f32 0.0, %v2660
        %v2662 = vpop.f32.mrb[0].mxu0
        %v2663 = vpop.f32.mrb[0].mxu0
        %v2664 = vpop.f32.mrb[0].mxu0
        %2665 = vdwg.mxu0
        %v2667 = vsel %vm1107, %v2523, 0
        %v2670 = vsel %vm1107, %v2527, 0
        %2672 = vmatprep.subr.bf16.mxu0 0
        %2673 = vmatpush1.bf16.xpose.msra.mxu0 %v2670
        %2674 = vmatprep.subr.bf16.mxu0 0
        %2675 = vmatpush1.bf16.xpose.msra.mxu0 0
        %2676 = vmatprep.subr.bf16.mxu0 0
        %2677 = vmatpush1.bf16.xpose.msra.mxu0 0
        %2678 = vmatprep.subr.bf16.mxu0 0
        %2679 = vmatpush1.bf16.xpose.msra.mxu0 0
        %2680 = vmatprep.subr.bf16.mxu0 0
        %2681 = vmatpush1.bf16.xpose.msra.mxu0 0
        %2682 = vmatprep.subr.bf16.mxu0 0
        %2683 = vmatpush1.bf16.xpose.msra.mxu0 0
        %2684 = vmatprep.subr.bf16.mxu0 0
        %2685 = vmatpush1.bf16.xpose.msra.mxu0 0
        %2686 = vmatprep.subr.bf16.mxu0 0
        %2687 = vmatpush1.bf16.xpose.msra.mxu0 0
        %2688 = vmatprep.subr.bf16.mxu0 0
        %2689 = vmatpush1.bf16.xpose.msra.mxu0 0
        %2690 = vmatprep.subr.bf16.mxu0 0
        %2691 = vmatpush1.bf16.xpose.msra.mxu0 0
        %2692 = vmatprep.subr.bf16.mxu0 0
        %2693 = vmatpush1.bf16.xpose.msra.mxu0 0
        %2694 = vmatprep.subr.bf16.mxu0 0
        %2695 = vmatpush1.bf16.xpose.msra.mxu0 0
        %2696 = vmatprep.subr.bf16.mxu0 0
        %2697 = vmatpush1.bf16.xpose.msra.mxu0 0
        %2698 = vmatprep.subr.bf16.mxu0 0
        %2699 = vmatpush1.bf16.xpose.msra.mxu0 0
        %2700 = vmatprep.subr.bf16.mxu0 0
        %2701 = vmatpush1.bf16.xpose.msra.mxu0 0
        %2702 = vmatprep.subr.bf16.mxu0 0
        %2703 = vmatpush1.bf16.xpose.msra.mxu0 0
        %2704 = vmatprep.mubr.bf16.mxu0 0
        %2705 = vmatmul.mubr.bf16.gmra.mrb[0].mxu0 %v2667
        %v2706 = vpop.f32.mrb[0].mxu0
        %v2707 = vadd.f32 0.0, %v2706
        %v2708 = vpop.f32.mrb[0].mxu0
        %v2709 = vpop.f32.mrb[0].mxu0
        %v2710 = vpop.f32.mrb[0].mxu0
        %2711 = vdwg.mxu0
        %v2712 = vsel %vm1293, %v2569, -1e+30
        %v2713 = vsel %vm1293, %v2615, -1e+30
        %v2714 = vsel %vm1293, %v2661, -1e+30
        %v2715 = vsel %vm1293, %v2707, -1e+30
        %v2716 = vsel %vm1107, %v2712, -inf
        %2717 = vmax.xlane.f32.xlu0 %v2716
        %v2718 = vpop.xlane.xlu0 %2717
        %v2719 = vsel %vm1107, %v2713, -inf
        %2720 = vmax.xlane.f32.xlu0 %v2719
        %v2721 = vpop.xlane.xlu0 %2720
        %v2722 = vsel %vm1107, %v2714, -inf
        %2723 = vmax.xlane.f32.xlu0 %v2722
        %v2724 = vpop.xlane.xlu0 %2723
        %v2725 = vsel %vm1107, %v2715, -inf
        %2726 = vmax.xlane.f32.xlu0 %v2725
        %v2727 = vpop.xlane.xlu0 %2726
        %v2728 = vsub.f32 %v2712, %v2718
        %v2729 = vsub.f32 %v2713, %v2721
        %v2730 = vsub.f32 %v2714, %v2724
        %v2731 = vsub.f32 %v2715, %v2727
        %v2732 = vmul.f32 %v2728, 1.442695
        %v2733 = vpow.pop %v2732
        %v2734 = vmul.f32 %v2729, 1.442695
        %v2735 = vpow.pop %v2734
        %v2736 = vmul.f32 %v2730, 1.442695
        %v2737 = vpow.pop %v2736
        %v2738 = vmul.f32 %v2731, 1.442695
        %v2739 = vpow.pop %v2738
        %v2740 = vsel %vm1107, %v2733, 0.0
        %2741 = vadd.xlane.f32.xlu0 %v2740
        %v2742 = vpop.xlane.xlu0 %2741
        %v2743 = vsel %vm1107, %v2735, 0.0
        %2744 = vadd.xlane.f32.xlu0 %v2743
        %v2745 = vpop.xlane.xlu0 %2744
        %v2746 = vsel %vm1107, %v2737, 0.0
        %2747 = vadd.xlane.f32.xlu0 %v2746
        %v2748 = vpop.xlane.xlu0 %2747
        %v2749 = vsel %vm1107, %v2739, 0.0
        %2750 = vadd.xlane.f32.xlu0 %v2749
        %v2751 = vpop.xlane.xlu0 %2750
        %v2752 = vrcp.pop %v2742
        %v2753 = vrcp.pop %v2745
        %v2754 = vrcp.pop %v2748
        %v2755 = vrcp.pop %v2751
        %v2756 = vmul.f32 %v2733, %v2752
        %v2757 = vmul.f32 %v2735, %v2753
        %v2758 = vmul.f32 %v2737, %v2754
        %v2759 = vmul.f32 %v2739, %v2755
        %v2760 = vpack.c.bf16 %v2756, %v2756
        %v2761 = vpack.c.bf16 %v2757, %v2757
        %v2762 = vpack.c.bf16 %v2758, %v2758
        %v2763 = vpack.c.bf16 %v2759, %v2759
        %v2764 = vpack.c.bf16 %v2516, %v2516
        %v2765 = vpack.c.bf16 %v2517, %v2517
        %v2766 = vpack.c.bf16 %v2518, %v2518
        %v2767 = vpack.c.bf16 %v2519, %v2519
        %v2769 = vsel %vm1107, %v2760, 0
        %v2772 = vsel %vm1353, %v2764, 0
        %2774 = vmatprep.subr.bf16.mxu0 0
        %2775 = vmatpush1.bf16.msra.mxu0 %v2772
        %2776 = vmatprep.subr.bf16.mxu0 0
        %2777 = vmatpush1.bf16.msra.mxu0 0
        %2778 = vmatprep.subr.bf16.mxu0 0
        %2779 = vmatpush1.bf16.msra.mxu0 0
        %2780 = vmatprep.subr.bf16.mxu0 0
        %2781 = vmatpush1.bf16.msra.mxu0 0
        %2782 = vmatprep.subr.bf16.mxu0 0
        %2783 = vmatpush1.bf16.msra.mxu0 0
        %2784 = vmatprep.subr.bf16.mxu0 0
        %2785 = vmatpush1.bf16.msra.mxu0 0
        %2786 = vmatprep.subr.bf16.mxu0 0
        %2787 = vmatpush1.bf16.msra.mxu0 0
        %2788 = vmatprep.subr.bf16.mxu0 0
        %2789 = vmatpush1.bf16.msra.mxu0 0
        %2790 = vmatprep.subr.bf16.mxu0 0
        %2791 = vmatpush1.bf16.msra.mxu0 0
        %2792 = vmatprep.subr.bf16.mxu0 0
        %2793 = vmatpush1.bf16.msra.mxu0 0
        %2794 = vmatprep.subr.bf16.mxu0 0
        %2795 = vmatpush1.bf16.msra.mxu0 0
        %2796 = vmatprep.subr.bf16.mxu0 0
        %2797 = vmatpush1.bf16.msra.mxu0 0
        %2798 = vmatprep.subr.bf16.mxu0 0
        %2799 = vmatpush1.bf16.msra.mxu0 0
        %2800 = vmatprep.subr.bf16.mxu0 0
        %2801 = vmatpush1.bf16.msra.mxu0 0
        %2802 = vmatprep.subr.bf16.mxu0 0
        %2803 = vmatpush1.bf16.msra.mxu0 0
        %2804 = vmatprep.subr.bf16.mxu0 0
        %2805 = vmatpush1.bf16.msra.mxu0 0
        %2806 = vmatprep.mubr.bf16.mxu0 0
        %2807 = vmatmul.mubr.bf16.gmra.mrb[0].mxu0 %v2769
        %v2808 = vpop.f32.mrb[0].mxu0
        %v2809 = vadd.f32 0.0, %v2808
        %v2810 = vpop.f32.mrb[0].mxu0
        %v2811 = vpop.f32.mrb[0].mxu0
        %v2812 = vpop.f32.mrb[0].mxu0
        %2813 = vdwg.mxu0
        %v2815 = vsel %vm1107, %v2761, 0
        %v2818 = vsel %vm1353, %v2765, 0
        %2820 = vmatprep.subr.bf16.mxu0 0
        %2821 = vmatpush1.bf16.msra.mxu0 %v2818
        %2822 = vmatprep.subr.bf16.mxu0 0
        %2823 = vmatpush1.bf16.msra.mxu0 0
        %2824 = vmatprep.subr.bf16.mxu0 0
        %2825 = vmatpush1.bf16.msra.mxu0 0
        %2826 = vmatprep.subr.bf16.mxu0 0
        %2827 = vmatpush1.bf16.msra.mxu0 0
        %2828 = vmatprep.subr.bf16.mxu0 0
        %2829 = vmatpush1.bf16.msra.mxu0 0
        %2830 = vmatprep.subr.bf16.mxu0 0
        %2831 = vmatpush1.bf16.msra.mxu0 0
        %2832 = vmatprep.subr.bf16.mxu0 0
        %2833 = vmatpush1.bf16.msra.mxu0 0
        %2834 = vmatprep.subr.bf16.mxu0 0
        %2835 = vmatpush1.bf16.msra.mxu0 0
        %2836 = vmatprep.subr.bf16.mxu0 0
        %2837 = vmatpush1.bf16.msra.mxu0 0
        %2838 = vmatprep.subr.bf16.mxu0 0
        %2839 = vmatpush1.bf16.msra.mxu0 0
        %2840 = vmatprep.subr.bf16.mxu0 0
        %2841 = vmatpush1.bf16.msra.mxu0 0
        %2842 = vmatprep.subr.bf16.mxu0 0
        %2843 = vmatpush1.bf16.msra.mxu0 0
        %2844 = vmatprep.subr.bf16.mxu0 0
        %2845 = vmatpush1.bf16.msra.mxu0 0
        %2846 = vmatprep.subr.bf16.mxu0 0
        %2847 = vmatpush1.bf16.msra.mxu0 0
        %2848 = vmatprep.subr.bf16.mxu0 0
        %2849 = vmatpush1.bf16.msra.mxu0 0
        %2850 = vmatprep.subr.bf16.mxu0 0
        %2851 = vmatpush1.bf16.msra.mxu0 0
        %2852 = vmatprep.mubr.bf16.mxu0 0
        %2853 = vmatmul.mubr.bf16.gmra.mrb[0].mxu0 %v2815
        %v2854 = vpop.f32.mrb[0].mxu0
        %v2855 = vadd.f32 0.0, %v2854
        %v2856 = vpop.f32.mrb[0].mxu0
        %v2857 = vpop.f32.mrb[0].mxu0
        %v2858 = vpop.f32.mrb[0].mxu0
        %2859 = vdwg.mxu0
        %v2861 = vsel %vm1107, %v2762, 0
        %v2864 = vsel %vm1353, %v2766, 0
        %2866 = vmatprep.subr.bf16.mxu0 0
        %2867 = vmatpush1.bf16.msra.mxu0 %v2864
        %2868 = vmatprep.subr.bf16.mxu0 0
        %2869 = vmatpush1.bf16.msra.mxu0 0
        %2870 = vmatprep.subr.bf16.mxu0 0
        %2871 = vmatpush1.bf16.msra.mxu0 0
        %2872 = vmatprep.subr.bf16.mxu0 0
        %2873 = vmatpush1.bf16.msra.mxu0 0
        %2874 = vmatprep.subr.bf16.mxu0 0
        %2875 = vmatpush1.bf16.msra.mxu0 0
        %2876 = vmatprep.subr.bf16.mxu0 0
        %2877 = vmatpush1.bf16.msra.mxu0 0
        %2878 = vmatprep.subr.bf16.mxu0 0
        %2879 = vmatpush1.bf16.msra.mxu0 0
        %2880 = vmatprep.subr.bf16.mxu0 0
        %2881 = vmatpush1.bf16.msra.mxu0 0
        %2882 = vmatprep.subr.bf16.mxu0 0
        %2883 = vmatpush1.bf16.msra.mxu0 0
        %2884 = vmatprep.subr.bf16.mxu0 0
        %2885 = vmatpush1.bf16.msra.mxu0 0
        %2886 = vmatprep.subr.bf16.mxu0 0
        %2887 = vmatpush1.bf16.msra.mxu0 0
        %2888 = vmatprep.subr.bf16.mxu0 0
        %2889 = vmatpush1.bf16.msra.mxu0 0
        %2890 = vmatprep.subr.bf16.mxu0 0
        %2891 = vmatpush1.bf16.msra.mxu0 0
        %2892 = vmatprep.subr.bf16.mxu0 0
        %2893 = vmatpush1.bf16.msra.mxu0 0
        %2894 = vmatprep.subr.bf16.mxu0 0
        %2895 = vmatpush1.bf16.msra.mxu0 0
        %2896 = vmatprep.subr.bf16.mxu0 0
        %2897 = vmatpush1.bf16.msra.mxu0 0
        %2898 = vmatprep.mubr.bf16.mxu0 0
        %2899 = vmatmul.mubr.bf16.gmra.mrb[0].mxu0 %v2861
        %v2900 = vpop.f32.mrb[0].mxu0
        %v2901 = vadd.f32 0.0, %v2900
        %v2902 = vpop.f32.mrb[0].mxu0
        %v2903 = vpop.f32.mrb[0].mxu0
        %v2904 = vpop.f32.mrb[0].mxu0
        %2905 = vdwg.mxu0
        %v2907 = vsel %vm1107, %v2763, 0
        %v2910 = vsel %vm1353, %v2767, 0
        %2912 = vmatprep.subr.bf16.mxu0 0
        %2913 = vmatpush1.bf16.msra.mxu0 %v2910
        %2914 = vmatprep.subr.bf16.mxu0 0
        %2915 = vmatpush1.bf16.msra.mxu0 0
        %2916 = vmatprep.subr.bf16.mxu0 0
        %2917 = vmatpush1.bf16.msra.mxu0 0
        %2918 = vmatprep.subr.bf16.mxu0 0
        %2919 = vmatpush1.bf16.msra.mxu0 0
        %2920 = vmatprep.subr.bf16.mxu0 0
        %2921 = vmatpush1.bf16.msra.mxu0 0
        %2922 = vmatprep.subr.bf16.mxu0 0
        %2923 = vmatpush1.bf16.msra.mxu0 0
        %2924 = vmatprep.subr.bf16.mxu0 0
        %2925 = vmatpush1.bf16.msra.mxu0 0
        %2926 = vmatprep.subr.bf16.mxu0 0
        %2927 = vmatpush1.bf16.msra.mxu0 0
        %2928 = vmatprep.subr.bf16.mxu0 0
        %2929 = vmatpush1.bf16.msra.mxu0 0
        %2930 = vmatprep.subr.bf16.mxu0 0
        %2931 = vmatpush1.bf16.msra.mxu0 0
        %2932 = vmatprep.subr.bf16.mxu0 0
        %2933 = vmatpush1.bf16.msra.mxu0 0
        %2934 = vmatprep.subr.bf16.mxu0 0
        %2935 = vmatpush1.bf16.msra.mxu0 0
        %2936 = vmatprep.subr.bf16.mxu0 0
        %2937 = vmatpush1.bf16.msra.mxu0 0
        %2938 = vmatprep.subr.bf16.mxu0 0
        %2939 = vmatpush1.bf16.msra.mxu0 0
        %2940 = vmatprep.subr.bf16.mxu0 0
        %2941 = vmatpush1.bf16.msra.mxu0 0
        %2942 = vmatprep.subr.bf16.mxu0 0
        %2943 = vmatpush1.bf16.msra.mxu0 0
        %2944 = vmatprep.mubr.bf16.mxu0 0
        %2945 = vmatmul.mubr.bf16.gmra.mrb[0].mxu0 %v2907
        %v2946 = vpop.f32.mrb[0].mxu0
        %v2947 = vadd.f32 0.0, %v2946
        %v2948 = vpop.f32.mrb[0].mxu0
        %v2949 = vpop.f32.mrb[0].mxu0
        %v2950 = vpop.f32.mrb[0].mxu0
        %2951 = vdwg.mxu0
        %v2952 = vcombine.low %v2809, %v2901
        %v2953 = vcombine.high %v2809, %v2901
        %v2955 = vunpack.c.l.s4 1983009808
        %v2956 = vunpack.c.0.s8 %v2955
        %v2957 = vlaneseq
        %v2958 = vshrl.u32 %v2957, 7
        %v2959 = vsub.s32 %v2956, %v2958
        %v2960 = vrot.slane %v2952, %v2959
        %v2962 = vunpack.c.l.s4 1983009808
        %v2963 = vunpack.c.0.s8 %v2962
        %v2964 = vlaneseq
        %v2965 = vshrl.u32 %v2964, 7
        %v2966 = vsub.s32 %v2963, %v2965
        %v2967 = vrot.slane %v2953, %v2966
        %v2968 = vcombine.low %v2855, %v2947
        %v2969 = vcombine.high %v2855, %v2947
        %v2971 = vunpack.c.l.s4 1983009808
        %v2972 = vunpack.c.0.s8 %v2971
        %v2973 = vlaneseq
        %v2974 = vshrl.u32 %v2973, 7
        %v2975 = vsub.s32 %v2972, %v2974
        %v2976 = vrot.slane %v2968, %v2975
        %v2978 = vunpack.c.l.s4 1983009808
        %v2979 = vunpack.c.0.s8 %v2978
        %v2980 = vlaneseq
        %v2981 = vshrl.u32 %v2980, 7
        %v2982 = vsub.s32 %v2979, %v2981
        %v2983 = vrot.slane %v2969, %v2982
        %v2984 = vcombine.low %v2960, %v2976
        %v2985 = vcombine.high %v2960, %v2976
        %v2987 = vunpack.c.l.s4 1934713408
        %v2988 = vunpack.c.0.s8 %v2987
        %v2989 = vlaneseq
        %v2990 = vshrl.u32 %v2989, 7
        %v2991 = vsub.s32 %v2988, %v2990
        %v2992 = vrot.slane %v2984, %v2991
        %v2994 = vunpack.c.l.s4 1934713408
        %v2995 = vunpack.c.0.s8 %v2994
        %v2996 = vlaneseq
        %v2997 = vshrl.u32 %v2996, 7
        %v2998 = vsub.s32 %v2995, %v2997
        %v2999 = vrot.slane %v2985, %v2998
        %v3000 = vcombine.low %v2967, %v2983
        %v3001 = vcombine.high %v2967, %v2983
        %v3003 = vunpack.c.l.s4 1934713408
        %v3004 = vunpack.c.0.s8 %v3003
        %v3005 = vlaneseq
        %v3006 = vshrl.u32 %v3005, 7
        %v3007 = vsub.s32 %v3004, %v3006
        %v3008 = vrot.slane %v3000, %v3007
        %v3010 = vunpack.c.l.s4 1934713408
        %v3011 = vunpack.c.0.s8 %v3010
        %v3012 = vlaneseq
        %v3013 = vshrl.u32 %v3012, 7
        %v3014 = vsub.s32 %v3011, %v3013
        %v3015 = vrot.slane %v3001, %v3014
        %v3016 = vcombine.high %v2992, 0.0
        %v3017 = vcombine.high %v2999, 0.0
        %v3018 = vcombine.high %v3008, 0.0
        %v3019 = vcombine.high %v3015, 0.0
        %v3020 = vcombine.low %v2992, %v2999
        %v3022 = vunpack.c.l.s4 1983009808
        %v3023 = vunpack.c.0.s8 %v3022
        %v3024 = vlaneseq
        %v3025 = vshrl.u32 %v3024, 7
        %v3026 = vsub.s32 %v3023, %v3025
        %v3027 = vrot.slane %v3020, %v3026
        %v3028 = vcombine.low %v3016, %v3017
        %v3030 = vunpack.c.l.s4 1983009808
        %v3031 = vunpack.c.0.s8 %v3030
        %v3032 = vlaneseq
        %v3033 = vshrl.u32 %v3032, 7
        %v3034 = vsub.s32 %v3031, %v3033
        %v3035 = vrot.slane %v3028, %v3034
        %v3036 = vcombine.low %v3008, %v3015
        %v3038 = vunpack.c.l.s4 1983009808
        %v3039 = vunpack.c.0.s8 %v3038
        %v3040 = vlaneseq
        %v3041 = vshrl.u32 %v3040, 7
        %v3042 = vsub.s32 %v3039, %v3041
        %v3043 = vrot.slane %v3036, %v3042
        %v3044 = vcombine.low %v3018, %v3019
        %v3046 = vunpack.c.l.s4 1983009808
        %v3047 = vunpack.c.0.s8 %v3046
        %v3048 = vlaneseq
        %v3049 = vshrl.u32 %v3048, 7
        %v3050 = vsub.s32 %v3047, %v3049
        %v3051 = vrot.slane %v3044, %v3050
        %v3052 = vcombine.low %v3027, %v3035
        %v3053 = vcombine.high %v3027, %v3035
        %v3055 = vunpack.c.l.s4 1934713408
        %v3056 = vunpack.c.0.s8 %v3055
        %v3057 = vlaneseq
        %v3058 = vshrl.u32 %v3057, 7
        %v3059 = vsub.s32 %v3056, %v3058
        %v3060 = vrot.slane %v3052, %v3059
        %v3062 = vunpack.c.l.s4 1934713408
        %v3063 = vunpack.c.0.s8 %v3062
        %v3064 = vlaneseq
        %v3065 = vshrl.u32 %v3064, 7
        %v3066 = vsub.s32 %v3063, %v3065
        %v3067 = vrot.slane %v3053, %v3066
        %v3068 = vcombine.low %v3043, %v3051
        %v3069 = vcombine.high %v3043, %v3051
        %v3071 = vunpack.c.l.s4 1934713408
        %v3072 = vunpack.c.0.s8 %v3071
        %v3073 = vlaneseq
        %v3074 = vshrl.u32 %v3073, 7
        %v3075 = vsub.s32 %v3072, %v3074
        %v3076 = vrot.slane %v3068, %v3075
        %v3078 = vunpack.c.l.s4 1934713408
        %v3079 = vunpack.c.0.s8 %v3078
        %v3080 = vlaneseq
        %v3081 = vshrl.u32 %v3080, 7
        %v3082 = vsub.s32 %v3079, %v3081
        %v3083 = vrot.slane %v3069, %v3082
        %v3084 = vcombine.low %v3060, %v3076
        %v3085 = vcombine.high %v3060, %v3076
        %v3086 = vcombine.low %v3067, %v3083
        %v3087 = vcombine.high %v3067, %v3083
        %3089 = vrot.lane.b32.xlu0 %v3085, 8
        %v3090 = vpop.permute.xlu0 %3089
        %3093 = vrot.lane.b32.xlu0 %v3086, 16
        %v3094 = vpop.permute.xlu0 %3093
        %3097 = vrot.lane.b32.xlu0 %v3087, 24
        %v3098 = vpop.permute.xlu0 %3097
        %v3100 = vsel %vm1107, %v3084, %v3090
        %v3101 = vsel %vm1684, %v3100, %v3094
        %v3102 = vsel %vm1686, %v3101, %v3098
        %v3103 = vpack.c.bf16 %v3102, %v3102
        %s3104 = scalar_lea.vmem %s3, 16
        %v3105 = vld [vmem:[%s3104] sm:$0xf]
        %v3106 = vld [vmem:[%s3104 + $0x4] sm:$0xf]
        %v3107 = vld [vmem:[%s3104 + $0x8] sm:$0xf]
        %v3108 = vld [vmem:[%s3104 + $0xc] sm:$0xf]
        %s3109 = scalar_lea.vmem %s4, 1
        %v3110 = vld [vmem:[%s3109] sm:$0x1]
        %v3112 = vlaneseq
        %v3113 = vshrl.u32 %v3112, 7
        %v3114 = vsub.s32 0, %v3113
        %v3115 = vrot.slane %v3110, %v3114
        %v3121 = vunpack.c.l.b16 %v3105
        %v3122 = vunpack.c.l.b16 %v3106
        %v3123 = vunpack.c.l.b16 %v3107
        %v3124 = vunpack.c.l.b16 %v3108
        %v3125 = vpack.c.b16 %v3122, %v3121
        %v3126 = vpack.c.b16 %v3124, %v3123
        %v3130 = vsel %vm553, %v3103, 0
        %3132 = vmatprep.subr.bf16.mxu0 0
        %3133 = vmatpush1.bf16.msra.mxu0 %v3125
        %3134 = vmatprep.subr.bf16.mxu0 0
        %3135 = vmatpush1.bf16.msra.mxu0 %v3126
        %3136 = vmatprep.subr.bf16.mxu0 0
        %3137 = vmatpush1.bf16.msra.mxu0 0
        %3138 = vmatprep.subr.bf16.mxu0 0
        %3139 = vmatpush1.bf16.msra.mxu0 0
        %3140 = vmatprep.subr.bf16.mxu0 0
        %3141 = vmatpush1.bf16.msra.mxu0 0
        %3142 = vmatprep.subr.bf16.mxu0 0
        %3143 = vmatpush1.bf16.msra.mxu0 0
        %3144 = vmatprep.subr.bf16.mxu0 0
        %3145 = vmatpush1.bf16.msra.mxu0 0
        %3146 = vmatprep.subr.bf16.mxu0 0
        %3147 = vmatpush1.bf16.msra.mxu0 0
        %3148 = vmatprep.subr.bf16.mxu0 0
        %3149 = vmatpush1.bf16.msra.mxu0 0
        %3150 = vmatprep.subr.bf16.mxu0 0
        %3151 = vmatpush1.bf16.msra.mxu0 0
        %3152 = vmatprep.subr.bf16.mxu0 0
        %3153 = vmatpush1.bf16.msra.mxu0 0
        %3154 = vmatprep.subr.bf16.mxu0 0
        %3155 = vmatpush1.bf16.msra.mxu0 0
        %3156 = vmatprep.subr.bf16.mxu0 0
        %3157 = vmatpush1.bf16.msra.mxu0 0
        %3158 = vmatprep.subr.bf16.mxu0 0
        %3159 = vmatpush1.bf16.msra.mxu0 0
        %3160 = vmatprep.subr.bf16.mxu0 0
        %3161 = vmatpush1.bf16.msra.mxu0 0
        %3162 = vmatprep.subr.bf16.mxu0 0
        %3163 = vmatpush1.bf16.msra.mxu0 0
        %3164 = vmatprep.mubr.bf16.mxu0 0
        %3165 = vmatmul.mubr.bf16.gmra.mrb[0].mxu0 %v3130
        %v3166 = vpop.f32.mrb[0].mxu0
        %v3167 = vadd.f32 %v3115, %v3166
        %v3168 = vpop.f32.mrb[0].mxu0
        %v3169 = vpop.f32.mrb[0].mxu0
        %v3170 = vpop.f32.mrb[0].mxu0
        %3171 = vdwg.mxu0
        %v3172 = vadd.f32 %v1969, %v3167
        %s3173 = scalar_lea.vmem %s11, 1
        %v3174 = vld [vmem:[%s3173] sm:$0x1]
        %s3175 = scalar_lea.vmem %s12, 1
        %v3176 = vld [vmem:[%s3175] sm:$0x1]
        %v3177 = vsel %vm553, %v3172, 0.0
        %3178 = vadd.xlane.f32.xlu0 %v3177
        %v3179 = vpop.xlane.xlu0 %3178
        %v3180 = vmul.f32 %v3179, %v557
        %v3181 = vsub.f32 %v3172, %v3180
        %v3182 = vmul.f32 %v3181, %v3181
        %v3183 = vsel %vm553, %v3182, 0.0
        %3184 = vadd.xlane.f32.xlu0 %v3183
        %v3185 = vpop.xlane.xlu0 %3184
        %v3186 = vmul.f32 %v3185, %v557
        %v3187 = vadd.f32 %v3186, 1e-05
        %v3188 = vrsqrt.pop %v3187
        %v3189 = vmul.f32 %v3181, %v3188
        %v3191 = vlaneseq
        %v3192 = vshrl.u32 %v3191, 7
        %v3193 = vsub.s32 0, %v3192
        %v3194 = vrot.slane %v3174, %v3193
        %v3196 = vmul.f32 %v3189, %v3194
        %v3198 = vlaneseq
        %v3199 = vshrl.u32 %v3198, 7
        %v3200 = vsub.s32 0, %v3199
        %v3201 = vrot.slane %v3176, %v3200
        %v3203 = vadd.f32 %v3196, %v3201
        %v3204 = vpack.c.bf16 %v3203, %v3203
        %s3205 = scalar_lea.vmem %s5, 16
        %v3206 = vld [vmem:[%s3205] sm:$0xf]
        %v3207 = vld [vmem:[%s3205 + $0x4] sm:$0xf]
        %v3208 = vld [vmem:[%s3205 + $0x8] sm:$0xf]
        %v3209 = vld [vmem:[%s3205 + $0xc] sm:$0xf]
        %s3210 = scalar_lea.vmem %s6, 1
        %v3211 = vld [vmem:[%s3210] sm:$0x1]
        %v3213 = vlaneseq
        %v3214 = vshrl.u32 %v3213, 7
        %v3215 = vsub.s32 0, %v3214
        %v3216 = vrot.slane %v3211, %v3215
        %v3222 = vunpack.c.l.b16 %v3206
        %v3223 = vunpack.c.l.b16 %v3207
        %v3224 = vunpack.c.l.b16 %v3208
        %v3225 = vunpack.c.l.b16 %v3209
        %v3226 = vpack.c.b16 %v3223, %v3222
        %v3227 = vpack.c.b16 %v3225, %v3224
        %v3231 = vsel %vm553, %v3204, 0
        %3233 = vmatprep.subr.bf16.mxu0 0
        %3234 = vmatpush1.bf16.msra.mxu0 %v3226
        %3235 = vmatprep.subr.bf16.mxu0 0
        %3236 = vmatpush1.bf16.msra.mxu0 %v3227
        %3237 = vmatprep.subr.bf16.mxu0 0
        %3238 = vmatpush1.bf16.msra.mxu0 0
        %3239 = vmatprep.subr.bf16.mxu0 0
        %3240 = vmatpush1.bf16.msra.mxu0 0
        %3241 = vmatprep.subr.bf16.mxu0 0
        %3242 = vmatpush1.bf16.msra.mxu0 0
        %3243 = vmatprep.subr.bf16.mxu0 0
        %3244 = vmatpush1.bf16.msra.mxu0 0
        %3245 = vmatprep.subr.bf16.mxu0 0
        %3246 = vmatpush1.bf16.msra.mxu0 0
        %3247 = vmatprep.subr.bf16.mxu0 0
        %3248 = vmatpush1.bf16.msra.mxu0 0
        %3249 = vmatprep.subr.bf16.mxu0 0
        %3250 = vmatpush1.bf16.msra.mxu0 0
        %3251 = vmatprep.subr.bf16.mxu0 0
        %3252 = vmatpush1.bf16.msra.mxu0 0
        %3253 = vmatprep.subr.bf16.mxu0 0
        %3254 = vmatpush1.bf16.msra.mxu0 0
        %3255 = vmatprep.subr.bf16.mxu0 0
        %3256 = vmatpush1.bf16.msra.mxu0 0
        %3257 = vmatprep.subr.bf16.mxu0 0
        %3258 = vmatpush1.bf16.msra.mxu0 0
        %3259 = vmatprep.subr.bf16.mxu0 0
        %3260 = vmatpush1.bf16.msra.mxu0 0
        %3261 = vmatprep.subr.bf16.mxu0 0
        %3262 = vmatpush1.bf16.msra.mxu0 0
        %3263 = vmatprep.subr.bf16.mxu0 0
        %3264 = vmatpush1.bf16.msra.mxu0 0
        %3265 = vmatprep.mubr.bf16.mxu0 0
        %3266 = vmatmul.mubr.bf16.gmra.mrb[0].mxu0 %v3231
        %v3267 = vpop.f32.mrb[0].mxu0
        %v3268 = vadd.f32 %v3216, %v3267
        %v3269 = vpop.f32.mrb[0].mxu0
        %v3270 = vpop.f32.mrb[0].mxu0
        %v3271 = vpop.f32.mrb[0].mxu0
        %3272 = vdwg.mxu0
        %v3273 = vmul.f32 %v3268, 0.5
        %v3274 = vmul.f32 %v3268, 0.70710677
        %v3275 = verf.f32.pop %v3274
        %v3276 = vadd.f32 %v3275, 1.0
        %v3277 = vmul.f32 %v3273, %v3276
        %v3278 = vpack.c.bf16 %v3277, %v3277
        %s3279 = scalar_lea.vmem %s7, 64
        %v3280 = vld [vmem:[%s3279] sm:$0xf]
        %v3281 = vld [vmem:[%s3279 + $0x4] sm:$0xf]
        %v3282 = vld [vmem:[%s3279 + $0x8] sm:$0xf]
        %v3283 = vld [vmem:[%s3279 + $0xc] sm:$0xf]
        %v3284 = vld [vmem:[%s3279 + $0x10] sm:$0xf]
        %v3285 = vld [vmem:[%s3279 + $0x14] sm:$0xf]
        %v3286 = vld [vmem:[%s3279 + $0x18] sm:$0xf]
        %v3287 = vld [vmem:[%s3279 + $0x1c] sm:$0xf]
        %v3288 = vld [vmem:[%s3279 + $0x20] sm:$0xf]
        %v3289 = vld [vmem:[%s3279 + $0x24] sm:$0xf]
        %v3290 = vld [vmem:[%s3279 + $0x28] sm:$0xf]
        %v3291 = vld [vmem:[%s3279 + $0x2c] sm:$0xf]
        %v3292 = vld [vmem:[%s3279 + $0x30] sm:$0xf]
        %v3293 = vld [vmem:[%s3279 + $0x34] sm:$0xf]
        %v3294 = vld [vmem:[%s3279 + $0x38] sm:$0xf]
        %v3295 = vld [vmem:[%s3279 + $0x3c] sm:$0xf]
        %s3296 = scalar_lea.vmem %s8, 1
        %v3297 = vld [vmem:[%s3296] sm:$0x1]
        %v3299 = vlaneseq
        %v3300 = vshrl.u32 %v3299, 7
        %v3301 = vsub.s32 0, %v3300
        %v3302 = vrot.slane %v3297, %v3301
        %v3320 = vunpack.c.l.b16 %v3280
        %v3321 = vunpack.c.l.b16 %v3281
        %v3322 = vunpack.c.l.b16 %v3282
        %v3323 = vunpack.c.l.b16 %v3283
        %v3324 = vunpack.c.l.b16 %v3284
        %v3325 = vunpack.c.l.b16 %v3285
        %v3326 = vunpack.c.l.b16 %v3286
        %v3327 = vunpack.c.l.b16 %v3287
        %v3328 = vunpack.c.l.b16 %v3288
        %v3329 = vunpack.c.l.b16 %v3289
        %v3330 = vunpack.c.l.b16 %v3290
        %v3331 = vunpack.c.l.b16 %v3291
        %v3332 = vunpack.c.l.b16 %v3292
        %v3333 = vunpack.c.l.b16 %v3293
        %v3334 = vunpack.c.l.b16 %v3294
        %v3335 = vunpack.c.l.b16 %v3295
        %v3336 = vpack.c.b16 %v3321, %v3320
        %v3337 = vpack.c.b16 %v3323, %v3322
        %v3338 = vpack.c.b16 %v3325, %v3324
        %v3339 = vpack.c.b16 %v3327, %v3326
        %v3340 = vpack.c.b16 %v3329, %v3328
        %v3341 = vpack.c.b16 %v3331, %v3330
        %v3342 = vpack.c.b16 %v3333, %v3332
        %v3343 = vpack.c.b16 %v3335, %v3334
        %3352 = vmatprep.subr.bf16.mxu0 0
        %3353 = vmatpush1.bf16.msra.mxu0 %v3336
        %3354 = vmatprep.subr.bf16.mxu0 0
        %3355 = vmatpush1.bf16.msra.mxu0 %v3337
        %3356 = vmatprep.subr.bf16.mxu0 0
        %3357 = vmatpush1.bf16.msra.mxu0 %v3338
        %3358 = vmatprep.subr.bf16.mxu0 0
        %3359 = vmatpush1.bf16.msra.mxu0 %v3339
        %3360 = vmatprep.subr.bf16.mxu0 0
        %3361 = vmatpush1.bf16.msra.mxu0 %v3340
        %3362 = vmatprep.subr.bf16.mxu0 0
        %3363 = vmatpush1.bf16.msra.mxu0 %v3341
        %3364 = vmatprep.subr.bf16.mxu0 0
        %3365 = vmatpush1.bf16.msra.mxu0 %v3342
        %3366 = vmatprep.subr.bf16.mxu0 0
        %3367 = vmatpush1.bf16.msra.mxu0 %v3343
        %3368 = vmatprep.subr.bf16.mxu0 0
        %3369 = vmatpush1.bf16.msra.mxu0 0
        %3370 = vmatprep.subr.bf16.mxu0 0
        %3371 = vmatpush1.bf16.msra.mxu0 0
        %3372 = vmatprep.subr.bf16.mxu0 0
        %3373 = vmatpush1.bf16.msra.mxu0 0
        %3374 = vmatprep.subr.bf16.mxu0 0
        %3375 = vmatpush1.bf16.msra.mxu0 0
        %3376 = vmatprep.subr.bf16.mxu0 0
        %3377 = vmatpush1.bf16.msra.mxu0 0
        %3378 = vmatprep.subr.bf16.mxu0 0
        %3379 = vmatpush1.bf16.msra.mxu0 0
        %3380 = vmatprep.subr.bf16.mxu0 0
        %3381 = vmatpush1.bf16.msra.mxu0 0
        %3382 = vmatprep.subr.bf16.mxu0 0
        %3383 = vmatpush1.bf16.msra.mxu0 0
        %3384 = vmatprep.mubr.bf16.mxu0 0
        %3385 = vmatmul.mubr.bf16.gmra.mrb[0].mxu0 %v3278
        %v3386 = vpop.f32.mrb[0].mxu0
        %v3387 = vadd.f32 %v3302, %v3386
        %v3388 = vpop.f32.mrb[0].mxu0
        %v3389 = vpop.f32.mrb[0].mxu0
        %v3390 = vpop.f32.mrb[0].mxu0
        %3391 = vdwg.mxu0
        %v3392 = vadd.f32 %v3172, %v3387
        %v3393 = vld [vmem:[%s13] sm:$0x1]
        %v3394 = vld [vmem:[%s14] sm:$0x1]
        %v3395 = vsel %vm553, %v3392, 0.0
        %3396 = vadd.xlane.f32.xlu0 %v3395
        %v3397 = vpop.xlane.xlu0 %3396
        %v3398 = vmul.f32 %v3397, %v557
        %v3399 = vsub.f32 %v3392, %v3398
        %v3400 = vmul.f32 %v3399, %v3399
        %v3401 = vsel %vm553, %v3400, 0.0
        %3402 = vadd.xlane.f32.xlu0 %v3401
        %v3403 = vpop.xlane.xlu0 %3402
        %v3404 = vmul.f32 %v3403, %v557
        %v3405 = vadd.f32 %v3404, 1e-05
        %v3406 = vrsqrt.pop %v3405
        %v3407 = vmul.f32 %v3399, %v3406
        %v3409 = vlaneseq
        %v3410 = vshrl.u32 %v3409, 7
        %v3411 = vsub.s32 0, %v3410
        %v3412 = vrot.slane %v3393, %v3411
        %v3414 = vmul.f32 %v3407, %v3412
        %v3416 = vlaneseq
        %v3417 = vshrl.u32 %v3416, 7
        %v3418 = vsub.s32 0, %v3417
        %v3419 = vrot.slane %v3394, %v3418
        %v3421 = vadd.f32 %v3414, %v3419
        %v3422 = vpack.c.bf16 %v3421, %v3421
        %v3423 = vld [vmem:[%s15] sm:$0xf]
        %v3424 = vld [vmem:[%s15 + $0x4] sm:$0xf]
        %v3425 = vld [vmem:[%s15 + $0x8] sm:$0xf]
        %v3426 = vld [vmem:[%s15 + $0xc] sm:$0xf]
        %v3427 = vld [vmem:[%s16] sm:$0x1]
        %v3429 = vlaneseq
        %v3430 = vshrl.u32 %v3429, 7
        %v3431 = vsub.s32 0, %v3430
        %v3432 = vrot.slane %v3427, %v3431
        %v3438 = vunpack.c.l.b16 %v3423
        %v3439 = vunpack.c.l.b16 %v3424
        %v3440 = vunpack.c.l.b16 %v3425
        %v3441 = vunpack.c.l.b16 %v3426
        %v3442 = vpack.c.b16 %v3439, %v3438
        %v3443 = vpack.c.b16 %v3441, %v3440
        %v3447 = vsel %vm553, %v3422, 0
        %3449 = vmatprep.subr.bf16.mxu0 0
        %3450 = vmatpush1.bf16.msra.mxu0 %v3442
        %3451 = vmatprep.subr.bf16.mxu0 0
        %3452 = vmatpush1.bf16.msra.mxu0 %v3443
        %3453 = vmatprep.subr.bf16.mxu0 0
        %3454 = vmatpush1.bf16.msra.mxu0 0
        %3455 = vmatprep.subr.bf16.mxu0 0
        %3456 = vmatpush1.bf16.msra.mxu0 0
        %3457 = vmatprep.subr.bf16.mxu0 0
        %3458 = vmatpush1.bf16.msra.mxu0 0
        %3459 = vmatprep.subr.bf16.mxu0 0
        %3460 = vmatpush1.bf16.msra.mxu0 0
        %3461 = vmatprep.subr.bf16.mxu0 0
        %3462 = vmatpush1.bf16.msra.mxu0 0
        %3463 = vmatprep.subr.bf16.mxu0 0
        %3464 = vmatpush1.bf16.msra.mxu0 0
        %3465 = vmatprep.subr.bf16.mxu0 0
        %3466 = vmatpush1.bf16.msra.mxu0 0
        %3467 = vmatprep.subr.bf16.mxu0 0
        %3468 = vmatpush1.bf16.msra.mxu0 0
        %3469 = vmatprep.subr.bf16.mxu0 0
        %3470 = vmatpush1.bf16.msra.mxu0 0
        %3471 = vmatprep.subr.bf16.mxu0 0
        %3472 = vmatpush1.bf16.msra.mxu0 0
        %3473 = vmatprep.subr.bf16.mxu0 0
        %3474 = vmatpush1.bf16.msra.mxu0 0
        %3475 = vmatprep.subr.bf16.mxu0 0
        %3476 = vmatpush1.bf16.msra.mxu0 0
        %3477 = vmatprep.subr.bf16.mxu0 0
        %3478 = vmatpush1.bf16.msra.mxu0 0
        %3479 = vmatprep.subr.bf16.mxu0 0
        %3480 = vmatpush1.bf16.msra.mxu0 0
        %3481 = vmatprep.mubr.bf16.mxu0 0
        %3482 = vmatmul.mubr.bf16.gmra.mrb[0].mxu0 %v3447
        %v3483 = vpop.f32.mrb[0].mxu0
        %v3484 = vadd.f32 %v3432, %v3483
        %v3485 = vpop.f32.mrb[0].mxu0
        %v3486 = vpop.f32.mrb[0].mxu0
        %v3487 = vpop.f32.mrb[0].mxu0
        %3488 = vdwg.mxu0
        %3489 = vst [vmem:[%s539] sm:$0xff] %v3484
        %s3490 = sand.u32 %s401, 1
        %s3491 = scalar_lea.sflag [#allocation3], %s3490
        %s3492 = sand.u32 %s401, 1
        %s3493 = smul.addr %s3492, 8
        %s3494 = scalar_lea.vmem [#allocation2], %s3493
        // Predicated region
        $region89: #{char_transformer_forward.1} parent=87 // pred_check
          %p3495 = pneg %p411
        $region90: #{char_transformer_forward.1} parent=87 // pred_check_branch
          %3497 = sbr.rel (%p3495) target = $region92
        $region91: #{char_transformer_forward.1} parent=87 // pred_region
          %s3499 = ssub.s32 128, 128
          %3500 = vsyncadd %s3491, %s3499
          %s3501 = smul.addr %s31, 128
          %s3502 = scalar_lea.hbm %s17, %s3501
          %s3504 = sshll.u32 %s3494, 4
          %s3505 = int_to_ptr.vmem [resolvable:$true] %s3504
          %3507 = dma.vmem_to_hbm [thread:$0]  %s3505, 128, %s3502, %s3491
        $region92: #{char_transformer_forward.1} parent=87 // pred_fallthru
          _
      $region88: #{char_transformer_forward.1} parent=5 // pred_fallthru
        _
      %p3508 = scmp.le.s32.totalorder 2, %s26
      // Predicated region
      $region93: #{char_transformer_forward.1} parent=5 // pred_check
        %p3509 = pneg %p3508
      $region94: #{char_transformer_forward.1} parent=5 // pred_check_branch
        %3511 = sbr.rel (%p3509) target = $region96
      $region95: #{char_transformer_forward.1} parent=5 // pred_region
        %s3512 = ssub.s32 %s26, 2
        // Predicated region
        $region97: #{char_transformer_forward.1} parent=95 // pred_check
          %p3513 = pneg %p417
        $region98: #{char_transformer_forward.1} parent=95 // pred_check_branch
          %3515 = sbr.rel (%p3513) target = $region100
        $region99: #{char_transformer_forward.1} parent=95 // pred_region
          %s3516 = sand.u32 %s402, 1
          %s3517 = scalar_lea.sflag [#allocation3], %s3516
          %s3518 = sand.u32 %s402, 1
          %s3519 = smul.addr %s3518, 8
          %s3520 = scalar_lea.vmem [#allocation2], %s3519
          %3521 = dma.done %s3517, 128
        $region100: #{char_transformer_forward.1} parent=95 // pred_fallthru
          _
      $region96: #{char_transformer_forward.1} parent=5 // pred_fallthru
        _
    $region6: #{char_transformer_forward.1} parent=1 // loop_footer
      %s30 = sadd.s32 1, %s26
    $region7: #{char_transformer_forward.1} parent=1 // loop_footer_branch
      %25 = sbr.rel target = $region3
    $region8: #{char_transformer_forward.1} parent=1 // loop_exit
      _
    %3522 = vsyncpa [#allocation3], 1
    %s3523 = scalar_lea.sflag [#allocation3], 1
    %3524 = vsyncpa %s3523, 1

</llo_original>
